<compile_context>
chip_gen: v7x
topology: tpu7x:2x2x1
jax: 0.10.0
libtpu: 0.0.40
codegen_flags: <defaults>
</compile_context>

<pallas_src>
import functools
from typing import NamedTuple

import numpy as np
import jax
import jax.numpy as jnp
from jax.experimental import pallas as pl
from jax.experimental.pallas import tpu as pltpu

EPS = 1e-5      # PyTorch BatchNorm default eps
LANES = 128     # TPU vreg lane width


class Dims(NamedTuple):
    B: int      # batch
    C: int      # input channels
    H: int      # input spatial size (square)
    KH: int     # conv kernel size (square)
    PAD: int    # conv1 padding
    K1: int     # conv1 out channels
    OH1: int    # conv1 output spatial
    PH1: int    # pool1 output spatial
    K2: int     # conv2 out channels
    OH2: int    # conv2 output spatial
    PH2: int    # pool2 output spatial
    LAT: int    # latent dim (fc1 out)
    PROJ: int   # projection dim
    OUT: int    # classifier dim


def _round_up(x, m):
    return (x + m - 1) // m * m


def _f32dot(a, b):
    return jnp.dot(a, b, preferred_element_type=jnp.float32)


# ----------------------------------------------------------------------------
# In-kernel BatchNorm2d (training-mode stats) + ReLU on a grouped layout
# x : (rows, W*K) with channel = col mod K.  Selectors are precomputed.
# ----------------------------------------------------------------------------
def _bn_relu(x, n, gamma, beta, ch_sum, ch_bcast):
    s1 = jnp.sum(_f32dot(x, ch_sum), axis=0, keepdims=True)       # (1, K)
    s2 = jnp.sum(_f32dot(x * x, ch_sum), axis=0, keepdims=True)   # (1, K)
    mean = s1 * (1.0 / n)
    var = jnp.maximum(s2 * (1.0 / n) - mean * mean, 0.0)          # two-moment form
    scale = gamma * jax.lax.rsqrt(var + EPS)                      # (1, K)
    shift = beta - mean * scale                                   # (1, K)
    y = x * _f32dot(scale, ch_bcast) + _f32dot(shift, ch_bcast)
    return jnp.maximum(y, 0.0)


# ----------------------------------------------------------------------------
# The fused forward kernel (one grid step, everything VMEM / vreg resident)
# ----------------------------------------------------------------------------
def _fused_forward_kernel(x_ref, w_ref, v_ref,
                          g1_ref, r1_ref, c1p_ref,
                          g2_ref, r2_ref, c2p_ref,
                          fs_ref, cs1_ref, cb1_ref, cs2_ref, cb2_ref,
                          o_ref, *, d, offs, xc):
    """x_ref : (B*Hp, xc)     padded input, rows = b*Hp + h, cols = w*C + c
       w_ref : (rows, 128)    packed weight blob (per-tap banded convs, FCs)
       v_ref : (16, 128)      packed (pre-broadcast) bias / gamma / beta rows
       g*/r*/c*p/fs/cs*/cb*   precomputed 0/1 selector matrices
       o_ref : (B, 384)       [ h | proj | y ], one 128-lane slab each
    """
    B, KH = d.B, d.KH
    OH1, K1, PH1 = d.OH1, d.K1, d.PH1
    OH2, K2, PH2 = d.OH2, d.K2, d.PH2

    x = x_ref[...]                                                # (B*Hp, xc)

    # ---- conv1: K-split over the KH vertical taps; the row shift is a
    #      precomputed gather-selector matmul (MXU) -> no misaligned slices.
    o1 = offs["conv1"]
    acc = _f32dot(_f32dot(g1_ref[0], x), w_ref[o1:o1 + xc, :])
    for i in range(1, KH):
        acc = acc + _f32dot(_f32dot(g1_ref[i], x),
                            w_ref[o1 + i * xc:o1 + (i + 1) * xc, :])
    c1 = acc + v_ref[0:1, :]                                      # pre-broadcast bias
    a1 = _bn_relu(c1, B * OH1 * OH1, v_ref[2:3, 0:K1], v_ref[3:4, 0:K1],
                  cs1_ref[...], cb1_ref[...])                     # (B*OH1, 128)
    # 2x2 / stride-2 max pool: row picks on the left, col picks on the right.
    rm = jnp.maximum(_f32dot(r1_ref[0], a1), _f32dot(r1_ref[1], a1))
    p1 = jnp.maximum(_f32dot(rm, c1p_ref[0]), _f32dot(rm, c1p_ref[1]))

    # ---- conv2 (valid padding): same K-split structure on pooled activations
    o2 = offs["conv2"]
    r2w = PH1 * K1
    acc = _f32dot(_f32dot(g2_ref[0], p1), w_ref[o2:o2 + r2w, :])
    for i in range(1, KH):
        acc = acc + _f32dot(_f32dot(g2_ref[i], p1),
                            w_ref[o2 + i * r2w:o2 + (i + 1) * r2w, :])
    c2 = acc + v_ref[1:2, :]
    a2 = _bn_relu(c2, B * OH2 * OH2, v_ref[4:5, 0:K2], v_ref[5:6, 0:K2],
                  cs2_ref[...], cb2_ref[...])                     # (B*OH2, 128)
    rm = jnp.maximum(_f32dot(r2_ref[0], a2), _f32dot(r2_ref[1], a2))
    p2 = jnp.maximum(_f32dot(rm, c2p_ref[0]), _f32dot(rm, c2p_ref[1]))

    # ---- flatten (PyTorch NCHW order folded into fc1 weights) + fc1,
    #      K-split over the PH2 spatial rows (no lane concatenation).
    of = offs["fc1"]
    rfw = PH2 * K2
    acc = _f32dot(_f32dot(fs_ref[0], p2), w_ref[of:of + rfw, :])
    for h2 in range(1, PH2):
        acc = acc + _f32dot(_f32dot(fs_ref[h2], p2),
                            w_ref[of + h2 * rfw:of + (h2 + 1) * rfw, :])
    hpre = acc + v_ref[6:7, :]                                    # (B, 128)

    # ---- bn3 (1-D over the batch), two-moment form
    s1 = jnp.sum(hpre, axis=0, keepdims=True)
    s2 = jnp.sum(hpre * hpre, axis=0, keepdims=True)
    mean = s1 * (1.0 / B)
    var = jnp.maximum(s2 * (1.0 / B) - mean * mean, 0.0)
    scale = v_ref[7:8, :] * jax.lax.rsqrt(var + EPS)
    shift = v_ref[8:9, :] - mean * scale
    h = jnp.maximum(hpre * scale + shift, 0.0)

    # ---- projection head + classifier (128-lane padded MXU matmuls)
    z = jnp.maximum(
        _f32dot(h, w_ref[offs["proj1"]:offs["proj1"] + LANES, :]) + v_ref[9:10, :],
        0.0)
    proj = _f32dot(z, w_ref[offs["proj2"]:offs["proj2"] + LANES, :]) + v_ref[10:11, :]
    y = _f32dot(proj, w_ref[offs["cls"]:offs["cls"] + LANES, :]) + v_ref[11:12, :]

    # three lane-aligned direct slice stores (no concat before the store)
    o_ref[:, 0:LANES] = h
    o_ref[:, LANES:2 * LANES] = proj
    o_ref[:, 2 * LANES:3 * LANES] = y


# ----------------------------------------------------------------------------
# Host-side packing: weight blob, vector blob and all 0/1 selector matrices
# ----------------------------------------------------------------------------
def _blob_layout(d):
    Hp = d.H + 2 * d.PAD
    xc = _round_up(Hp * d.C, 8)
    sizes = (("conv1", d.KH * xc),
             ("conv2", d.KH * d.PH1 * d.K1),
             ("fc1", d.PH2 * d.PH2 * d.K2),
             ("proj1", LANES), ("proj2", LANES), ("cls", LANES))
    offs, off = {}, 0
    for name, rows in sizes:
        assert rows % 8 == 0
        offs[name] = off
        off += rows
    return offs, off, xc


def _pad2_np(a, rows, cols):
    out = np.zeros((rows, cols), np.float32)
    out[:a.shape[0], :a.shape[1]] = a
    return out


def _conv_band_taps(w_oihw, in_width, row_pad_to):
    """Per-vertical-tap banded conv weights: KH x (row_pad_to, 128).

    Row = w*C + c (input width position, input channel); col = ow*K + k;
    entry for tap i is w[k, c, i, w - ow] when 0 <= w - ow < KW, else 0.
    """
    K, C, kh, kw = w_oihw.shape
    ow_n = in_width - kw + 1
    w_np = np.asarray(w_oihw, np.float32)
    taps = []
    for i in range(kh):
        m = np.zeros((row_pad_to, LANES), np.float32)
        for ow in range(ow_n):
            for dw in range(kw):
                w = ow + dw
                m[w * C:(w + 1) * C, ow * K:(ow + 1) * K] = w_np[:, :, i, dw].T
        taps.append(m)
    return taps


def _gather(n_out, n_in, fn):
    m = np.zeros((n_out, n_in), np.float32)
    for r in range(n_out):
        m[r, fn(r)] = 1.0
    return m


def _colpick(w_in, k, parity):
    """(128, (w_in//2)*k): keep width positions 2*pw+parity, per channel."""
    m = np.zeros((LANES, (w_in // 2) * k), np.float32)
    for pw in range(w_in // 2):
        w = 2 * pw + parity
        for c in range(k):
            m[w * k + c, pw * k + c] = 1.0
    return m


def _ch_sum(w, k):
    """(128, k): sums the w width-groups of each channel (col layout w*k + c)."""
    m = np.zeros((LANES, k), np.float32)
    for wi in range(w):
        for c in range(k):
            m[wi * k + c, c] = 1.0
    return m


def prepare_fused_params(params, dims):
    """One-time packing: weight blob, vector blob, selector matrices."""
    d = dims
    Hp = d.H + 2 * d.PAD
    offs, total_rows, xc = _blob_layout(d)

    # --- weight blob --------------------------------------------------------
    regions = []
    regions += _conv_band_taps(np.asarray(params["conv1_w"], np.float32), Hp, xc)
    regions += _conv_band_taps(np.asarray(params["conv2_w"], np.float32),
                               d.PH1, d.PH1 * d.K1)
    # fc1: PyTorch flattens (c, h2, w2); kernel flattens per h2 as w2*K2 + c.
    wf = np.asarray(params["fc1_w"], np.float32).reshape(d.K2, d.PH2, d.PH2, d.LAT)
    for h2 in range(d.PH2):
        m = np.transpose(wf[:, h2, :, :], (1, 0, 2)).reshape(d.PH2 * d.K2, d.LAT)
        regions.append(_pad2_np(m, d.PH2 * d.K2, LANES))
    for name in ("proj1_w", "proj2_w", "cls_w"):
        regions.append(_pad2_np(np.asarray(params[name], np.float32), LANES, LANES))
    wblob = jnp.asarray(np.concatenate(regions, axis=0))
    assert wblob.shape == (total_rows, LANES)

    # --- vector blob (biases pre-broadcast to their activation lane layout) --
    def _row(vals):
        v = np.zeros((LANES,), np.float32)
        a = np.asarray(vals, np.float32).reshape(-1)
        v[:a.shape[0]] = a
        return v

    rows = [
        _row(np.tile(np.asarray(params["conv1_b"], np.float32), d.OH1)),
        _row(np.tile(np.asarray(params["conv2_b"], np.float32), d.OH2)),
        _row(params["bn1_g"]), _row(params["bn1_b"]),
        _row(params["bn2_g"]), _row(params["bn2_b"]),
        _row(params["fc1_b"]),
        _row(params["bn3_g"]), _row(params["bn3_b"]),
        _row(params["proj1_b"]),
        _row(params["proj2_b"]), _row(params["cls_b"]),
    ]
    while len(rows) < 16:
        rows.append(np.zeros((LANES,), np.float32))
    vblob = jnp.asarray(np.stack(rows, axis=0))

    # --- selector matrices (precomputed host-side, all tiny) -----------------
    B = d.B
    g1 = np.stack([_gather(B * d.OH1, B * Hp,
                           lambda r, i=i: (r // d.OH1) * Hp + (r % d.OH1) + i)
                   for i in range(d.KH)])                         # (KH, B*OH1, B*Hp)
    r1 = np.stack([_gather(B * d.PH1, B * d.OH1, lambda r, j=j: 2 * r + j)
                   for j in (0, 1)])                              # (2, B*PH1, B*OH1)
    c1p = np.stack([_colpick(d.OH1, d.K1, j) for j in (0, 1)])    # (2, 128, PH1*K1)
    g2 = np.stack([_gather(B * d.OH2, B * d.PH1,
                           lambda r, i=i: (r // d.OH2) * d.PH1 + (r % d.OH2) + i)
                   for i in range(d.KH)])                         # (KH, B*OH2, B*PH1)
    r2 = np.stack([_gather(B * d.PH2, B * d.OH2, lambda r, j=j: 2 * r + j)
                   for j in (0, 1)])                              # (2, B*PH2, B*OH2)
    c2p = np.stack([_colpick(d.OH2, d.K2, j) for j in (0, 1)])    # (2, 128, PH2*K2)
    fs = np.stack([_gather(B, B * d.PH2, lambda b, h=h: b * d.PH2 + h)
                   for h in range(d.PH2)])                        # (PH2, B, B*PH2)
    cs1 = _ch_sum(d.OH1, d.K1)                                    # (128, K1)
    cb1 = cs1.T.copy()                                            # (K1, 128)
    cs2 = _ch_sum(d.OH2, d.K2)                                    # (128, K2)
    cb2 = cs2.T.copy()                                            # (K2, 128)

    selectors = tuple(jnp.asarray(s) for s in
                      (g1, r1, c1p, g2, r2, c2p, fs, cs1, cb1, cs2, cb2))
    return wblob, vblob, selectors


def model_dims(params, x_shape):
    B, C, H, W = x_shape
    assert H == W, "square inputs only"
    K1, cin, KH, KW = params["conv1_w"].shape
    assert cin == C and KH == KW
    K2 = params["conv2_w"].shape[0]
    LAT = params["fc1_w"].shape[1]
    PROJ = params["proj2_w"].shape[1]
    OUT = params["cls_w"].shape[1]
    PAD = 2
    OH1 = H + 2 * PAD - KH + 1
    PH1 = OH1 // 2
    OH2 = PH1 - KH + 1
    PH2 = OH2 // 2
    assert params["fc1_w"].shape[0] == K2 * PH2 * PH2
    assert OH1 % 2 == 0 and OH2 % 2 == 0
    assert OH1 * K1 <= LANES and OH2 * K2 <= LANES
    assert (PH1 * K1) % 8 == 0 and (PH2 * K2) % 8 == 0
    assert max(LAT, PROJ, OUT) <= LANES
    return Dims(B=B, C=C, H=H, KH=KH, PAD=PAD, K1=K1, OH1=OH1, PH1=PH1,
                K2=K2, OH2=OH2, PH2=PH2, LAT=LAT, PROJ=PROJ, OUT=OUT)


# ----------------------------------------------------------------------------
# Forward: boundary layout prep + one fused pallas_call
# ----------------------------------------------------------------------------
def fused_forward(wblob, vblob, selectors, x_nchw, dims):
    d = dims
    Hp = d.H + 2 * d.PAD
    offs, total_rows, xc = _blob_layout(d)
    assert wblob.shape == (total_rows, LANES)

    # boundary-only XLA glue: NCHW -> NHWC, pad, flatten to (B*Hp, xc)
    x = jnp.transpose(x_nchw.astype(jnp.float32), (0, 2, 3, 1))
    x = jnp.pad(x, ((0, 0), (d.PAD, d.PAD), (d.PAD, d.PAD), (0, 0)))
    x2d = x.reshape(d.B * Hp, Hp * d.C)
    x2d = jnp.pad(x2d, ((0, 0), (0, xc - Hp * d.C)))

    kernel = functools.partial(_fused_forward_kernel, d=d, offs=offs, xc=xc)

    def const_spec(a):
        return pl.BlockSpec(a.shape, lambda i, nd=a.ndim: (0,) * nd)

    in_specs = [pl.BlockSpec((d.B * Hp, xc), lambda i: (i, 0)),
                const_spec(wblob), const_spec(vblob)]
    in_specs += [const_spec(s) for s in selectors]

    # Single batch tile carries the full batch: training-mode BatchNorm needs
    # full-batch statistics.  Weights/selectors have constant block indices so
    # they are DMA'd once and stay VMEM resident.
    out = pl.pallas_call(
        kernel,
        out_shape=jax.ShapeDtypeStruct((d.B, 3 * LANES), jnp.float32),
        grid=(1,),
        in_specs=in_specs,
        out_specs=pl.BlockSpec((d.B, 3 * LANES), lambda i: (i, 0)),
        compiler_params=pltpu.CompilerParams(dimension_semantics=("arbitrary",)),
    )(x2d, wblob, vblob, *selectors)

    h = out[:, :d.LAT]
    proj = out[:, LANES:LANES + d.PROJ]
    y = out[:, 2 * LANES:2 * LANES + d.OUT]
    return h, proj, y


# ----------------------------------------------------------------------------
# Parameters (weights stored as (in, out))
# ----------------------------------------------------------------------------
def init_params(key, in_channels=3, input_size=16, n_kernels=8, out_dim=10,
                proj_dim=16):
    conv1_out = (input_size - 5 + 2 * 2) + 1
    pool1_out = conv1_out // 2
    conv2_out = (pool1_out - 5) + 1
    pool2_out = conv2_out // 2
    flattened = 2 * n_kernels * pool2_out * pool2_out
    latent = 120

    ks = jax.random.split(key, 16)
    f32 = jnp.float32

    def w(k, shape, scale=0.05):
        return (scale * jax.random.normal(k, shape)).astype(f32)

    return {
        "conv1_w": w(ks[0], (n_kernels, in_channels, 5, 5)),
        "conv1_b": w(ks[1], (n_kernels,)),
        "bn1_g": 1.0 + w(ks[2], (n_kernels,), 0.1),
        "bn1_b": w(ks[3], (n_kernels,), 0.1),
        "conv2_w": w(ks[4], (2 * n_kernels, n_kernels, 5, 5)),
        "conv2_b": w(ks[5], (2 * n_kernels,)),
        "bn2_g": 1.0 + w(ks[6], (2 * n_kernels,), 0.1),
        "bn2_b": w(ks[7], (2 * n_kernels,), 0.1),
        "fc1_w": w(ks[8], (flattened, latent)),
        "fc1_b": w(ks[9], (latent,)),
        "bn3_g": 1.0 + w(ks[10], (latent,), 0.1),
        "bn3_b": w(ks[11], (latent,), 0.1),
        "proj1_w": w(ks[12], (latent, latent)),
        "proj1_b": w(ks[13], (latent,)),
        "proj2_w": w(ks[14], (latent, proj_dim)),
        "proj2_b": jnp.zeros((proj_dim,), f32),
        "cls_w": w(ks[15], (proj_dim, out_dim)),
        "cls_b": jnp.zeros((out_dim,), f32),
    }


if __name__ == "__main__":
    key = jax.random.PRNGKey(0)
    k_param, k_x = jax.random.split(key)

    params = init_params(k_param, in_channels=3, input_size=16, n_kernels=8,
                         out_dim=10, proj_dim=16)
    x = jax.random.normal(k_x, (2, 3, 16, 16), dtype=jnp.float32)   # NCHW like PyTorch

    dims = model_dims(params, x.shape)
    # one-time parameter packing (per-tap banded conv weights, permuted/padded
    # FC weights, pre-broadcast bias rows, precomputed selector matrices)
    wblob, vblob, selectors = prepare_fused_params(params, dims)
    # hot path: a single fused Pallas kernel per forward call
    fwd = jax.jit(functools.partial(fused_forward, dims=dims))
    h, proj, y = fwd(wblob, vblob, selectors, x)
    jax.block_until_ready((h, proj, y))

    assert h.shape == (2, 120) and proj.shape == (2, 16) and y.shape == (2, 10)
    assert bool(jnp.all(jnp.isfinite(h)))
    assert bool(jnp.all(jnp.isfinite(proj)))
    assert bool(jnp.all(jnp.isfinite(y)))
    print("KERNEL_OK")
</pallas_src>

<mosaic_0001>
module attributes {stable_mosaic.version = 11 : i64} {
  func.func @_fused_forward_kernel(%arg0: i32, %arg1: memref<40x64xf32, #tpu.memory_space<vmem>>, %arg2: memref<1088x128xf32, #tpu.memory_space<vmem>>, %arg3: memref<16x128xf32, #tpu.memory_space<vmem>>, %arg4: memref<5x32x40xf32, #tpu.memory_space<vmem>>, %arg5: memref<2x16x32xf32, #tpu.memory_space<vmem>>, %arg6: memref<2x128x64xf32, #tpu.memory_space<vmem>>, %arg7: memref<5x8x16xf32, #tpu.memory_space<vmem>>, %arg8: memref<2x4x8xf32, #tpu.memory_space<vmem>>, %arg9: memref<2x128x32xf32, #tpu.memory_space<vmem>>, %arg10: memref<2x2x4xf32, #tpu.memory_space<vmem>>, %arg11: memref<128x8xf32, #tpu.memory_space<vmem>>, %arg12: memref<8x128xf32, #tpu.memory_space<vmem>>, %arg13: memref<128x16xf32, #tpu.memory_space<vmem>>, %arg14: memref<16x128xf32, #tpu.memory_space<vmem>>, %arg15: memref<2x384xf32, #tpu.memory_space<vmem>>) attributes {dimension_semantics = [#tpu.dimension_semantics<arbitrary>], iteration_bounds = array<i64: 1>, scalar_prefetch = 0 : i64, scratch_operands = 0 : i64, tpu.core_type = #tpu.core_type<tc>, window_params = [{transform_indices = @transform_0, window_bounds = array<i64: 40, 64>}, {pipeline_mode = #tpu.pipeline_mode<synchronous>, transform_indices = @transform_1, window_bounds = array<i64: 1088, 128>}, {pipeline_mode = #tpu.pipeline_mode<synchronous>, transform_indices = @transform_2, window_bounds = array<i64: 16, 128>}, {pipeline_mode = #tpu.pipeline_mode<synchronous>, transform_indices = @transform_3, window_bounds = array<i64: 5, 32, 40>}, {pipeline_mode = #tpu.pipeline_mode<synchronous>, transform_indices = @transform_4, window_bounds = array<i64: 2, 16, 32>}, {pipeline_mode = #tpu.pipeline_mode<synchronous>, transform_indices = @transform_5, window_bounds = array<i64: 2, 128, 64>}, {pipeline_mode = #tpu.pipeline_mode<synchronous>, transform_indices = @transform_6, window_bounds = array<i64: 5, 8, 16>}, {pipeline_mode = #tpu.pipeline_mode<synchronous>, transform_indices = @transform_7, window_bounds = array<i64: 2, 4, 8>}, {pipeline_mode = #tpu.pipeline_mode<synchronous>, transform_indices = @transform_8, window_bounds = array<i64: 2, 128, 32>}, {pipeline_mode = #tpu.pipeline_mode<synchronous>, transform_indices = @transform_9, window_bounds = array<i64: 2, 2, 4>}, {pipeline_mode = #tpu.pipeline_mode<synchronous>, transform_indices = @transform_10, window_bounds = array<i64: 128, 8>}, {pipeline_mode = #tpu.pipeline_mode<synchronous>, transform_indices = @transform_11, window_bounds = array<i64: 8, 128>}, {pipeline_mode = #tpu.pipeline_mode<synchronous>, transform_indices = @transform_12, window_bounds = array<i64: 128, 16>}, {pipeline_mode = #tpu.pipeline_mode<synchronous>, transform_indices = @transform_13, window_bounds = array<i64: 16, 128>}, {transform_indices = @transform_14, window_bounds = array<i64: 2, 384>}]} {
    %c0 = arith.constant 0 : index
    %c0_0 = arith.constant 0 : index
    %0 = vector.load %arg1[%c0, %c0_0] : memref<40x64xf32, #tpu.memory_space<vmem>>, vector<40x64xf32>
    %c0_1 = arith.constant 0 : index
    %c0_2 = arith.constant 0 : index
    %c0_3 = arith.constant 0 : index
    %1 = vector.load %arg4[%c0_1, %c0_2, %c0_3] : memref<5x32x40xf32, #tpu.memory_space<vmem>>, vector<1x32x40xf32>
    %2 = vector.shape_cast %1 : vector<1x32x40xf32> to vector<32x40xf32>
    %cst = arith.constant dense<0.000000e+00> : vector<32x64xf32>
    %3 = tpu.matmul %2, %0, %cst {dimension_numbers = #tpu.dot_dimension_numbers<[1], [0], [0], [1], [0, 0, 1, 1], [], []>} : vector<32x40xf32>, vector<40x64xf32>, vector<32x64xf32> -> vector<32x64xf32>
    %c0_4 = arith.constant 0 : index
    %c0_5 = arith.constant 0 : index
    %4 = vector.load %arg2[%c0_4, %c0_5] : memref<1088x128xf32, #tpu.memory_space<vmem>>, vector<64x128xf32>
    %cst_6 = arith.constant dense<0.000000e+00> : vector<32x128xf32>
    %5 = tpu.matmul %3, %4, %cst_6 {dimension_numbers = #tpu.dot_dimension_numbers<[1], [0], [0], [1], [0, 0, 1, 1], [], []>} : vector<32x64xf32>, vector<64x128xf32>, vector<32x128xf32> -> vector<32x128xf32>
    %c1 = arith.constant 1 : index
    %c0_7 = arith.constant 0 : index
    %c0_8 = arith.constant 0 : index
    %6 = vector.load %arg4[%c1, %c0_7, %c0_8] : memref<5x32x40xf32, #tpu.memory_space<vmem>>, vector<1x32x40xf32>
    %7 = vector.shape_cast %6 : vector<1x32x40xf32> to vector<32x40xf32>
    %cst_9 = arith.constant dense<0.000000e+00> : vector<32x64xf32>
    %8 = tpu.matmul %7, %0, %cst_9 {dimension_numbers = #tpu.dot_dimension_numbers<[1], [0], [0], [1], [0, 0, 1, 1], [], []>} : vector<32x40xf32>, vector<40x64xf32>, vector<32x64xf32> -> vector<32x64xf32>
    %c64 = arith.constant 64 : index
    %c0_10 = arith.constant 0 : index
    %9 = vector.load %arg2[%c64, %c0_10] : memref<1088x128xf32, #tpu.memory_space<vmem>>, vector<64x128xf32>
    %cst_11 = arith.constant dense<0.000000e+00> : vector<32x128xf32>
    %10 = tpu.matmul %8, %9, %cst_11 {dimension_numbers = #tpu.dot_dimension_numbers<[1], [0], [0], [1], [0, 0, 1, 1], [], []>} : vector<32x64xf32>, vector<64x128xf32>, vector<32x128xf32> -> vector<32x128xf32>
    %11 = arith.addf %5, %10 : vector<32x128xf32>
    %c2 = arith.constant 2 : index
    %c0_12 = arith.constant 0 : index
    %c0_13 = arith.constant 0 : index
    %12 = vector.load %arg4[%c2, %c0_12, %c0_13] : memref<5x32x40xf32, #tpu.memory_space<vmem>>, vector<1x32x40xf32>
    %13 = vector.shape_cast %12 : vector<1x32x40xf32> to vector<32x40xf32>
    %cst_14 = arith.constant dense<0.000000e+00> : vector<32x64xf32>
    %14 = tpu.matmul %13, %0, %cst_14 {dimension_numbers = #tpu.dot_dimension_numbers<[1], [0], [0], [1], [0, 0, 1, 1], [], []>} : vector<32x40xf32>, vector<40x64xf32>, vector<32x64xf32> -> vector<32x64xf32>
    %c128 = arith.constant 128 : index
    %c0_15 = arith.constant 0 : index
    %15 = vector.load %arg2[%c128, %c0_15] : memref<1088x128xf32, #tpu.memory_space<vmem>>, vector<64x128xf32>
    %cst_16 = arith.constant dense<0.000000e+00> : vector<32x128xf32>
    %16 = tpu.matmul %14, %15, %cst_16 {dimension_numbers = #tpu.dot_dimension_numbers<[1], [0], [0], [1], [0, 0, 1, 1], [], []>} : vector<32x64xf32>, vector<64x128xf32>, vector<32x128xf32> -> vector<32x128xf32>
    %17 = arith.addf %11, %16 : vector<32x128xf32>
    %c3 = arith.constant 3 : index
    %c0_17 = arith.constant 0 : index
    %c0_18 = arith.constant 0 : index
    %18 = vector.load %arg4[%c3, %c0_17, %c0_18] : memref<5x32x40xf32, #tpu.memory_space<vmem>>, vector<1x32x40xf32>
    %19 = vector.shape_cast %18 : vector<1x32x40xf32> to vector<32x40xf32>
    %cst_19 = arith.constant dense<0.000000e+00> : vector<32x64xf32>
    %20 = tpu.matmul %19, %0, %cst_19 {dimension_numbers = #tpu.dot_dimension_numbers<[1], [0], [0], [1], [0, 0, 1, 1], [], []>} : vector<32x40xf32>, vector<40x64xf32>, vector<32x64xf32> -> vector<32x64xf32>
    %c192 = arith.constant 192 : index
    %c0_20 = arith.constant 0 : index
    %21 = vector.load %arg2[%c192, %c0_20] : memref<1088x128xf32, #tpu.memory_space<vmem>>, vector<64x128xf32>
    %cst_21 = arith.constant dense<0.000000e+00> : vector<32x128xf32>
    %22 = tpu.matmul %20, %21, %cst_21 {dimension_numbers = #tpu.dot_dimension_numbers<[1], [0], [0], [1], [0, 0, 1, 1], [], []>} : vector<32x64xf32>, vector<64x128xf32>, vector<32x128xf32> -> vector<32x128xf32>
    %23 = arith.addf %17, %22 : vector<32x128xf32>
    %c4 = arith.constant 4 : index
    %c0_22 = arith.constant 0 : index
    %c0_23 = arith.constant 0 : index
    %24 = vector.load %arg4[%c4, %c0_22, %c0_23] : memref<5x32x40xf32, #tpu.memory_space<vmem>>, vector<1x32x40xf32>
    %25 = vector.shape_cast %24 : vector<1x32x40xf32> to vector<32x40xf32>
    %cst_24 = arith.constant dense<0.000000e+00> : vector<32x64xf32>
    %26 = tpu.matmul %25, %0, %cst_24 {dimension_numbers = #tpu.dot_dimension_numbers<[1], [0], [0], [1], [0, 0, 1, 1], [], []>} : vector<32x40xf32>, vector<40x64xf32>, vector<32x64xf32> -> vector<32x64xf32>
    %c256 = arith.constant 256 : index
    %c0_25 = arith.constant 0 : index
    %27 = vector.load %arg2[%c256, %c0_25] : memref<1088x128xf32, #tpu.memory_space<vmem>>, vector<64x128xf32>
    %cst_26 = arith.constant dense<0.000000e+00> : vector<32x128xf32>
    %28 = tpu.matmul %26, %27, %cst_26 {dimension_numbers = #tpu.dot_dimension_numbers<[1], [0], [0], [1], [0, 0, 1, 1], [], []>} : vector<32x64xf32>, vector<64x128xf32>, vector<32x128xf32> -> vector<32x128xf32>
    %29 = arith.addf %23, %28 : vector<32x128xf32>
    %c0_27 = arith.constant 0 : index
    %c0_28 = arith.constant 0 : index
    %30 = vector.load %arg3[%c0_27, %c0_28] : memref<16x128xf32, #tpu.memory_space<vmem>>, vector<1x128xf32>
    %31 = vector.broadcast %30 : vector<1x128xf32> to vector<32x128xf32>
    %32 = arith.addf %29, %31 : vector<32x128xf32>
    %c2_29 = arith.constant 2 : index
    %c0_30 = arith.constant 0 : index
    %33 = vector.load %arg3[%c2_29, %c0_30] : memref<16x128xf32, #tpu.memory_space<vmem>>, vector<1x8xf32>
    %c3_31 = arith.constant 3 : index
    %c0_32 = arith.constant 0 : index
    %34 = vector.load %arg3[%c3_31, %c0_32] : memref<16x128xf32, #tpu.memory_space<vmem>>, vector<1x8xf32>
    %c0_33 = arith.constant 0 : index
    %c0_34 = arith.constant 0 : index
    %35 = vector.load %arg11[%c0_33, %c0_34] : memref<128x8xf32, #tpu.memory_space<vmem>>, vector<128x8xf32>
    %c0_35 = arith.constant 0 : index
    %c0_36 = arith.constant 0 : index
    %36 = vector.load %arg12[%c0_35, %c0_36] : memref<8x128xf32, #tpu.memory_space<vmem>>, vector<8x128xf32>
    %cst_37 = arith.constant dense<0.000000e+00> : vector<32x8xf32>
    %37 = tpu.matmul %32, %35, %cst_37 {dimension_numbers = #tpu.dot_dimension_numbers<[1], [0], [0], [1], [0, 0, 1, 1], [], []>} : vector<32x128xf32>, vector<128x8xf32>, vector<32x8xf32> -> vector<32x8xf32>
    %cst_38 = arith.constant dense<0.000000e+00> : vector<8xf32>
    %38 = vector.multi_reduction <add>, %37, %cst_38 [0] : vector<32x8xf32> to vector<8xf32>
    %39 = vector.shape_cast %38 : vector<8xf32> to vector<1x8xf32>
    %40 = arith.mulf %32, %32 : vector<32x128xf32>
    %cst_39 = arith.constant dense<0.000000e+00> : vector<32x8xf32>
    %41 = tpu.matmul %40, %35, %cst_39 {dimension_numbers = #tpu.dot_dimension_numbers<[1], [0], [0], [1], [0, 0, 1, 1], [], []>} : vector<32x128xf32>, vector<128x8xf32>, vector<32x8xf32> -> vector<32x8xf32>
    %cst_40 = arith.constant dense<0.000000e+00> : vector<8xf32>
    %42 = vector.multi_reduction <add>, %41, %cst_40 [0] : vector<32x8xf32> to vector<8xf32>
    %43 = vector.shape_cast %42 : vector<8xf32> to vector<1x8xf32>
    %cst_41 = arith.constant 0.001953125 : f32
    %44 = vector.broadcast %cst_41 : f32 to vector<1x8xf32>
    %45 = arith.mulf %39, %44 : vector<1x8xf32>
    %cst_42 = arith.constant 0.001953125 : f32
    %46 = vector.broadcast %cst_42 : f32 to vector<1x8xf32>
    %47 = arith.mulf %43, %46 : vector<1x8xf32>
    %48 = arith.mulf %45, %45 : vector<1x8xf32>
    %49 = arith.subf %47, %48 : vector<1x8xf32>
    %cst_43 = arith.constant 0.000000e+00 : f32
    %50 = vector.broadcast %cst_43 : f32 to vector<1x8xf32>
    %51 = arith.maximumf %49, %50 : vector<1x8xf32>
    %cst_44 = arith.constant 9.99999974E-6 : f32
    %52 = vector.broadcast %cst_44 : f32 to vector<1x8xf32>
    %53 = arith.addf %51, %52 : vector<1x8xf32>
    %54 = math.rsqrt %53 : vector<1x8xf32>
    %55 = arith.mulf %33, %54 : vector<1x8xf32>
    %56 = arith.mulf %45, %55 : vector<1x8xf32>
    %57 = arith.subf %34, %56 : vector<1x8xf32>
    %cst_45 = arith.constant dense<0.000000e+00> : vector<1x128xf32>
    %58 = tpu.matmul %55, %36, %cst_45 {dimension_numbers = #tpu.dot_dimension_numbers<[1], [0], [0], [1], [0, 0, 1, 1], [], []>} : vector<1x8xf32>, vector<8x128xf32>, vector<1x128xf32> -> vector<1x128xf32>
    %59 = vector.broadcast %58 : vector<1x128xf32> to vector<32x128xf32>
    %60 = arith.mulf %32, %59 : vector<32x128xf32>
    %cst_46 = arith.constant dense<0.000000e+00> : vector<1x128xf32>
    %61 = tpu.matmul %57, %36, %cst_46 {dimension_numbers = #tpu.dot_dimension_numbers<[1], [0], [0], [1], [0, 0, 1, 1], [], []>} : vector<1x8xf32>, vector<8x128xf32>, vector<1x128xf32> -> vector<1x128xf32>
    %62 = vector.broadcast %61 : vector<1x128xf32> to vector<32x128xf32>
    %63 = arith.addf %60, %62 : vector<32x128xf32>
    %cst_47 = arith.constant 0.000000e+00 : f32
    %64 = vector.broadcast %cst_47 : f32 to vector<32x128xf32>
    %65 = arith.maximumf %63, %64 : vector<32x128xf32>
    %c0_48 = arith.constant 0 : index
    %c0_49 = arith.constant 0 : index
    %c0_50 = arith.constant 0 : index
    %66 = vector.load %arg5[%c0_48, %c0_49, %c0_50] : memref<2x16x32xf32, #tpu.memory_space<vmem>>, vector<1x16x32xf32>
    %67 = vector.shape_cast %66 : vector<1x16x32xf32> to vector<16x32xf32>
    %cst_51 = arith.constant dense<0.000000e+00> : vector<16x128xf32>
    %68 = tpu.matmul %67, %65, %cst_51 {dimension_numbers = #tpu.dot_dimension_numbers<[1], [0], [0], [1], [0, 0, 1, 1], [], []>} : vector<16x32xf32>, vector<32x128xf32>, vector<16x128xf32> -> vector<16x128xf32>
    %c1_52 = arith.constant 1 : index
    %c0_53 = arith.constant 0 : index
    %c0_54 = arith.constant 0 : index
    %69 = vector.load %arg5[%c1_52, %c0_53, %c0_54] : memref<2x16x32xf32, #tpu.memory_space<vmem>>, vector<1x16x32xf32>
    %70 = vector.shape_cast %69 : vector<1x16x32xf32> to vector<16x32xf32>
    %cst_55 = arith.constant dense<0.000000e+00> : vector<16x128xf32>
    %71 = tpu.matmul %70, %65, %cst_55 {dimension_numbers = #tpu.dot_dimension_numbers<[1], [0], [0], [1], [0, 0, 1, 1], [], []>} : vector<16x32xf32>, vector<32x128xf32>, vector<16x128xf32> -> vector<16x128xf32>
    %72 = arith.maximumf %68, %71 : vector<16x128xf32>
    %c0_56 = arith.constant 0 : index
    %c0_57 = arith.constant 0 : index
    %c0_58 = arith.constant 0 : index
    %73 = vector.load %arg6[%c0_56, %c0_57, %c0_58] : memref<2x128x64xf32, #tpu.memory_space<vmem>>, vector<1x128x64xf32>
    %74 = vector.shape_cast %73 : vector<1x128x64xf32> to vector<128x64xf32>
    %cst_59 = arith.constant dense<0.000000e+00> : vector<16x64xf32>
    %75 = tpu.matmul %72, %74, %cst_59 {dimension_numbers = #tpu.dot_dimension_numbers<[1], [0], [0], [1], [0, 0, 1, 1], [], []>} : vector<16x128xf32>, vector<128x64xf32>, vector<16x64xf32> -> vector<16x64xf32>
    %c1_60 = arith.constant 1 : index
    %c0_61 = arith.constant 0 : index
    %c0_62 = arith.constant 0 : index
    %76 = vector.load %arg6[%c1_60, %c0_61, %c0_62] : memref<2x128x64xf32, #tpu.memory_space<vmem>>, vector<1x128x64xf32>
    %77 = vector.shape_cast %76 : vector<1x128x64xf32> to vector<128x64xf32>
    %cst_63 = arith.constant dense<0.000000e+00> : vector<16x64xf32>
    %78 = tpu.matmul %72, %77, %cst_63 {dimension_numbers = #tpu.dot_dimension_numbers<[1], [0], [0], [1], [0, 0, 1, 1], [], []>} : vector<16x128xf32>, vector<128x64xf32>, vector<16x64xf32> -> vector<16x64xf32>
    %79 = arith.maximumf %75, %78 : vector<16x64xf32>
    %c0_64 = arith.constant 0 : index
    %c0_65 = arith.constant 0 : index
    %c0_66 = arith.constant 0 : index
    %80 = vector.load %arg7[%c0_64, %c0_65, %c0_66] : memref<5x8x16xf32, #tpu.memory_space<vmem>>, vector<1x8x16xf32>
    %81 = vector.shape_cast %80 : vector<1x8x16xf32> to vector<8x16xf32>
    %cst_67 = arith.constant dense<0.000000e+00> : vector<8x64xf32>
    %82 = tpu.matmul %81, %79, %cst_67 {dimension_numbers = #tpu.dot_dimension_numbers<[1], [0], [0], [1], [0, 0, 1, 1], [], []>} : vector<8x16xf32>, vector<16x64xf32>, vector<8x64xf32> -> vector<8x64xf32>
    %c320 = arith.constant 320 : index
    %c0_68 = arith.constant 0 : index
    %83 = vector.load %arg2[%c320, %c0_68] : memref<1088x128xf32, #tpu.memory_space<vmem>>, vector<64x128xf32>
    %cst_69 = arith.constant dense<0.000000e+00> : vector<8x128xf32>
    %84 = tpu.matmul %82, %83, %cst_69 {dimension_numbers = #tpu.dot_dimension_numbers<[1], [0], [0], [1], [0, 0, 1, 1], [], []>} : vector<8x64xf32>, vector<64x128xf32>, vector<8x128xf32> -> vector<8x128xf32>
    %c1_70 = arith.constant 1 : index
    %c0_71 = arith.constant 0 : index
    %c0_72 = arith.constant 0 : index
    %85 = vector.load %arg7[%c1_70, %c0_71, %c0_72] : memref<5x8x16xf32, #tpu.memory_space<vmem>>, vector<1x8x16xf32>
    %86 = vector.shape_cast %85 : vector<1x8x16xf32> to vector<8x16xf32>
    %cst_73 = arith.constant dense<0.000000e+00> : vector<8x64xf32>
    %87 = tpu.matmul %86, %79, %cst_73 {dimension_numbers = #tpu.dot_dimension_numbers<[1], [0], [0], [1], [0, 0, 1, 1], [], []>} : vector<8x16xf32>, vector<16x64xf32>, vector<8x64xf32> -> vector<8x64xf32>
    %c384 = arith.constant 384 : index
    %c0_74 = arith.constant 0 : index
    %88 = vector.load %arg2[%c384, %c0_74] : memref<1088x128xf32, #tpu.memory_space<vmem>>, vector<64x128xf32>
    %cst_75 = arith.constant dense<0.000000e+00> : vector<8x128xf32>
    %89 = tpu.matmul %87, %88, %cst_75 {dimension_numbers = #tpu.dot_dimension_numbers<[1], [0], [0], [1], [0, 0, 1, 1], [], []>} : vector<8x64xf32>, vector<64x128xf32>, vector<8x128xf32> -> vector<8x128xf32>
    %90 = arith.addf %84, %89 : vector<8x128xf32>
    %c2_76 = arith.constant 2 : index
    %c0_77 = arith.constant 0 : index
    %c0_78 = arith.constant 0 : index
    %91 = vector.load %arg7[%c2_76, %c0_77, %c0_78] : memref<5x8x16xf32, #tpu.memory_space<vmem>>, vector<1x8x16xf32>
    %92 = vector.shape_cast %91 : vector<1x8x16xf32> to vector<8x16xf32>
    %cst_79 = arith.constant dense<0.000000e+00> : vector<8x64xf32>
    %93 = tpu.matmul %92, %79, %cst_79 {dimension_numbers = #tpu.dot_dimension_numbers<[1], [0], [0], [1], [0, 0, 1, 1], [], []>} : vector<8x16xf32>, vector<16x64xf32>, vector<8x64xf32> -> vector<8x64xf32>
    %c448 = arith.constant 448 : index
    %c0_80 = arith.constant 0 : index
    %94 = vector.load %arg2[%c448, %c0_80] : memref<1088x128xf32, #tpu.memory_space<vmem>>, vector<64x128xf32>
    %cst_81 = arith.constant dense<0.000000e+00> : vector<8x128xf32>
    %95 = tpu.matmul %93, %94, %cst_81 {dimension_numbers = #tpu.dot_dimension_numbers<[1], [0], [0], [1], [0, 0, 1, 1], [], []>} : vector<8x64xf32>, vector<64x128xf32>, vector<8x128xf32> -> vector<8x128xf32>
    %96 = arith.addf %90, %95 : vector<8x128xf32>
    %c3_82 = arith.constant 3 : index
    %c0_83 = arith.constant 0 : index
    %c0_84 = arith.constant 0 : index
    %97 = vector.load %arg7[%c3_82, %c0_83, %c0_84] : memref<5x8x16xf32, #tpu.memory_space<vmem>>, vector<1x8x16xf32>
    %98 = vector.shape_cast %97 : vector<1x8x16xf32> to vector<8x16xf32>
    %cst_85 = arith.constant dense<0.000000e+00> : vector<8x64xf32>
    %99 = tpu.matmul %98, %79, %cst_85 {dimension_numbers = #tpu.dot_dimension_numbers<[1], [0], [0], [1], [0, 0, 1, 1], [], []>} : vector<8x16xf32>, vector<16x64xf32>, vector<8x64xf32> -> vector<8x64xf32>
    %c512 = arith.constant 512 : index
    %c0_86 = arith.constant 0 : index
    %100 = vector.load %arg2[%c512, %c0_86] : memref<1088x128xf32, #tpu.memory_space<vmem>>, vector<64x128xf32>
    %cst_87 = arith.constant dense<0.000000e+00> : vector<8x128xf32>
    %101 = tpu.matmul %99, %100, %cst_87 {dimension_numbers = #tpu.dot_dimension_numbers<[1], [0], [0], [1], [0, 0, 1, 1], [], []>} : vector<8x64xf32>, vector<64x128xf32>, vector<8x128xf32> -> vector<8x128xf32>
    %102 = arith.addf %96, %101 : vector<8x128xf32>
    %c4_88 = arith.constant 4 : index
    %c0_89 = arith.constant 0 : index
    %c0_90 = arith.constant 0 : index
    %103 = vector.load %arg7[%c4_88, %c0_89, %c0_90] : memref<5x8x16xf32, #tpu.memory_space<vmem>>, vector<1x8x16xf32>
    %104 = vector.shape_cast %103 : vector<1x8x16xf32> to vector<8x16xf32>
    %cst_91 = arith.constant dense<0.000000e+00> : vector<8x64xf32>
    %105 = tpu.matmul %104, %79, %cst_91 {dimension_numbers = #tpu.dot_dimension_numbers<[1], [0], [0], [1], [0, 0, 1, 1], [], []>} : vector<8x16xf32>, vector<16x64xf32>, vector<8x64xf32> -> vector<8x64xf32>
    %c576 = arith.constant 576 : index
    %c0_92 = arith.constant 0 : index
    %106 = vector.load %arg2[%c576, %c0_92] : memref<1088x128xf32, #tpu.memory_space<vmem>>, vector<64x128xf32>
    %cst_93 = arith.constant dense<0.000000e+00> : vector<8x128xf32>
    %107 = tpu.matmul %105, %106, %cst_93 {dimension_numbers = #tpu.dot_dimension_numbers<[1], [0], [0], [1], [0, 0, 1, 1], [], []>} : vector<8x64xf32>, vector<64x128xf32>, vector<8x128xf32> -> vector<8x128xf32>
    %108 = arith.addf %102, %107 : vector<8x128xf32>
    %c1_94 = arith.constant 1 : index
    %c0_95 = arith.constant 0 : index
    %109 = vector.load %arg3[%c1_94, %c0_95] : memref<16x128xf32, #tpu.memory_space<vmem>>, vector<1x128xf32>
    %110 = vector.broadcast %109 : vector<1x128xf32> to vector<8x128xf32>
    %111 = arith.addf %108, %110 : vector<8x128xf32>
    %c4_96 = arith.constant 4 : index
    %c0_97 = arith.constant 0 : index
    %112 = vector.load %arg3[%c4_96, %c0_97] : memref<16x128xf32, #tpu.memory_space<vmem>>, vector<1x16xf32>
    %c5 = arith.constant 5 : index
    %c0_98 = arith.constant 0 : index
    %113 = vector.load %arg3[%c5, %c0_98] : memref<16x128xf32, #tpu.memory_space<vmem>>, vector<1x16xf32>
    %c0_99 = arith.constant 0 : index
    %c0_100 = arith.constant 0 : index
    %114 = vector.load %arg13[%c0_99, %c0_100] : memref<128x16xf32, #tpu.memory_space<vmem>>, vector<128x16xf32>
    %c0_101 = arith.constant 0 : index
    %c0_102 = arith.constant 0 : index
    %115 = vector.load %arg14[%c0_101, %c0_102] : memref<16x128xf32, #tpu.memory_space<vmem>>, vector<16x128xf32>
    %cst_103 = arith.constant dense<0.000000e+00> : vector<8x16xf32>
    %116 = tpu.matmul %111, %114, %cst_103 {dimension_numbers = #tpu.dot_dimension_numbers<[1], [0], [0], [1], [0, 0, 1, 1], [], []>} : vector<8x128xf32>, vector<128x16xf32>, vector<8x16xf32> -> vector<8x16xf32>
    %cst_104 = arith.constant dense<0.000000e+00> : vector<16xf32>
    %117 = vector.multi_reduction <add>, %116, %cst_104 [0] : vector<8x16xf32> to vector<16xf32>
    %118 = vector.shape_cast %117 : vector<16xf32> to vector<1x16xf32>
    %119 = arith.mulf %111, %111 : vector<8x128xf32>
    %cst_105 = arith.constant dense<0.000000e+00> : vector<8x16xf32>
    %120 = tpu.matmul %119, %114, %cst_105 {dimension_numbers = #tpu.dot_dimension_numbers<[1], [0], [0], [1], [0, 0, 1, 1], [], []>} : vector<8x128xf32>, vector<128x16xf32>, vector<8x16xf32> -> vector<8x16xf32>
    %cst_106 = arith.constant dense<0.000000e+00> : vector<16xf32>
    %121 = vector.multi_reduction <add>, %120, %cst_106 [0] : vector<8x16xf32> to vector<16xf32>
    %122 = vector.shape_cast %121 : vector<16xf32> to vector<1x16xf32>
    %cst_107 = arith.constant 3.125000e-02 : f32
    %123 = vector.broadcast %cst_107 : f32 to vector<1x16xf32>
    %124 = arith.mulf %118, %123 : vector<1x16xf32>
    %cst_108 = arith.constant 3.125000e-02 : f32
    %125 = vector.broadcast %cst_108 : f32 to vector<1x16xf32>
    %126 = arith.mulf %122, %125 : vector<1x16xf32>
    %127 = arith.mulf %124, %124 : vector<1x16xf32>
    %128 = arith.subf %126, %127 : vector<1x16xf32>
    %cst_109 = arith.constant 0.000000e+00 : f32
    %129 = vector.broadcast %cst_109 : f32 to vector<1x16xf32>
    %130 = arith.maximumf %128, %129 : vector<1x16xf32>
    %cst_110 = arith.constant 9.99999974E-6 : f32
    %131 = vector.broadcast %cst_110 : f32 to vector<1x16xf32>
    %132 = arith.addf %130, %131 : vector<1x16xf32>
    %133 = math.rsqrt %132 : vector<1x16xf32>
    %134 = arith.mulf %112, %133 : vector<1x16xf32>
    %135 = arith.mulf %124, %134 : vector<1x16xf32>
    %136 = arith.subf %113, %135 : vector<1x16xf32>
    %cst_111 = arith.constant dense<0.000000e+00> : vector<1x128xf32>
    %137 = tpu.matmul %134, %115, %cst_111 {dimension_numbers = #tpu.dot_dimension_numbers<[1], [0], [0], [1], [0, 0, 1, 1], [], []>} : vector<1x16xf32>, vector<16x128xf32>, vector<1x128xf32> -> vector<1x128xf32>
    %138 = vector.broadcast %137 : vector<1x128xf32> to vector<8x128xf32>
    %139 = arith.mulf %111, %138 : vector<8x128xf32>
    %cst_112 = arith.constant dense<0.000000e+00> : vector<1x128xf32>
    %140 = tpu.matmul %136, %115, %cst_112 {dimension_numbers = #tpu.dot_dimension_numbers<[1], [0], [0], [1], [0, 0, 1, 1], [], []>} : vector<1x16xf32>, vector<16x128xf32>, vector<1x128xf32> -> vector<1x128xf32>
    %141 = vector.broadcast %140 : vector<1x128xf32> to vector<8x128xf32>
    %142 = arith.addf %139, %141 : vector<8x128xf32>
    %cst_113 = arith.constant 0.000000e+00 : f32
    %143 = vector.broadcast %cst_113 : f32 to vector<8x128xf32>
    %144 = arith.maximumf %142, %143 : vector<8x128xf32>
    %c0_114 = arith.constant 0 : index
    %c0_115 = arith.constant 0 : index
    %c0_116 = arith.constant 0 : index
    %145 = vector.load %arg8[%c0_114, %c0_115, %c0_116] : memref<2x4x8xf32, #tpu.memory_space<vmem>>, vector<1x4x8xf32>
    %146 = vector.shape_cast %145 : vector<1x4x8xf32> to vector<4x8xf32>
    %cst_117 = arith.constant dense<0.000000e+00> : vector<4x128xf32>
    %147 = tpu.matmul %146, %144, %cst_117 {dimension_numbers = #tpu.dot_dimension_numbers<[1], [0], [0], [1], [0, 0, 1, 1], [], []>} : vector<4x8xf32>, vector<8x128xf32>, vector<4x128xf32> -> vector<4x128xf32>
    %c1_118 = arith.constant 1 : index
    %c0_119 = arith.constant 0 : index
    %c0_120 = arith.constant 0 : index
    %148 = vector.load %arg8[%c1_118, %c0_119, %c0_120] : memref<2x4x8xf32, #tpu.memory_space<vmem>>, vector<1x4x8xf32>
    %149 = vector.shape_cast %148 : vector<1x4x8xf32> to vector<4x8xf32>
    %cst_121 = arith.constant dense<0.000000e+00> : vector<4x128xf32>
    %150 = tpu.matmul %149, %144, %cst_121 {dimension_numbers = #tpu.dot_dimension_numbers<[1], [0], [0], [1], [0, 0, 1, 1], [], []>} : vector<4x8xf32>, vector<8x128xf32>, vector<4x128xf32> -> vector<4x128xf32>
    %151 = arith.maximumf %147, %150 : vector<4x128xf32>
    %c0_122 = arith.constant 0 : index
    %c0_123 = arith.constant 0 : index
    %c0_124 = arith.constant 0 : index
    %152 = vector.load %arg9[%c0_122, %c0_123, %c0_124] : memref<2x128x32xf32, #tpu.memory_space<vmem>>, vector<1x128x32xf32>
    %153 = vector.shape_cast %152 : vector<1x128x32xf32> to vector<128x32xf32>
    %cst_125 = arith.constant dense<0.000000e+00> : vector<4x32xf32>
    %154 = tpu.matmul %151, %153, %cst_125 {dimension_numbers = #tpu.dot_dimension_numbers<[1], [0], [0], [1], [0, 0, 1, 1], [], []>} : vector<4x128xf32>, vector<128x32xf32>, vector<4x32xf32> -> vector<4x32xf32>
    %c1_126 = arith.constant 1 : index
    %c0_127 = arith.constant 0 : index
    %c0_128 = arith.constant 0 : index
    %155 = vector.load %arg9[%c1_126, %c0_127, %c0_128] : memref<2x128x32xf32, #tpu.memory_space<vmem>>, vector<1x128x32xf32>
    %156 = vector.shape_cast %155 : vector<1x128x32xf32> to vector<128x32xf32>
    %cst_129 = arith.constant dense<0.000000e+00> : vector<4x32xf32>
    %157 = tpu.matmul %151, %156, %cst_129 {dimension_numbers = #tpu.dot_dimension_numbers<[1], [0], [0], [1], [0, 0, 1, 1], [], []>} : vector<4x128xf32>, vector<128x32xf32>, vector<4x32xf32> -> vector<4x32xf32>
    %158 = arith.maximumf %154, %157 : vector<4x32xf32>
    %c0_130 = arith.constant 0 : index
    %c0_131 = arith.constant 0 : index
    %c0_132 = arith.constant 0 : index
    %159 = vector.load %arg10[%c0_130, %c0_131, %c0_132] : memref<2x2x4xf32, #tpu.memory_space<vmem>>, vector<1x2x4xf32>
    %160 = vector.shape_cast %159 : vector<1x2x4xf32> to vector<2x4xf32>
    %cst_133 = arith.constant dense<0.000000e+00> : vector<2x32xf32>
    %161 = tpu.matmul %160, %158, %cst_133 {dimension_numbers = #tpu.dot_dimension_numbers<[1], [0], [0], [1], [0, 0, 1, 1], [], []>} : vector<2x4xf32>, vector<4x32xf32>, vector<2x32xf32> -> vector<2x32xf32>
    %c640 = arith.constant 640 : index
    %c0_134 = arith.constant 0 : index
    %162 = vector.load %arg2[%c640, %c0_134] : memref<1088x128xf32, #tpu.memory_space<vmem>>, vector<32x128xf32>
    %cst_135 = arith.constant dense<0.000000e+00> : vector<2x128xf32>
    %163 = tpu.matmul %161, %162, %cst_135 {dimension_numbers = #tpu.dot_dimension_numbers<[1], [0], [0], [1], [0, 0, 1, 1], [], []>} : vector<2x32xf32>, vector<32x128xf32>, vector<2x128xf32> -> vector<2x128xf32>
    %c1_136 = arith.constant 1 : index
    %c0_137 = arith.constant 0 : index
    %c0_138 = arith.constant 0 : index
    %164 = vector.load %arg10[%c1_136, %c0_137, %c0_138] : memref<2x2x4xf32, #tpu.memory_space<vmem>>, vector<1x2x4xf32>
    %165 = vector.shape_cast %164 : vector<1x2x4xf32> to vector<2x4xf32>
    %cst_139 = arith.constant dense<0.000000e+00> : vector<2x32xf32>
    %166 = tpu.matmul %165, %158, %cst_139 {dimension_numbers = #tpu.dot_dimension_numbers<[1], [0], [0], [1], [0, 0, 1, 1], [], []>} : vector<2x4xf32>, vector<4x32xf32>, vector<2x32xf32> -> vector<2x32xf32>
    %c672 = arith.constant 672 : index
    %c0_140 = arith.constant 0 : index
    %167 = vector.load %arg2[%c672, %c0_140] : memref<1088x128xf32, #tpu.memory_space<vmem>>, vector<32x128xf32>
    %cst_141 = arith.constant dense<0.000000e+00> : vector<2x128xf32>
    %168 = tpu.matmul %166, %167, %cst_141 {dimension_numbers = #tpu.dot_dimension_numbers<[1], [0], [0], [1], [0, 0, 1, 1], [], []>} : vector<2x32xf32>, vector<32x128xf32>, vector<2x128xf32> -> vector<2x128xf32>
    %169 = arith.addf %163, %168 : vector<2x128xf32>
    %c6 = arith.constant 6 : index
    %c0_142 = arith.constant 0 : index
    %170 = vector.load %arg3[%c6, %c0_142] : memref<16x128xf32, #tpu.memory_space<vmem>>, vector<1x128xf32>
    %171 = vector.broadcast %170 : vector<1x128xf32> to vector<2x128xf32>
    %172 = arith.addf %169, %171 : vector<2x128xf32>
    %cst_143 = arith.constant dense<0.000000e+00> : vector<128xf32>
    %173 = vector.multi_reduction <add>, %172, %cst_143 [0] : vector<2x128xf32> to vector<128xf32>
    %174 = vector.shape_cast %173 : vector<128xf32> to vector<1x128xf32>
    %175 = arith.mulf %172, %172 : vector<2x128xf32>
    %cst_144 = arith.constant dense<0.000000e+00> : vector<128xf32>
    %176 = vector.multi_reduction <add>, %175, %cst_144 [0] : vector<2x128xf32> to vector<128xf32>
    %177 = vector.shape_cast %176 : vector<128xf32> to vector<1x128xf32>
    %cst_145 = arith.constant 5.000000e-01 : f32
    %178 = vector.broadcast %cst_145 : f32 to vector<1x128xf32>
    %179 = arith.mulf %174, %178 : vector<1x128xf32>
    %cst_146 = arith.constant 5.000000e-01 : f32
    %180 = vector.broadcast %cst_146 : f32 to vector<1x128xf32>
    %181 = arith.mulf %177, %180 : vector<1x128xf32>
    %182 = arith.mulf %179, %179 : vector<1x128xf32>
    %183 = arith.subf %181, %182 : vector<1x128xf32>
    %cst_147 = arith.constant 0.000000e+00 : f32
    %184 = vector.broadcast %cst_147 : f32 to vector<1x128xf32>
    %185 = arith.maximumf %183, %184 : vector<1x128xf32>
    %c7 = arith.constant 7 : index
    %c0_148 = arith.constant 0 : index
    %186 = vector.load %arg3[%c7, %c0_148] : memref<16x128xf32, #tpu.memory_space<vmem>>, vector<1x128xf32>
    %cst_149 = arith.constant 9.99999974E-6 : f32
    %187 = vector.broadcast %cst_149 : f32 to vector<1x128xf32>
    %188 = arith.addf %185, %187 : vector<1x128xf32>
    %189 = math.rsqrt %188 : vector<1x128xf32>
    %190 = arith.mulf %186, %189 : vector<1x128xf32>
    %c8 = arith.constant 8 : index
    %c0_150 = arith.constant 0 : index
    %191 = vector.load %arg3[%c8, %c0_150] : memref<16x128xf32, #tpu.memory_space<vmem>>, vector<1x128xf32>
    %192 = arith.mulf %179, %190 : vector<1x128xf32>
    %193 = arith.subf %191, %192 : vector<1x128xf32>
    %194 = vector.broadcast %190 : vector<1x128xf32> to vector<2x128xf32>
    %195 = arith.mulf %172, %194 : vector<2x128xf32>
    %196 = vector.broadcast %193 : vector<1x128xf32> to vector<2x128xf32>
    %197 = arith.addf %195, %196 : vector<2x128xf32>
    %cst_151 = arith.constant 0.000000e+00 : f32
    %198 = vector.broadcast %cst_151 : f32 to vector<2x128xf32>
    %199 = arith.maximumf %197, %198 : vector<2x128xf32>
    %c704 = arith.constant 704 : index
    %c0_152 = arith.constant 0 : index
    %200 = vector.load %arg2[%c704, %c0_152] : memref<1088x128xf32, #tpu.memory_space<vmem>>, vector<128x128xf32>
    %cst_153 = arith.constant dense<0.000000e+00> : vector<2x128xf32>
    %201 = tpu.matmul %199, %200, %cst_153 {dimension_numbers = #tpu.dot_dimension_numbers<[1], [0], [0], [1], [0, 0, 1, 1], [], []>} : vector<2x128xf32>, vector<128x128xf32>, vector<2x128xf32> -> vector<2x128xf32>
    %c9 = arith.constant 9 : index
    %c0_154 = arith.constant 0 : index
    %202 = vector.load %arg3[%c9, %c0_154] : memref<16x128xf32, #tpu.memory_space<vmem>>, vector<1x128xf32>
    %203 = vector.broadcast %202 : vector<1x128xf32> to vector<2x128xf32>
    %204 = arith.addf %201, %203 : vector<2x128xf32>
    %cst_155 = arith.constant 0.000000e+00 : f32
    %205 = vector.broadcast %cst_155 : f32 to vector<2x128xf32>
    %206 = arith.maximumf %204, %205 : vector<2x128xf32>
    %c832 = arith.constant 832 : index
    %c0_156 = arith.constant 0 : index
    %207 = vector.load %arg2[%c832, %c0_156] : memref<1088x128xf32, #tpu.memory_space<vmem>>, vector<128x128xf32>
    %cst_157 = arith.constant dense<0.000000e+00> : vector<2x128xf32>
    %208 = tpu.matmul %206, %207, %cst_157 {dimension_numbers = #tpu.dot_dimension_numbers<[1], [0], [0], [1], [0, 0, 1, 1], [], []>} : vector<2x128xf32>, vector<128x128xf32>, vector<2x128xf32> -> vector<2x128xf32>
    %c10 = arith.constant 10 : index
    %c0_158 = arith.constant 0 : index
    %209 = vector.load %arg3[%c10, %c0_158] : memref<16x128xf32, #tpu.memory_space<vmem>>, vector<1x128xf32>
    %210 = vector.broadcast %209 : vector<1x128xf32> to vector<2x128xf32>
    %211 = arith.addf %208, %210 : vector<2x128xf32>
    %c960 = arith.constant 960 : index
    %c0_159 = arith.constant 0 : index
    %212 = vector.load %arg2[%c960, %c0_159] : memref<1088x128xf32, #tpu.memory_space<vmem>>, vector<128x128xf32>
    %cst_160 = arith.constant dense<0.000000e+00> : vector<2x128xf32>
    %213 = tpu.matmul %211, %212, %cst_160 {dimension_numbers = #tpu.dot_dimension_numbers<[1], [0], [0], [1], [0, 0, 1, 1], [], []>} : vector<2x128xf32>, vector<128x128xf32>, vector<2x128xf32> -> vector<2x128xf32>
    %c11 = arith.constant 11 : index
    %c0_161 = arith.constant 0 : index
    %214 = vector.load %arg3[%c11, %c0_161] : memref<16x128xf32, #tpu.memory_space<vmem>>, vector<1x128xf32>
    %215 = vector.broadcast %214 : vector<1x128xf32> to vector<2x128xf32>
    %216 = arith.addf %213, %215 : vector<2x128xf32>
    %c0_162 = arith.constant 0 : index
    %c0_163 = arith.constant 0 : index
    %217 = vector.load %arg15[%c0_162, %c0_163] : memref<2x384xf32, #tpu.memory_space<vmem>>, vector<2x128xf32>
    tpu.vector_store %arg15[%c0_162, %c0_163], %199 {strides = array<i32>} : memref<2x384xf32, #tpu.memory_space<vmem>>, vector<2x128xf32>,
    %c0_164 = arith.constant 0 : index
    %c128_165 = arith.constant 128 : index
    %218 = vector.load %arg15[%c0_164, %c128_165] : memref<2x384xf32, #tpu.memory_space<vmem>>, vector<2x128xf32>
    tpu.vector_store %arg15[%c0_164, %c128_165], %211 {strides = array<i32>} : memref<2x384xf32, #tpu.memory_space<vmem>>, vector<2x128xf32>,
    %c0_166 = arith.constant 0 : index
    %c256_167 = arith.constant 256 : index
    %219 = vector.load %arg15[%c0_166, %c256_167] : memref<2x384xf32, #tpu.memory_space<vmem>>, vector<2x128xf32>
    tpu.vector_store %arg15[%c0_166, %c256_167], %216 {strides = array<i32>} : memref<2x384xf32, #tpu.memory_space<vmem>>, vector<2x128xf32>,
    return
  }
  func.func @transform_0(%arg0: i32) -> (i32, i32) {
    %c0_i32 = arith.constant 0 : i32
    %c0_i32_0 = arith.constant 0 : i32
    return %arg0, %c0_i32 : i32, i32
  }
  func.func @transform_1(%arg0: i32) -> (i32, i32) {
    %c0_i32 = arith.constant 0 : i32
    %c0_i32_0 = arith.constant 0 : i32
    %c0_i32_1 = arith.constant 0 : i32
    return %c0_i32, %c0_i32_0 : i32, i32
  }
  func.func @transform_2(%arg0: i32) -> (i32, i32) {
    %c0_i32 = arith.constant 0 : i32
    %c0_i32_0 = arith.constant 0 : i32
    %c0_i32_1 = arith.constant 0 : i32
    return %c0_i32, %c0_i32_0 : i32, i32
  }
  func.func @transform_3(%arg0: i32) -> (i32, i32, i32) {
    %c0_i32 = arith.constant 0 : i32
    %c0_i32_0 = arith.constant 0 : i32
    %c0_i32_1 = arith.constant 0 : i32
    %c0_i32_2 = arith.constant 0 : i32
    return %c0_i32, %c0_i32_0, %c0_i32_1 : i32, i32, i32
  }
  func.func @transform_4(%arg0: i32) -> (i32, i32, i32) {
    %c0_i32 = arith.constant 0 : i32
    %c0_i32_0 = arith.constant 0 : i32
    %c0_i32_1 = arith.constant 0 : i32
    %c0_i32_2 = arith.constant 0 : i32
    return %c0_i32, %c0_i32_0, %c0_i32_1 : i32, i32, i32
  }
  func.func @transform_5(%arg0: i32) -> (i32, i32, i32) {
    %c0_i32 = arith.constant 0 : i32
    %c0_i32_0 = arith.constant 0 : i32
    %c0_i32_1 = arith.constant 0 : i32
    %c0_i32_2 = arith.constant 0 : i32
    return %c0_i32, %c0_i32_0, %c0_i32_1 : i32, i32, i32
  }
  func.func @transform_6(%arg0: i32) -> (i32, i32, i32) {
    %c0_i32 = arith.constant 0 : i32
    %c0_i32_0 = arith.constant 0 : i32
    %c0_i32_1 = arith.constant 0 : i32
    %c0_i32_2 = arith.constant 0 : i32
    return %c0_i32, %c0_i32_0, %c0_i32_1 : i32, i32, i32
  }
  func.func @transform_7(%arg0: i32) -> (i32, i32, i32) {
    %c0_i32 = arith.constant 0 : i32
    %c0_i32_0 = arith.constant 0 : i32
    %c0_i32_1 = arith.constant 0 : i32
    %c0_i32_2 = arith.constant 0 : i32
    return %c0_i32, %c0_i32_0, %c0_i32_1 : i32, i32, i32
  }
  func.func @transform_8(%arg0: i32) -> (i32, i32, i32) {
    %c0_i32 = arith.constant 0 : i32
    %c0_i32_0 = arith.constant 0 : i32
    %c0_i32_1 = arith.constant 0 : i32
    %c0_i32_2 = arith.constant 0 : i32
    return %c0_i32, %c0_i32_0, %c0_i32_1 : i32, i32, i32
  }
  func.func @transform_9(%arg0: i32) -> (i32, i32, i32) {
    %c0_i32 = arith.constant 0 : i32
    %c0_i32_0 = arith.constant 0 : i32
    %c0_i32_1 = arith.constant 0 : i32
    %c0_i32_2 = arith.constant 0 : i32
    return %c0_i32, %c0_i32_0, %c0_i32_1 : i32, i32, i32
  }
  func.func @transform_10(%arg0: i32) -> (i32, i32) {
    %c0_i32 = arith.constant 0 : i32
    %c0_i32_0 = arith.constant 0 : i32
    %c0_i32_1 = arith.constant 0 : i32
    return %c0_i32, %c0_i32_0 : i32, i32
  }
  func.func @transform_11(%arg0: i32) -> (i32, i32) {
    %c0_i32 = arith.constant 0 : i32
    %c0_i32_0 = arith.constant 0 : i32
    %c0_i32_1 = arith.constant 0 : i32
    return %c0_i32, %c0_i32_0 : i32, i32
  }
  func.func @transform_12(%arg0: i32) -> (i32, i32) {
    %c0_i32 = arith.constant 0 : i32
    %c0_i32_0 = arith.constant 0 : i32
    %c0_i32_1 = arith.constant 0 : i32
    return %c0_i32, %c0_i32_0 : i32, i32
  }
  func.func @transform_13(%arg0: i32) -> (i32, i32) {
    %c0_i32 = arith.constant 0 : i32
    %c0_i32_0 = arith.constant 0 : i32
    %c0_i32_1 = arith.constant 0 : i32
    return %c0_i32, %c0_i32_0 : i32, i32
  }
  func.func @transform_14(%arg0: i32) -> (i32, i32) {
    %c0_i32 = arith.constant 0 : i32
    %c0_i32_0 = arith.constant 0 : i32
    return %arg0, %c0_i32 : i32, i32
  }
}

</mosaic_0001>

<llo_original>
// kernel: fused_forward.1
$region0: #{fused_forward.1}
  #allocation0 [shape = 'u32[]', space=smem, size = 0x4, offset = 0x4, fixed_abs, tag = 'smem constant byte address 0x4 - core index']
  #allocation1 [shape = 'u32[144,128]{1,0:T(1,128)}', space=vmem, size = 0x12000, scoped, tag = 'internal scratch']
  %s0 = inlined_call_operand.vmem [shape: f32[40,64], index: 0, kind: input, shape index: {}]
  %s1 = inlined_call_operand.vmem [shape: f32[1088,128], index: 1, kind: input, shape index: {}]
  %s2 = inlined_call_operand.vmem [shape: f32[16,128], index: 2, kind: input, shape index: {}]
  %s3 = inlined_call_operand.vmem [shape: f32[5,32,40], index: 3, kind: input, shape index: {}]
  %s4 = inlined_call_operand.vmem [shape: f32[2,16,32], index: 4, kind: input, shape index: {}]
  %s5 = inlined_call_operand.vmem [shape: f32[2,128,64], index: 5, kind: input, shape index: {}]
  %s6 = inlined_call_operand.vmem [shape: f32[5,8,16], index: 6, kind: input, shape index: {}]
  %s7 = inlined_call_operand.vmem [shape: f32[2,4,8], index: 7, kind: input, shape index: {}]
  %s8 = inlined_call_operand.vmem [shape: f32[2,128,32], index: 8, kind: input, shape index: {}]
  %s9 = inlined_call_operand.vmem [shape: f32[2,2,4], index: 9, kind: input, shape index: {}]
  %s10 = inlined_call_operand.vmem [shape: f32[128,8], index: 10, kind: input, shape index: {}]
  %s11 = inlined_call_operand.vmem [shape: f32[8,128], index: 11, kind: input, shape index: {}]
  %s12 = inlined_call_operand.vmem [shape: f32[128,16], index: 12, kind: input, shape index: {}]
  %s13 = inlined_call_operand.vmem [shape: f32[16,128], index: 13, kind: input, shape index: {}]
  %s14 = inlined_call_operand.vmem [shape: f32[2,384], index: 14, kind: output, shape index: {}]
  %s15 = sld [smem:[#allocation0]]
  $region66: #{fused_forward.1} parent=0
    _
  %s17 = ssub.s32 1, %s15
  %s18 = scalar_select 0, %s17, %s15
  // Predicated region
  $region2: #{fused_forward.1} parent=0 // pred_check
    _
  $region3: #{fused_forward.1} parent=0 // pred_check_branch
    %20 = sbr.rel (0) target = $region5
  $region4: #{fused_forward.1} parent=0 // pred_region
    _
  $region5: #{fused_forward.1} parent=0 // pred_fallthru
    _
  // Predicated region
  $region6: #{fused_forward.1} parent=0 // pred_check
    _
  $region7: #{fused_forward.1} parent=0 // pred_check_branch
    %22 = sbr.rel (0) target = $region9
  $region8: #{fused_forward.1} parent=0 // pred_region
    _
  $region9: #{fused_forward.1} parent=0 // pred_fallthru
    _
  // Predicated region
  $region10: #{fused_forward.1} parent=0 // pred_check
    _
  $region11: #{fused_forward.1} parent=0 // pred_check_branch
    %24 = sbr.rel (0) target = $region13
  $region12: #{fused_forward.1} parent=0 // pred_region
    _
  $region13: #{fused_forward.1} parent=0 // pred_fallthru
    _
  // Predicated region
  $region14: #{fused_forward.1} parent=0 // pred_check
    _
  $region15: #{fused_forward.1} parent=0 // pred_check_branch
    %26 = sbr.rel (0) target = $region17
  $region16: #{fused_forward.1} parent=0 // pred_region
    _
  $region17: #{fused_forward.1} parent=0 // pred_fallthru
    _
  // Predicated region
  $region18: #{fused_forward.1} parent=0 // pred_check
    _
  $region19: #{fused_forward.1} parent=0 // pred_check_branch
    %28 = sbr.rel (0) target = $region21
  $region20: #{fused_forward.1} parent=0 // pred_region
    _
  $region21: #{fused_forward.1} parent=0 // pred_fallthru
    _
  // Predicated region
  $region22: #{fused_forward.1} parent=0 // pred_check
    _
  $region23: #{fused_forward.1} parent=0 // pred_check_branch
    %30 = sbr.rel (0) target = $region25
  $region24: #{fused_forward.1} parent=0 // pred_region
    _
  $region25: #{fused_forward.1} parent=0 // pred_fallthru
    _
  // Predicated region
  $region26: #{fused_forward.1} parent=0 // pred_check
    _
  $region27: #{fused_forward.1} parent=0 // pred_check_branch
    %32 = sbr.rel (0) target = $region29
  $region28: #{fused_forward.1} parent=0 // pred_region
    _
  $region29: #{fused_forward.1} parent=0 // pred_fallthru
    _
  // Predicated region
  $region30: #{fused_forward.1} parent=0 // pred_check
    _
  $region31: #{fused_forward.1} parent=0 // pred_check_branch
    %34 = sbr.rel (0) target = $region33
  $region32: #{fused_forward.1} parent=0 // pred_region
    _
  $region33: #{fused_forward.1} parent=0 // pred_fallthru
    _
  // Predicated region
  $region34: #{fused_forward.1} parent=0 // pred_check
    _
  $region35: #{fused_forward.1} parent=0 // pred_check_branch
    %36 = sbr.rel (0) target = $region37
  $region36: #{fused_forward.1} parent=0 // pred_region
    _
  $region37: #{fused_forward.1} parent=0 // pred_fallthru
    _
  // Predicated region
  $region38: #{fused_forward.1} parent=0 // pred_check
    _
  $region39: #{fused_forward.1} parent=0 // pred_check_branch
    %38 = sbr.rel (0) target = $region41
  $region40: #{fused_forward.1} parent=0 // pred_region
    _
  $region41: #{fused_forward.1} parent=0 // pred_fallthru
    _
  // Predicated region
  $region42: #{fused_forward.1} parent=0 // pred_check
    _
  $region43: #{fused_forward.1} parent=0 // pred_check_branch
    %40 = sbr.rel (0) target = $region45
  $region44: #{fused_forward.1} parent=0 // pred_region
    _
  $region45: #{fused_forward.1} parent=0 // pred_fallthru
    _
  // Predicated region
  $region46: #{fused_forward.1} parent=0 // pred_check
    _
  $region47: #{fused_forward.1} parent=0 // pred_check_branch
    %42 = sbr.rel (0) target = $region49
  $region48: #{fused_forward.1} parent=0 // pred_region
    _
  $region49: #{fused_forward.1} parent=0 // pred_fallthru
    _
  // Predicated region
  $region50: #{fused_forward.1} parent=0 // pred_check
    _
  $region51: #{fused_forward.1} parent=0 // pred_check_branch
    %44 = sbr.rel (0) target = $region53
  $region52: #{fused_forward.1} parent=0 // pred_region
    _
  $region53: #{fused_forward.1} parent=0 // pred_fallthru
    _
  // Predicated region
  $region54: #{fused_forward.1} parent=0 // pred_check
    _
  $region55: #{fused_forward.1} parent=0 // pred_check_branch
    %46 = sbr.rel (0) target = $region57
  $region56: #{fused_forward.1} parent=0 // pred_region
    _
  $region57: #{fused_forward.1} parent=0 // pred_fallthru
    _
  %v47 = vld [vmem:[%s0] sm:$0xff]
  %v48 = vld [vmem:[%s0 + $0x8] sm:$0xff]
  %v49 = vld [vmem:[%s0 + $0x10] sm:$0xff]
  %v50 = vld [vmem:[%s0 + $0x18] sm:$0xff]
  %v51 = vld [vmem:[%s0 + $0x20] sm:$0xff]
  %v52 = vld [vmem:[%s3] sm:$0xff]
  %v53 = vld [vmem:[%s3 + $0x8] sm:$0xff]
  %v54 = vld [vmem:[%s3 + $0x10] sm:$0xff]
  %v55 = vld [vmem:[%s3 + $0x18] sm:$0xff]
  %vm56 = vcmask 326656
  %v58 = vsel %vm56, %v52, 0
  %v61 = vsel %vm56, %v53, 0
  %v64 = vsel %vm56, %v54, 0
  %v67 = vsel %vm56, %v55, 0
  %69 = vmatprep.subr.mxu0 0.0
  %70 = vmatpush1.msra.mxu0 %v47
  %71 = vmatprep.subr.mxu0 0.0
  %72 = vmatpush1.msra.mxu0 %v48
  %73 = vmatprep.subr.mxu0 0.0
  %74 = vmatpush1.msra.mxu0 %v49
  %75 = vmatprep.subr.mxu0 0.0
  %76 = vmatpush1.msra.mxu0 %v50
  %77 = vmatprep.subr.mxu0 0.0
  %78 = vmatpush1.msra.mxu0 %v51
  %79 = vmatprep.subr.mxu0 0.0
  %80 = vmatpush1.msra.mxu0 0.0
  %81 = vmatprep.subr.mxu0 0.0
  %82 = vmatpush1.msra.mxu0 0.0
  %83 = vmatprep.subr.mxu0 0.0
  %84 = vmatpush1.msra.mxu0 0.0
  %85 = vmatprep.subr.mxu0 0.0
  %86 = vmatpush1.msra.mxu0 0.0
  %87 = vmatprep.subr.mxu0 0.0
  %88 = vmatpush1.msra.mxu0 0.0
  %89 = vmatprep.subr.mxu0 0.0
  %90 = vmatpush1.msra.mxu0 0.0
  %91 = vmatprep.subr.mxu0 0.0
  %92 = vmatpush1.msra.mxu0 0.0
  %93 = vmatprep.subr.mxu0 0.0
  %94 = vmatpush1.msra.mxu0 0.0
  %95 = vmatprep.subr.mxu0 0.0
  %96 = vmatpush1.msra.mxu0 0.0
  %97 = vmatprep.subr.mxu0 0.0
  %98 = vmatpush1.msra.mxu0 0.0
  %99 = vmatprep.subr.mxu0 0.0
  %100 = vmatpush1.msra.mxu0 0.0
  %101 = vmatprep.subr.mxu0 0.0
  %102 = vmatpush1.msra.mxu0 0.0
  %103 = vmatprep.subr.mxu0 0.0
  %104 = vmatpush1.msra.mxu0 0.0
  %105 = vmatprep.subr.mxu0 0.0
  %106 = vmatpush1.msra.mxu0 0.0
  %107 = vmatprep.subr.mxu0 0.0
  %108 = vmatpush1.msra.mxu0 0.0
  %109 = vmatprep.subr.mxu0 0.0
  %110 = vmatpush1.msra.mxu0 0.0
  %111 = vmatprep.subr.mxu0 0.0
  %112 = vmatpush1.msra.mxu0 0.0
  %113 = vmatprep.subr.mxu0 0.0
  %114 = vmatpush1.msra.mxu0 0.0
  %115 = vmatprep.subr.mxu0 0.0
  %116 = vmatpush1.msra.mxu0 0.0
  %117 = vmatprep.subr.mxu0 0.0
  %118 = vmatpush1.msra.mxu0 0.0
  %119 = vmatprep.subr.mxu0 0.0
  %120 = vmatpush1.msra.mxu0 0.0
  %121 = vmatprep.subr.mxu0 0.0
  %122 = vmatpush1.msra.mxu0 0.0
  %123 = vmatprep.subr.mxu0 0.0
  %124 = vmatpush1.msra.mxu0 0.0
  %125 = vmatprep.subr.mxu0 0.0
  %126 = vmatpush1.msra.mxu0 0.0
  %127 = vmatprep.subr.mxu0 0.0
  %128 = vmatpush1.msra.mxu0 0.0
  %129 = vmatprep.subr.mxu0 0.0
  %130 = vmatpush1.msra.mxu0 0.0
  %131 = vmatprep.subr.mxu0 0.0
  %132 = vmatpush1.msra.mxu0 0.0
  %133 = vmatprep.mubr.f32.mxu0 0.0
  %134 = vmatmul.mubr.f32.gmra.mrb[0].mxu0 %v58
  %v135 = vpop.f32.mrb[0].mxu0
  %v136 = vadd.f32 0.0, %v135
  %v137 = vpop.f32.mrb[0].mxu0
  %138 = vmatprep.mubr.f32.mxu0 0.0
  %139 = vmatmul.mubr.f32.gmra.mrb[0].mxu0 %v61
  %v140 = vpop.f32.mrb[0].mxu0
  %v141 = vadd.f32 0.0, %v140
  %v142 = vpop.f32.mrb[0].mxu0
  %143 = vmatprep.mubr.f32.mxu0 0.0
  %144 = vmatmul.mubr.f32.gmra.mrb[0].mxu0 %v64
  %v145 = vpop.f32.mrb[0].mxu0
  %v146 = vadd.f32 0.0, %v145
  %v147 = vpop.f32.mrb[0].mxu0
  %148 = vmatprep.mubr.f32.mxu0 0.0
  %149 = vmatmul.mubr.f32.gmra.mrb[0].mxu0 %v67
  %v150 = vpop.f32.mrb[0].mxu0
  %v151 = vadd.f32 0.0, %v150
  %v152 = vpop.f32.mrb[0].mxu0
  %153 = vdwg.mxu0
  %v154 = vld [vmem:[%s1] sm:$0xff]
  %v155 = vld [vmem:[%s1 + $0x8] sm:$0xff]
  %v156 = vld [vmem:[%s1 + $0x10] sm:$0xff]
  %v157 = vld [vmem:[%s1 + $0x18] sm:$0xff]
  %v158 = vld [vmem:[%s1 + $0x20] sm:$0xff]
  %v159 = vld [vmem:[%s1 + $0x28] sm:$0xff]
  %v160 = vld [vmem:[%s1 + $0x30] sm:$0xff]
  %v161 = vld [vmem:[%s1 + $0x38] sm:$0xff]
  %s162 = scalar_lea.vmem %s3, 32
  %v163 = vld [vmem:[%s162] sm:$0xff]
  %v164 = vld [vmem:[%s162 + $0x8] sm:$0xff]
  %v165 = vld [vmem:[%s162 + $0x10] sm:$0xff]
  %v166 = vld [vmem:[%s162 + $0x18] sm:$0xff]
  %v168 = vsel %vm56, %v163, 0
  %v171 = vsel %vm56, %v164, 0
  %v174 = vsel %vm56, %v165, 0
  %v177 = vsel %vm56, %v166, 0
  %179 = vmatprep.subr.mxu0 0.0
  %180 = vmatpush1.msra.mxu0 %v47
  %181 = vmatprep.subr.mxu0 0.0
  %182 = vmatpush1.msra.mxu0 %v48
  %183 = vmatprep.subr.mxu0 0.0
  %184 = vmatpush1.msra.mxu0 %v49
  %185 = vmatprep.subr.mxu0 0.0
  %186 = vmatpush1.msra.mxu0 %v50
  %187 = vmatprep.subr.mxu0 0.0
  %188 = vmatpush1.msra.mxu0 %v51
  %189 = vmatprep.subr.mxu0 0.0
  %190 = vmatpush1.msra.mxu0 0.0
  %191 = vmatprep.subr.mxu0 0.0
  %192 = vmatpush1.msra.mxu0 0.0
  %193 = vmatprep.subr.mxu0 0.0
  %194 = vmatpush1.msra.mxu0 0.0
  %195 = vmatprep.subr.mxu0 0.0
  %196 = vmatpush1.msra.mxu0 0.0
  %197 = vmatprep.subr.mxu0 0.0
  %198 = vmatpush1.msra.mxu0 0.0
  %199 = vmatprep.subr.mxu0 0.0
  %200 = vmatpush1.msra.mxu0 0.0
  %201 = vmatprep.subr.mxu0 0.0
  %202 = vmatpush1.msra.mxu0 0.0
  %203 = vmatprep.subr.mxu0 0.0
  %204 = vmatpush1.msra.mxu0 0.0
  %205 = vmatprep.subr.mxu0 0.0
  %206 = vmatpush1.msra.mxu0 0.0
  %207 = vmatprep.subr.mxu0 0.0
  %208 = vmatpush1.msra.mxu0 0.0
  %209 = vmatprep.subr.mxu0 0.0
  %210 = vmatpush1.msra.mxu0 0.0
  %211 = vmatprep.subr.mxu0 0.0
  %212 = vmatpush1.msra.mxu0 0.0
  %213 = vmatprep.subr.mxu0 0.0
  %214 = vmatpush1.msra.mxu0 0.0
  %215 = vmatprep.subr.mxu0 0.0
  %216 = vmatpush1.msra.mxu0 0.0
  %217 = vmatprep.subr.mxu0 0.0
  %218 = vmatpush1.msra.mxu0 0.0
  %219 = vmatprep.subr.mxu0 0.0
  %220 = vmatpush1.msra.mxu0 0.0
  %221 = vmatprep.subr.mxu0 0.0
  %222 = vmatpush1.msra.mxu0 0.0
  %223 = vmatprep.subr.mxu0 0.0
  %224 = vmatpush1.msra.mxu0 0.0
  %225 = vmatprep.subr.mxu0 0.0
  %226 = vmatpush1.msra.mxu0 0.0
  %227 = vmatprep.subr.mxu0 0.0
  %228 = vmatpush1.msra.mxu0 0.0
  %229 = vmatprep.subr.mxu0 0.0
  %230 = vmatpush1.msra.mxu0 0.0
  %231 = vmatprep.subr.mxu0 0.0
  %232 = vmatpush1.msra.mxu0 0.0
  %233 = vmatprep.subr.mxu0 0.0
  %234 = vmatpush1.msra.mxu0 0.0
  %235 = vmatprep.subr.mxu0 0.0
  %236 = vmatpush1.msra.mxu0 0.0
  %237 = vmatprep.subr.mxu0 0.0
  %238 = vmatpush1.msra.mxu0 0.0
  %239 = vmatprep.subr.mxu0 0.0
  %240 = vmatpush1.msra.mxu0 0.0
  %241 = vmatprep.subr.mxu0 0.0
  %242 = vmatpush1.msra.mxu0 0.0
  %243 = vmatprep.mubr.f32.mxu0 0.0
  %244 = vmatmul.mubr.f32.gmra.mrb[0].mxu0 %v168
  %v245 = vpop.f32.mrb[0].mxu0
  %v246 = vadd.f32 0.0, %v245
  %v247 = vpop.f32.mrb[0].mxu0
  %248 = vmatprep.mubr.f32.mxu0 0.0
  %249 = vmatmul.mubr.f32.gmra.mrb[0].mxu0 %v171
  %v250 = vpop.f32.mrb[0].mxu0
  %v251 = vadd.f32 0.0, %v250
  %v252 = vpop.f32.mrb[0].mxu0
  %253 = vmatprep.mubr.f32.mxu0 0.0
  %254 = vmatmul.mubr.f32.gmra.mrb[0].mxu0 %v174
  %v255 = vpop.f32.mrb[0].mxu0
  %v256 = vadd.f32 0.0, %v255
  %v257 = vpop.f32.mrb[0].mxu0
  %258 = vmatprep.mubr.f32.mxu0 0.0
  %259 = vmatmul.mubr.f32.gmra.mrb[0].mxu0 %v177
  %v260 = vpop.f32.mrb[0].mxu0
  %v261 = vadd.f32 0.0, %v260
  %v262 = vpop.f32.mrb[0].mxu0
  %263 = vdwg.mxu0
  %v264 = vld [vmem:[%s1 + $0x40] sm:$0xff]
  %v265 = vld [vmem:[%s1 + $0x48] sm:$0xff]
  %v266 = vld [vmem:[%s1 + $0x50] sm:$0xff]
  %v267 = vld [vmem:[%s1 + $0x58] sm:$0xff]
  %v268 = vld [vmem:[%s1 + $0x60] sm:$0xff]
  %v269 = vld [vmem:[%s1 + $0x68] sm:$0xff]
  %v270 = vld [vmem:[%s1 + $0x70] sm:$0xff]
  %v271 = vld [vmem:[%s1 + $0x78] sm:$0xff]
  %vm272 = vcmask 523264
  %v274 = vsel %vm272, %v246, 0
  %v277 = vsel %vm272, %v251, 0
  %v280 = vsel %vm272, %v256, 0
  %v283 = vsel %vm272, %v261, 0
  %285 = vmatprep.subr.mxu0 0.0
  %286 = vmatpush1.msra.mxu0 %v264
  %287 = vmatprep.subr.mxu0 0.0
  %288 = vmatpush1.msra.mxu0 %v265
  %289 = vmatprep.subr.mxu0 0.0
  %290 = vmatpush1.msra.mxu0 %v266
  %291 = vmatprep.subr.mxu0 0.0
  %292 = vmatpush1.msra.mxu0 %v267
  %293 = vmatprep.subr.mxu0 0.0
  %294 = vmatpush1.msra.mxu0 %v268
  %295 = vmatprep.subr.mxu0 0.0
  %296 = vmatpush1.msra.mxu0 %v269
  %297 = vmatprep.subr.mxu0 0.0
  %298 = vmatpush1.msra.mxu0 %v270
  %299 = vmatprep.subr.mxu0 0.0
  %300 = vmatpush1.msra.mxu0 %v271
  %301 = vmatprep.subr.mxu0 0.0
  %302 = vmatpush1.msra.mxu0 0.0
  %303 = vmatprep.subr.mxu0 0.0
  %304 = vmatpush1.msra.mxu0 0.0
  %305 = vmatprep.subr.mxu0 0.0
  %306 = vmatpush1.msra.mxu0 0.0
  %307 = vmatprep.subr.mxu0 0.0
  %308 = vmatpush1.msra.mxu0 0.0
  %309 = vmatprep.subr.mxu0 0.0
  %310 = vmatpush1.msra.mxu0 0.0
  %311 = vmatprep.subr.mxu0 0.0
  %312 = vmatpush1.msra.mxu0 0.0
  %313 = vmatprep.subr.mxu0 0.0
  %314 = vmatpush1.msra.mxu0 0.0
  %315 = vmatprep.subr.mxu0 0.0
  %316 = vmatpush1.msra.mxu0 0.0
  %317 = vmatprep.subr.mxu0 0.0
  %318 = vmatpush1.msra.mxu0 0.0
  %319 = vmatprep.subr.mxu0 0.0
  %320 = vmatpush1.msra.mxu0 0.0
  %321 = vmatprep.subr.mxu0 0.0
  %322 = vmatpush1.msra.mxu0 0.0
  %323 = vmatprep.subr.mxu0 0.0
  %324 = vmatpush1.msra.mxu0 0.0
  %325 = vmatprep.subr.mxu0 0.0
  %326 = vmatpush1.msra.mxu0 0.0
  %327 = vmatprep.subr.mxu0 0.0
  %328 = vmatpush1.msra.mxu0 0.0
  %329 = vmatprep.subr.mxu0 0.0
  %330 = vmatpush1.msra.mxu0 0.0
  %331 = vmatprep.subr.mxu0 0.0
  %332 = vmatpush1.msra.mxu0 0.0
  %333 = vmatprep.subr.mxu0 0.0
  %334 = vmatpush1.msra.mxu0 0.0
  %335 = vmatprep.subr.mxu0 0.0
  %336 = vmatpush1.msra.mxu0 0.0
  %337 = vmatprep.subr.mxu0 0.0
  %338 = vmatpush1.msra.mxu0 0.0
  %339 = vmatprep.subr.mxu0 0.0
  %340 = vmatpush1.msra.mxu0 0.0
  %341 = vmatprep.subr.mxu0 0.0
  %342 = vmatpush1.msra.mxu0 0.0
  %343 = vmatprep.subr.mxu0 0.0
  %344 = vmatpush1.msra.mxu0 0.0
  %345 = vmatprep.subr.mxu0 0.0
  %346 = vmatpush1.msra.mxu0 0.0
  %347 = vmatprep.subr.mxu0 0.0
  %348 = vmatpush1.msra.mxu0 0.0
  %349 = vmatprep.mubr.f32.mxu0 0.0
  %350 = vmatmul.mubr.f32.gmra.mrb[0].mxu0 %v274
  %v351 = vpop.f32.mrb[0].mxu0
  %v352 = vadd.f32 0.0, %v351
  %v353 = vpop.f32.mrb[0].mxu0
  %354 = vmatprep.mubr.f32.mxu0 0.0
  %355 = vmatmul.mubr.f32.gmra.mrb[0].mxu0 %v277
  %v356 = vpop.f32.mrb[0].mxu0
  %v357 = vadd.f32 0.0, %v356
  %v358 = vpop.f32.mrb[0].mxu0
  %359 = vmatprep.mubr.f32.mxu0 0.0
  %360 = vmatmul.mubr.f32.gmra.mrb[0].mxu0 %v280
  %v361 = vpop.f32.mrb[0].mxu0
  %v362 = vadd.f32 0.0, %v361
  %v363 = vpop.f32.mrb[0].mxu0
  %364 = vmatprep.mubr.f32.mxu0 0.0
  %365 = vmatmul.mubr.f32.gmra.mrb[0].mxu0 %v283
  %v366 = vpop.f32.mrb[0].mxu0
  %v367 = vadd.f32 0.0, %v366
  %v368 = vpop.f32.mrb[0].mxu0
  %369 = vdwg.mxu0
  %v371 = vsel %vm272, %v136, 0
  %v374 = vsel %vm272, %v141, 0
  %v377 = vsel %vm272, %v146, 0
  %v380 = vsel %vm272, %v151, 0
  %382 = vmatprep.subr.mxu0 0.0
  %383 = vmatpush1.msra.mxu0 %v154
  %384 = vmatprep.subr.mxu0 0.0
  %385 = vmatpush1.msra.mxu0 %v155
  %386 = vmatprep.subr.mxu0 0.0
  %387 = vmatpush1.msra.mxu0 %v156
  %388 = vmatprep.subr.mxu0 0.0
  %389 = vmatpush1.msra.mxu0 %v157
  %390 = vmatprep.subr.mxu0 0.0
  %391 = vmatpush1.msra.mxu0 %v158
  %392 = vmatprep.subr.mxu0 0.0
  %393 = vmatpush1.msra.mxu0 %v159
  %394 = vmatprep.subr.mxu0 0.0
  %395 = vmatpush1.msra.mxu0 %v160
  %396 = vmatprep.subr.mxu0 0.0
  %397 = vmatpush1.msra.mxu0 %v161
  %398 = vmatprep.subr.mxu0 0.0
  %399 = vmatpush1.msra.mxu0 0.0
  %400 = vmatprep.subr.mxu0 0.0
  %401 = vmatpush1.msra.mxu0 0.0
  %402 = vmatprep.subr.mxu0 0.0
  %403 = vmatpush1.msra.mxu0 0.0
  %404 = vmatprep.subr.mxu0 0.0
  %405 = vmatpush1.msra.mxu0 0.0
  %406 = vmatprep.subr.mxu0 0.0
  %407 = vmatpush1.msra.mxu0 0.0
  %408 = vmatprep.subr.mxu0 0.0
  %409 = vmatpush1.msra.mxu0 0.0
  %410 = vmatprep.subr.mxu0 0.0
  %411 = vmatpush1.msra.mxu0 0.0
  %412 = vmatprep.subr.mxu0 0.0
  %413 = vmatpush1.msra.mxu0 0.0
  %414 = vmatprep.subr.mxu0 0.0
  %415 = vmatpush1.msra.mxu0 0.0
  %416 = vmatprep.subr.mxu0 0.0
  %417 = vmatpush1.msra.mxu0 0.0
  %418 = vmatprep.subr.mxu0 0.0
  %419 = vmatpush1.msra.mxu0 0.0
  %420 = vmatprep.subr.mxu0 0.0
  %421 = vmatpush1.msra.mxu0 0.0
  %422 = vmatprep.subr.mxu0 0.0
  %423 = vmatpush1.msra.mxu0 0.0
  %424 = vmatprep.subr.mxu0 0.0
  %425 = vmatpush1.msra.mxu0 0.0
  %426 = vmatprep.subr.mxu0 0.0
  %427 = vmatpush1.msra.mxu0 0.0
  %428 = vmatprep.subr.mxu0 0.0
  %429 = vmatpush1.msra.mxu0 0.0
  %430 = vmatprep.subr.mxu0 0.0
  %431 = vmatpush1.msra.mxu0 0.0
  %432 = vmatprep.subr.mxu0 0.0
  %433 = vmatpush1.msra.mxu0 0.0
  %434 = vmatprep.subr.mxu0 0.0
  %435 = vmatpush1.msra.mxu0 0.0
  %436 = vmatprep.subr.mxu0 0.0
  %437 = vmatpush1.msra.mxu0 0.0
  %438 = vmatprep.subr.mxu0 0.0
  %439 = vmatpush1.msra.mxu0 0.0
  %440 = vmatprep.subr.mxu0 0.0
  %441 = vmatpush1.msra.mxu0 0.0
  %442 = vmatprep.subr.mxu0 0.0
  %443 = vmatpush1.msra.mxu0 0.0
  %444 = vmatprep.subr.mxu0 0.0
  %445 = vmatpush1.msra.mxu0 0.0
  %446 = vmatprep.mubr.f32.mxu0 0.0
  %447 = vmatmul.mubr.f32.gmra.mrb[0].mxu0 %v371
  %v448 = vpop.f32.mrb[0].mxu0
  %v449 = vadd.f32 %v352, %v448
  %v450 = vpop.f32.mrb[0].mxu0
  %451 = vmatprep.mubr.f32.mxu0 0.0
  %452 = vmatmul.mubr.f32.gmra.mrb[0].mxu0 %v374
  %v453 = vpop.f32.mrb[0].mxu0
  %v454 = vadd.f32 %v357, %v453
  %v455 = vpop.f32.mrb[0].mxu0
  %456 = vmatprep.mubr.f32.mxu0 0.0
  %457 = vmatmul.mubr.f32.gmra.mrb[0].mxu0 %v377
  %v458 = vpop.f32.mrb[0].mxu0
  %v459 = vadd.f32 %v362, %v458
  %v460 = vpop.f32.mrb[0].mxu0
  %461 = vmatprep.mubr.f32.mxu0 0.0
  %462 = vmatmul.mubr.f32.gmra.mrb[0].mxu0 %v380
  %v463 = vpop.f32.mrb[0].mxu0
  %v464 = vadd.f32 %v367, %v463
  %v465 = vpop.f32.mrb[0].mxu0
  %466 = vdwg.mxu0
  %s467 = scalar_lea.vmem %s3, 64
  %v468 = vld [vmem:[%s467] sm:$0xff]
  %v469 = vld [vmem:[%s467 + $0x8] sm:$0xff]
  %v470 = vld [vmem:[%s467 + $0x10] sm:$0xff]
  %v471 = vld [vmem:[%s467 + $0x18] sm:$0xff]
  %v473 = vsel %vm56, %v468, 0
  %v476 = vsel %vm56, %v469, 0
  %v479 = vsel %vm56, %v470, 0
  %v482 = vsel %vm56, %v471, 0
  %484 = vmatprep.subr.mxu0 0.0
  %485 = vmatpush1.msra.mxu0 %v47
  %486 = vmatprep.subr.mxu0 0.0
  %487 = vmatpush1.msra.mxu0 %v48
  %488 = vmatprep.subr.mxu0 0.0
  %489 = vmatpush1.msra.mxu0 %v49
  %490 = vmatprep.subr.mxu0 0.0
  %491 = vmatpush1.msra.mxu0 %v50
  %492 = vmatprep.subr.mxu0 0.0
  %493 = vmatpush1.msra.mxu0 %v51
  %494 = vmatprep.subr.mxu0 0.0
  %495 = vmatpush1.msra.mxu0 0.0
  %496 = vmatprep.subr.mxu0 0.0
  %497 = vmatpush1.msra.mxu0 0.0
  %498 = vmatprep.subr.mxu0 0.0
  %499 = vmatpush1.msra.mxu0 0.0
  %500 = vmatprep.subr.mxu0 0.0
  %501 = vmatpush1.msra.mxu0 0.0
  %502 = vmatprep.subr.mxu0 0.0
  %503 = vmatpush1.msra.mxu0 0.0
  %504 = vmatprep.subr.mxu0 0.0
  %505 = vmatpush1.msra.mxu0 0.0
  %506 = vmatprep.subr.mxu0 0.0
  %507 = vmatpush1.msra.mxu0 0.0
  %508 = vmatprep.subr.mxu0 0.0
  %509 = vmatpush1.msra.mxu0 0.0
  %510 = vmatprep.subr.mxu0 0.0
  %511 = vmatpush1.msra.mxu0 0.0
  %512 = vmatprep.subr.mxu0 0.0
  %513 = vmatpush1.msra.mxu0 0.0
  %514 = vmatprep.subr.mxu0 0.0
  %515 = vmatpush1.msra.mxu0 0.0
  %516 = vmatprep.subr.mxu0 0.0
  %517 = vmatpush1.msra.mxu0 0.0
  %518 = vmatprep.subr.mxu0 0.0
  %519 = vmatpush1.msra.mxu0 0.0
  %520 = vmatprep.subr.mxu0 0.0
  %521 = vmatpush1.msra.mxu0 0.0
  %522 = vmatprep.subr.mxu0 0.0
  %523 = vmatpush1.msra.mxu0 0.0
  %524 = vmatprep.subr.mxu0 0.0
  %525 = vmatpush1.msra.mxu0 0.0
  %526 = vmatprep.subr.mxu0 0.0
  %527 = vmatpush1.msra.mxu0 0.0
  %528 = vmatprep.subr.mxu0 0.0
  %529 = vmatpush1.msra.mxu0 0.0
  %530 = vmatprep.subr.mxu0 0.0
  %531 = vmatpush1.msra.mxu0 0.0
  %532 = vmatprep.subr.mxu0 0.0
  %533 = vmatpush1.msra.mxu0 0.0
  %534 = vmatprep.subr.mxu0 0.0
  %535 = vmatpush1.msra.mxu0 0.0
  %536 = vmatprep.subr.mxu0 0.0
  %537 = vmatpush1.msra.mxu0 0.0
  %538 = vmatprep.subr.mxu0 0.0
  %539 = vmatpush1.msra.mxu0 0.0
  %540 = vmatprep.subr.mxu0 0.0
  %541 = vmatpush1.msra.mxu0 0.0
  %542 = vmatprep.subr.mxu0 0.0
  %543 = vmatpush1.msra.mxu0 0.0
  %544 = vmatprep.subr.mxu0 0.0
  %545 = vmatpush1.msra.mxu0 0.0
  %546 = vmatprep.subr.mxu0 0.0
  %547 = vmatpush1.msra.mxu0 0.0
  %548 = vmatprep.mubr.f32.mxu0 0.0
  %549 = vmatmul.mubr.f32.gmra.mrb[0].mxu0 %v473
  %v550 = vpop.f32.mrb[0].mxu0
  %v551 = vadd.f32 0.0, %v550
  %v552 = vpop.f32.mrb[0].mxu0
  %553 = vmatprep.mubr.f32.mxu0 0.0
  %554 = vmatmul.mubr.f32.gmra.mrb[0].mxu0 %v476
  %v555 = vpop.f32.mrb[0].mxu0
  %v556 = vadd.f32 0.0, %v555
  %v557 = vpop.f32.mrb[0].mxu0
  %558 = vmatprep.mubr.f32.mxu0 0.0
  %559 = vmatmul.mubr.f32.gmra.mrb[0].mxu0 %v479
  %v560 = vpop.f32.mrb[0].mxu0
  %v561 = vadd.f32 0.0, %v560
  %v562 = vpop.f32.mrb[0].mxu0
  %563 = vmatprep.mubr.f32.mxu0 0.0
  %564 = vmatmul.mubr.f32.gmra.mrb[0].mxu0 %v482
  %v565 = vpop.f32.mrb[0].mxu0
  %v566 = vadd.f32 0.0, %v565
  %v567 = vpop.f32.mrb[0].mxu0
  %568 = vdwg.mxu0
  %v569 = vld [vmem:[%s1 + $0x80] sm:$0xff]
  %v570 = vld [vmem:[%s1 + $0x88] sm:$0xff]
  %v571 = vld [vmem:[%s1 + $0x90] sm:$0xff]
  %v572 = vld [vmem:[%s1 + $0x98] sm:$0xff]
  %v573 = vld [vmem:[%s1 + $0xa0] sm:$0xff]
  %v574 = vld [vmem:[%s1 + $0xa8] sm:$0xff]
  %v575 = vld [vmem:[%s1 + $0xb0] sm:$0xff]
  %v576 = vld [vmem:[%s1 + $0xb8] sm:$0xff]
  %v578 = vsel %vm272, %v551, 0
  %v581 = vsel %vm272, %v556, 0
  %v584 = vsel %vm272, %v561, 0
  %v587 = vsel %vm272, %v566, 0
  %589 = vmatprep.subr.mxu0 0.0
  %590 = vmatpush1.msra.mxu0 %v569
  %591 = vmatprep.subr.mxu0 0.0
  %592 = vmatpush1.msra.mxu0 %v570
  %593 = vmatprep.subr.mxu0 0.0
  %594 = vmatpush1.msra.mxu0 %v571
  %595 = vmatprep.subr.mxu0 0.0
  %596 = vmatpush1.msra.mxu0 %v572
  %597 = vmatprep.subr.mxu0 0.0
  %598 = vmatpush1.msra.mxu0 %v573
  %599 = vmatprep.subr.mxu0 0.0
  %600 = vmatpush1.msra.mxu0 %v574
  %601 = vmatprep.subr.mxu0 0.0
  %602 = vmatpush1.msra.mxu0 %v575
  %603 = vmatprep.subr.mxu0 0.0
  %604 = vmatpush1.msra.mxu0 %v576
  %605 = vmatprep.subr.mxu0 0.0
  %606 = vmatpush1.msra.mxu0 0.0
  %607 = vmatprep.subr.mxu0 0.0
  %608 = vmatpush1.msra.mxu0 0.0
  %609 = vmatprep.subr.mxu0 0.0
  %610 = vmatpush1.msra.mxu0 0.0
  %611 = vmatprep.subr.mxu0 0.0
  %612 = vmatpush1.msra.mxu0 0.0
  %613 = vmatprep.subr.mxu0 0.0
  %614 = vmatpush1.msra.mxu0 0.0
  %615 = vmatprep.subr.mxu0 0.0
  %616 = vmatpush1.msra.mxu0 0.0
  %617 = vmatprep.subr.mxu0 0.0
  %618 = vmatpush1.msra.mxu0 0.0
  %619 = vmatprep.subr.mxu0 0.0
  %620 = vmatpush1.msra.mxu0 0.0
  %621 = vmatprep.subr.mxu0 0.0
  %622 = vmatpush1.msra.mxu0 0.0
  %623 = vmatprep.subr.mxu0 0.0
  %624 = vmatpush1.msra.mxu0 0.0
  %625 = vmatprep.subr.mxu0 0.0
  %626 = vmatpush1.msra.mxu0 0.0
  %627 = vmatprep.subr.mxu0 0.0
  %628 = vmatpush1.msra.mxu0 0.0
  %629 = vmatprep.subr.mxu0 0.0
  %630 = vmatpush1.msra.mxu0 0.0
  %631 = vmatprep.subr.mxu0 0.0
  %632 = vmatpush1.msra.mxu0 0.0
  %633 = vmatprep.subr.mxu0 0.0
  %634 = vmatpush1.msra.mxu0 0.0
  %635 = vmatprep.subr.mxu0 0.0
  %636 = vmatpush1.msra.mxu0 0.0
  %637 = vmatprep.subr.mxu0 0.0
  %638 = vmatpush1.msra.mxu0 0.0
  %639 = vmatprep.subr.mxu0 0.0
  %640 = vmatpush1.msra.mxu0 0.0
  %641 = vmatprep.subr.mxu0 0.0
  %642 = vmatpush1.msra.mxu0 0.0
  %643 = vmatprep.subr.mxu0 0.0
  %644 = vmatpush1.msra.mxu0 0.0
  %645 = vmatprep.subr.mxu0 0.0
  %646 = vmatpush1.msra.mxu0 0.0
  %647 = vmatprep.subr.mxu0 0.0
  %648 = vmatpush1.msra.mxu0 0.0
  %649 = vmatprep.subr.mxu0 0.0
  %650 = vmatpush1.msra.mxu0 0.0
  %651 = vmatprep.subr.mxu0 0.0
  %652 = vmatpush1.msra.mxu0 0.0
  %653 = vmatprep.mubr.f32.mxu0 0.0
  %654 = vmatmul.mubr.f32.gmra.mrb[0].mxu0 %v578
  %v655 = vpop.f32.mrb[0].mxu0
  %v656 = vadd.f32 0.0, %v655
  %v657 = vpop.f32.mrb[0].mxu0
  %658 = vmatprep.mubr.f32.mxu0 0.0
  %659 = vmatmul.mubr.f32.gmra.mrb[0].mxu0 %v581
  %v660 = vpop.f32.mrb[0].mxu0
  %v661 = vadd.f32 0.0, %v660
  %v662 = vpop.f32.mrb[0].mxu0
  %663 = vmatprep.mubr.f32.mxu0 0.0
  %664 = vmatmul.mubr.f32.gmra.mrb[0].mxu0 %v584
  %v665 = vpop.f32.mrb[0].mxu0
  %v666 = vadd.f32 0.0, %v665
  %v667 = vpop.f32.mrb[0].mxu0
  %668 = vmatprep.mubr.f32.mxu0 0.0
  %669 = vmatmul.mubr.f32.gmra.mrb[0].mxu0 %v587
  %v670 = vpop.f32.mrb[0].mxu0
  %v671 = vadd.f32 0.0, %v670
  %v672 = vpop.f32.mrb[0].mxu0
  %673 = vdwg.mxu0
  %v674 = vadd.f32 %v449, %v656
  %v675 = vadd.f32 %v454, %v661
  %v676 = vadd.f32 %v459, %v666
  %v677 = vadd.f32 %v464, %v671
  %s678 = scalar_lea.vmem %s3, 96
  %v679 = vld [vmem:[%s678] sm:$0xff]
  %v680 = vld [vmem:[%s678 + $0x8] sm:$0xff]
  %v681 = vld [vmem:[%s678 + $0x10] sm:$0xff]
  %v682 = vld [vmem:[%s678 + $0x18] sm:$0xff]
  %v684 = vsel %vm56, %v679, 0
  %v687 = vsel %vm56, %v680, 0
  %v690 = vsel %vm56, %v681, 0
  %v693 = vsel %vm56, %v682, 0
  %695 = vmatprep.subr.mxu0 0.0
  %696 = vmatpush1.msra.mxu0 %v47
  %697 = vmatprep.subr.mxu0 0.0
  %698 = vmatpush1.msra.mxu0 %v48
  %699 = vmatprep.subr.mxu0 0.0
  %700 = vmatpush1.msra.mxu0 %v49
  %701 = vmatprep.subr.mxu0 0.0
  %702 = vmatpush1.msra.mxu0 %v50
  %703 = vmatprep.subr.mxu0 0.0
  %704 = vmatpush1.msra.mxu0 %v51
  %705 = vmatprep.subr.mxu0 0.0
  %706 = vmatpush1.msra.mxu0 0.0
  %707 = vmatprep.subr.mxu0 0.0
  %708 = vmatpush1.msra.mxu0 0.0
  %709 = vmatprep.subr.mxu0 0.0
  %710 = vmatpush1.msra.mxu0 0.0
  %711 = vmatprep.subr.mxu0 0.0
  %712 = vmatpush1.msra.mxu0 0.0
  %713 = vmatprep.subr.mxu0 0.0
  %714 = vmatpush1.msra.mxu0 0.0
  %715 = vmatprep.subr.mxu0 0.0
  %716 = vmatpush1.msra.mxu0 0.0
  %717 = vmatprep.subr.mxu0 0.0
  %718 = vmatpush1.msra.mxu0 0.0
  %719 = vmatprep.subr.mxu0 0.0
  %720 = vmatpush1.msra.mxu0 0.0
  %721 = vmatprep.subr.mxu0 0.0
  %722 = vmatpush1.msra.mxu0 0.0
  %723 = vmatprep.subr.mxu0 0.0
  %724 = vmatpush1.msra.mxu0 0.0
  %725 = vmatprep.subr.mxu0 0.0
  %726 = vmatpush1.msra.mxu0 0.0
  %727 = vmatprep.subr.mxu0 0.0
  %728 = vmatpush1.msra.mxu0 0.0
  %729 = vmatprep.subr.mxu0 0.0
  %730 = vmatpush1.msra.mxu0 0.0
  %731 = vmatprep.subr.mxu0 0.0
  %732 = vmatpush1.msra.mxu0 0.0
  %733 = vmatprep.subr.mxu0 0.0
  %734 = vmatpush1.msra.mxu0 0.0
  %735 = vmatprep.subr.mxu0 0.0
  %736 = vmatpush1.msra.mxu0 0.0
  %737 = vmatprep.subr.mxu0 0.0
  %738 = vmatpush1.msra.mxu0 0.0
  %739 = vmatprep.subr.mxu0 0.0
  %740 = vmatpush1.msra.mxu0 0.0
  %741 = vmatprep.subr.mxu0 0.0
  %742 = vmatpush1.msra.mxu0 0.0
  %743 = vmatprep.subr.mxu0 0.0
  %744 = vmatpush1.msra.mxu0 0.0
  %745 = vmatprep.subr.mxu0 0.0
  %746 = vmatpush1.msra.mxu0 0.0
  %747 = vmatprep.subr.mxu0 0.0
  %748 = vmatpush1.msra.mxu0 0.0
  %749 = vmatprep.subr.mxu0 0.0
  %750 = vmatpush1.msra.mxu0 0.0
  %751 = vmatprep.subr.mxu0 0.0
  %752 = vmatpush1.msra.mxu0 0.0
  %753 = vmatprep.subr.mxu0 0.0
  %754 = vmatpush1.msra.mxu0 0.0
  %755 = vmatprep.subr.mxu0 0.0
  %756 = vmatpush1.msra.mxu0 0.0
  %757 = vmatprep.subr.mxu0 0.0
  %758 = vmatpush1.msra.mxu0 0.0
  %759 = vmatprep.mubr.f32.mxu0 0.0
  %760 = vmatmul.mubr.f32.gmra.mrb[0].mxu0 %v684
  %v761 = vpop.f32.mrb[0].mxu0
  %v762 = vadd.f32 0.0, %v761
  %v763 = vpop.f32.mrb[0].mxu0
  %764 = vmatprep.mubr.f32.mxu0 0.0
  %765 = vmatmul.mubr.f32.gmra.mrb[0].mxu0 %v687
  %v766 = vpop.f32.mrb[0].mxu0
  %v767 = vadd.f32 0.0, %v766
  %v768 = vpop.f32.mrb[0].mxu0
  %769 = vmatprep.mubr.f32.mxu0 0.0
  %770 = vmatmul.mubr.f32.gmra.mrb[0].mxu0 %v690
  %v771 = vpop.f32.mrb[0].mxu0
  %v772 = vadd.f32 0.0, %v771
  %v773 = vpop.f32.mrb[0].mxu0
  %774 = vmatprep.mubr.f32.mxu0 0.0
  %775 = vmatmul.mubr.f32.gmra.mrb[0].mxu0 %v693
  %v776 = vpop.f32.mrb[0].mxu0
  %v777 = vadd.f32 0.0, %v776
  %v778 = vpop.f32.mrb[0].mxu0
  %779 = vdwg.mxu0
  %v780 = vld [vmem:[%s1 + $0xc0] sm:$0xff]
  %v781 = vld [vmem:[%s1 + $0xc8] sm:$0xff]
  %v782 = vld [vmem:[%s1 + $0xd0] sm:$0xff]
  %v783 = vld [vmem:[%s1 + $0xd8] sm:$0xff]
  %v784 = vld [vmem:[%s1 + $0xe0] sm:$0xff]
  %v785 = vld [vmem:[%s1 + $0xe8] sm:$0xff]
  %v786 = vld [vmem:[%s1 + $0xf0] sm:$0xff]
  %v787 = vld [vmem:[%s1 + $0xf8] sm:$0xff]
  %v789 = vsel %vm272, %v762, 0
  %v792 = vsel %vm272, %v767, 0
  %v795 = vsel %vm272, %v772, 0
  %v798 = vsel %vm272, %v777, 0
  %800 = vmatprep.subr.mxu0 0.0
  %801 = vmatpush1.msra.mxu0 %v780
  %802 = vmatprep.subr.mxu0 0.0
  %803 = vmatpush1.msra.mxu0 %v781
  %804 = vmatprep.subr.mxu0 0.0
  %805 = vmatpush1.msra.mxu0 %v782
  %806 = vmatprep.subr.mxu0 0.0
  %807 = vmatpush1.msra.mxu0 %v783
  %808 = vmatprep.subr.mxu0 0.0
  %809 = vmatpush1.msra.mxu0 %v784
  %810 = vmatprep.subr.mxu0 0.0
  %811 = vmatpush1.msra.mxu0 %v785
  %812 = vmatprep.subr.mxu0 0.0
  %813 = vmatpush1.msra.mxu0 %v786
  %814 = vmatprep.subr.mxu0 0.0
  %815 = vmatpush1.msra.mxu0 %v787
  %816 = vmatprep.subr.mxu0 0.0
  %817 = vmatpush1.msra.mxu0 0.0
  %818 = vmatprep.subr.mxu0 0.0
  %819 = vmatpush1.msra.mxu0 0.0
  %820 = vmatprep.subr.mxu0 0.0
  %821 = vmatpush1.msra.mxu0 0.0
  %822 = vmatprep.subr.mxu0 0.0
  %823 = vmatpush1.msra.mxu0 0.0
  %824 = vmatprep.subr.mxu0 0.0
  %825 = vmatpush1.msra.mxu0 0.0
  %826 = vmatprep.subr.mxu0 0.0
  %827 = vmatpush1.msra.mxu0 0.0
  %828 = vmatprep.subr.mxu0 0.0
  %829 = vmatpush1.msra.mxu0 0.0
  %830 = vmatprep.subr.mxu0 0.0
  %831 = vmatpush1.msra.mxu0 0.0
  %832 = vmatprep.subr.mxu0 0.0
  %833 = vmatpush1.msra.mxu0 0.0
  %834 = vmatprep.subr.mxu0 0.0
  %835 = vmatpush1.msra.mxu0 0.0
  %836 = vmatprep.subr.mxu0 0.0
  %837 = vmatpush1.msra.mxu0 0.0
  %838 = vmatprep.subr.mxu0 0.0
  %839 = vmatpush1.msra.mxu0 0.0
  %840 = vmatprep.subr.mxu0 0.0
  %841 = vmatpush1.msra.mxu0 0.0
  %842 = vmatprep.subr.mxu0 0.0
  %843 = vmatpush1.msra.mxu0 0.0
  %844 = vmatprep.subr.mxu0 0.0
  %845 = vmatpush1.msra.mxu0 0.0
  %846 = vmatprep.subr.mxu0 0.0
  %847 = vmatpush1.msra.mxu0 0.0
  %848 = vmatprep.subr.mxu0 0.0
  %849 = vmatpush1.msra.mxu0 0.0
  %850 = vmatprep.subr.mxu0 0.0
  %851 = vmatpush1.msra.mxu0 0.0
  %852 = vmatprep.subr.mxu0 0.0
  %853 = vmatpush1.msra.mxu0 0.0
  %854 = vmatprep.subr.mxu0 0.0
  %855 = vmatpush1.msra.mxu0 0.0
  %856 = vmatprep.subr.mxu0 0.0
  %857 = vmatpush1.msra.mxu0 0.0
  %858 = vmatprep.subr.mxu0 0.0
  %859 = vmatpush1.msra.mxu0 0.0
  %860 = vmatprep.subr.mxu0 0.0
  %861 = vmatpush1.msra.mxu0 0.0
  %862 = vmatprep.subr.mxu0 0.0
  %863 = vmatpush1.msra.mxu0 0.0
  %864 = vmatprep.mubr.f32.mxu0 0.0
  %865 = vmatmul.mubr.f32.gmra.mrb[0].mxu0 %v789
  %v866 = vpop.f32.mrb[0].mxu0
  %v867 = vadd.f32 0.0, %v866
  %v868 = vpop.f32.mrb[0].mxu0
  %869 = vmatprep.mubr.f32.mxu0 0.0
  %870 = vmatmul.mubr.f32.gmra.mrb[0].mxu0 %v792
  %v871 = vpop.f32.mrb[0].mxu0
  %v872 = vadd.f32 0.0, %v871
  %v873 = vpop.f32.mrb[0].mxu0
  %874 = vmatprep.mubr.f32.mxu0 0.0
  %875 = vmatmul.mubr.f32.gmra.mrb[0].mxu0 %v795
  %v876 = vpop.f32.mrb[0].mxu0
  %v877 = vadd.f32 0.0, %v876
  %v878 = vpop.f32.mrb[0].mxu0
  %879 = vmatprep.mubr.f32.mxu0 0.0
  %880 = vmatmul.mubr.f32.gmra.mrb[0].mxu0 %v798
  %v881 = vpop.f32.mrb[0].mxu0
  %v882 = vadd.f32 0.0, %v881
  %v883 = vpop.f32.mrb[0].mxu0
  %884 = vdwg.mxu0
  %v885 = vadd.f32 %v674, %v867
  %v886 = vadd.f32 %v675, %v872
  %v887 = vadd.f32 %v676, %v877
  %v888 = vadd.f32 %v677, %v882
  %s889 = scalar_lea.vmem %s3, 128
  %v890 = vld [vmem:[%s889] sm:$0xff]
  %v891 = vld [vmem:[%s889 + $0x8] sm:$0xff]
  %v892 = vld [vmem:[%s889 + $0x10] sm:$0xff]
  %v893 = vld [vmem:[%s889 + $0x18] sm:$0xff]
  %v895 = vsel %vm56, %v890, 0
  %v898 = vsel %vm56, %v891, 0
  %v901 = vsel %vm56, %v892, 0
  %v904 = vsel %vm56, %v893, 0
  %906 = vmatprep.subr.mxu0 0.0
  %907 = vmatpush1.msra.mxu0 %v47
  %908 = vmatprep.subr.mxu0 0.0
  %909 = vmatpush1.msra.mxu0 %v48
  %910 = vmatprep.subr.mxu0 0.0
  %911 = vmatpush1.msra.mxu0 %v49
  %912 = vmatprep.subr.mxu0 0.0
  %913 = vmatpush1.msra.mxu0 %v50
  %914 = vmatprep.subr.mxu0 0.0
  %915 = vmatpush1.msra.mxu0 %v51
  %916 = vmatprep.subr.mxu0 0.0
  %917 = vmatpush1.msra.mxu0 0.0
  %918 = vmatprep.subr.mxu0 0.0
  %919 = vmatpush1.msra.mxu0 0.0
  %920 = vmatprep.subr.mxu0 0.0
  %921 = vmatpush1.msra.mxu0 0.0
  %922 = vmatprep.subr.mxu0 0.0
  %923 = vmatpush1.msra.mxu0 0.0
  %924 = vmatprep.subr.mxu0 0.0
  %925 = vmatpush1.msra.mxu0 0.0
  %926 = vmatprep.subr.mxu0 0.0
  %927 = vmatpush1.msra.mxu0 0.0
  %928 = vmatprep.subr.mxu0 0.0
  %929 = vmatpush1.msra.mxu0 0.0
  %930 = vmatprep.subr.mxu0 0.0
  %931 = vmatpush1.msra.mxu0 0.0
  %932 = vmatprep.subr.mxu0 0.0
  %933 = vmatpush1.msra.mxu0 0.0
  %934 = vmatprep.subr.mxu0 0.0
  %935 = vmatpush1.msra.mxu0 0.0
  %936 = vmatprep.subr.mxu0 0.0
  %937 = vmatpush1.msra.mxu0 0.0
  %938 = vmatprep.subr.mxu0 0.0
  %939 = vmatpush1.msra.mxu0 0.0
  %940 = vmatprep.subr.mxu0 0.0
  %941 = vmatpush1.msra.mxu0 0.0
  %942 = vmatprep.subr.mxu0 0.0
  %943 = vmatpush1.msra.mxu0 0.0
  %944 = vmatprep.subr.mxu0 0.0
  %945 = vmatpush1.msra.mxu0 0.0
  %946 = vmatprep.subr.mxu0 0.0
  %947 = vmatpush1.msra.mxu0 0.0
  %948 = vmatprep.subr.mxu0 0.0
  %949 = vmatpush1.msra.mxu0 0.0
  %950 = vmatprep.subr.mxu0 0.0
  %951 = vmatpush1.msra.mxu0 0.0
  %952 = vmatprep.subr.mxu0 0.0
  %953 = vmatpush1.msra.mxu0 0.0
  %954 = vmatprep.subr.mxu0 0.0
  %955 = vmatpush1.msra.mxu0 0.0
  %956 = vmatprep.subr.mxu0 0.0
  %957 = vmatpush1.msra.mxu0 0.0
  %958 = vmatprep.subr.mxu0 0.0
  %959 = vmatpush1.msra.mxu0 0.0
  %960 = vmatprep.subr.mxu0 0.0
  %961 = vmatpush1.msra.mxu0 0.0
  %962 = vmatprep.subr.mxu0 0.0
  %963 = vmatpush1.msra.mxu0 0.0
  %964 = vmatprep.subr.mxu0 0.0
  %965 = vmatpush1.msra.mxu0 0.0
  %966 = vmatprep.subr.mxu0 0.0
  %967 = vmatpush1.msra.mxu0 0.0
  %968 = vmatprep.subr.mxu0 0.0
  %969 = vmatpush1.msra.mxu0 0.0
  %970 = vmatprep.mubr.f32.mxu0 0.0
  %971 = vmatmul.mubr.f32.gmra.mrb[0].mxu0 %v895
  %v972 = vpop.f32.mrb[0].mxu0
  %v973 = vadd.f32 0.0, %v972
  %v974 = vpop.f32.mrb[0].mxu0
  %975 = vmatprep.mubr.f32.mxu0 0.0
  %976 = vmatmul.mubr.f32.gmra.mrb[0].mxu0 %v898
  %v977 = vpop.f32.mrb[0].mxu0
  %v978 = vadd.f32 0.0, %v977
  %v979 = vpop.f32.mrb[0].mxu0
  %980 = vmatprep.mubr.f32.mxu0 0.0
  %981 = vmatmul.mubr.f32.gmra.mrb[0].mxu0 %v901
  %v982 = vpop.f32.mrb[0].mxu0
  %v983 = vadd.f32 0.0, %v982
  %v984 = vpop.f32.mrb[0].mxu0
  %985 = vmatprep.mubr.f32.mxu0 0.0
  %986 = vmatmul.mubr.f32.gmra.mrb[0].mxu0 %v904
  %v987 = vpop.f32.mrb[0].mxu0
  %v988 = vadd.f32 0.0, %v987
  %v989 = vpop.f32.mrb[0].mxu0
  %990 = vdwg.mxu0
  %v991 = vld [vmem:[%s1 + $0x100] sm:$0xff]
  %v992 = vld [vmem:[%s1 + $0x108] sm:$0xff]
  %v993 = vld [vmem:[%s1 + $0x110] sm:$0xff]
  %v994 = vld [vmem:[%s1 + $0x118] sm:$0xff]
  %v995 = vld [vmem:[%s1 + $0x120] sm:$0xff]
  %v996 = vld [vmem:[%s1 + $0x128] sm:$0xff]
  %v997 = vld [vmem:[%s1 + $0x130] sm:$0xff]
  %v998 = vld [vmem:[%s1 + $0x138] sm:$0xff]
  %v1000 = vsel %vm272, %v973, 0
  %v1003 = vsel %vm272, %v978, 0
  %v1006 = vsel %vm272, %v983, 0
  %v1009 = vsel %vm272, %v988, 0
  %1011 = vmatprep.subr.mxu0 0.0
  %1012 = vmatpush1.msra.mxu0 %v991
  %1013 = vmatprep.subr.mxu0 0.0
  %1014 = vmatpush1.msra.mxu0 %v992
  %1015 = vmatprep.subr.mxu0 0.0
  %1016 = vmatpush1.msra.mxu0 %v993
  %1017 = vmatprep.subr.mxu0 0.0
  %1018 = vmatpush1.msra.mxu0 %v994
  %1019 = vmatprep.subr.mxu0 0.0
  %1020 = vmatpush1.msra.mxu0 %v995
  %1021 = vmatprep.subr.mxu0 0.0
  %1022 = vmatpush1.msra.mxu0 %v996
  %1023 = vmatprep.subr.mxu0 0.0
  %1024 = vmatpush1.msra.mxu0 %v997
  %1025 = vmatprep.subr.mxu0 0.0
  %1026 = vmatpush1.msra.mxu0 %v998
  %1027 = vmatprep.subr.mxu0 0.0
  %1028 = vmatpush1.msra.mxu0 0.0
  %1029 = vmatprep.subr.mxu0 0.0
  %1030 = vmatpush1.msra.mxu0 0.0
  %1031 = vmatprep.subr.mxu0 0.0
  %1032 = vmatpush1.msra.mxu0 0.0
  %1033 = vmatprep.subr.mxu0 0.0
  %1034 = vmatpush1.msra.mxu0 0.0
  %1035 = vmatprep.subr.mxu0 0.0
  %1036 = vmatpush1.msra.mxu0 0.0
  %1037 = vmatprep.subr.mxu0 0.0
  %1038 = vmatpush1.msra.mxu0 0.0
  %1039 = vmatprep.subr.mxu0 0.0
  %1040 = vmatpush1.msra.mxu0 0.0
  %1041 = vmatprep.subr.mxu0 0.0
  %1042 = vmatpush1.msra.mxu0 0.0
  %1043 = vmatprep.subr.mxu0 0.0
  %1044 = vmatpush1.msra.mxu0 0.0
  %1045 = vmatprep.subr.mxu0 0.0
  %1046 = vmatpush1.msra.mxu0 0.0
  %1047 = vmatprep.subr.mxu0 0.0
  %1048 = vmatpush1.msra.mxu0 0.0
  %1049 = vmatprep.subr.mxu0 0.0
  %1050 = vmatpush1.msra.mxu0 0.0
  %1051 = vmatprep.subr.mxu0 0.0
  %1052 = vmatpush1.msra.mxu0 0.0
  %1053 = vmatprep.subr.mxu0 0.0
  %1054 = vmatpush1.msra.mxu0 0.0
  %1055 = vmatprep.subr.mxu0 0.0
  %1056 = vmatpush1.msra.mxu0 0.0
  %1057 = vmatprep.subr.mxu0 0.0
  %1058 = vmatpush1.msra.mxu0 0.0
  %1059 = vmatprep.subr.mxu0 0.0
  %1060 = vmatpush1.msra.mxu0 0.0
  %1061 = vmatprep.subr.mxu0 0.0
  %1062 = vmatpush1.msra.mxu0 0.0
  %1063 = vmatprep.subr.mxu0 0.0
  %1064 = vmatpush1.msra.mxu0 0.0
  %1065 = vmatprep.subr.mxu0 0.0
  %1066 = vmatpush1.msra.mxu0 0.0
  %1067 = vmatprep.subr.mxu0 0.0
  %1068 = vmatpush1.msra.mxu0 0.0
  %1069 = vmatprep.subr.mxu0 0.0
  %1070 = vmatpush1.msra.mxu0 0.0
  %1071 = vmatprep.subr.mxu0 0.0
  %1072 = vmatpush1.msra.mxu0 0.0
  %1073 = vmatprep.subr.mxu0 0.0
  %1074 = vmatpush1.msra.mxu0 0.0
  %1075 = vmatprep.mubr.f32.mxu0 0.0
  %1076 = vmatmul.mubr.f32.gmra.mrb[0].mxu0 %v1000
  %v1077 = vpop.f32.mrb[0].mxu0
  %v1078 = vadd.f32 0.0, %v1077
  %v1079 = vpop.f32.mrb[0].mxu0
  %1080 = vmatprep.mubr.f32.mxu0 0.0
  %1081 = vmatmul.mubr.f32.gmra.mrb[0].mxu0 %v1003
  %v1082 = vpop.f32.mrb[0].mxu0
  %v1083 = vadd.f32 0.0, %v1082
  %v1084 = vpop.f32.mrb[0].mxu0
  %1085 = vmatprep.mubr.f32.mxu0 0.0
  %1086 = vmatmul.mubr.f32.gmra.mrb[0].mxu0 %v1006
  %v1087 = vpop.f32.mrb[0].mxu0
  %v1088 = vadd.f32 0.0, %v1087
  %v1089 = vpop.f32.mrb[0].mxu0
  %1090 = vmatprep.mubr.f32.mxu0 0.0
  %1091 = vmatmul.mubr.f32.gmra.mrb[0].mxu0 %v1009
  %v1092 = vpop.f32.mrb[0].mxu0
  %v1093 = vadd.f32 0.0, %v1092
  %v1094 = vpop.f32.mrb[0].mxu0
  %1095 = vdwg.mxu0
  %v1096 = vadd.f32 %v885, %v1078
  %v1097 = vadd.f32 %v886, %v1083
  %v1098 = vadd.f32 %v887, %v1088
  %v1099 = vadd.f32 %v888, %v1093
  %v1100 = vld [vmem:[%s2] sm:$0x1]
  %v1101 = vlaneseq
  %v1102 = vshrl.u32 %v1101, 7
  %v1103 = vsub.s32 0, %v1102
  %v1104 = vrot.slane %v1100, %v1103
  %v1105 = vadd.f32 %v1096, %v1104
  %v1106 = vadd.f32 %v1097, %v1104
  %v1107 = vadd.f32 %v1098, %v1104
  %v1108 = vadd.f32 %v1099, %v1104
  %v1109 = vld [vmem:[%s2 + $0x2] sm:$0x1]
  %v1110 = vld [vmem:[%s2 + $0x3] sm:$0x1]
  %v1111 = vld [vmem:[%s10] sm:$0xff]
  %v1112 = vld [vmem:[%s10 + $0x8] sm:$0xff]
  %v1113 = vld [vmem:[%s10 + $0x10] sm:$0xff]
  %v1114 = vld [vmem:[%s10 + $0x18] sm:$0xff]
  %v1115 = vld [vmem:[%s10 + $0x20] sm:$0xff]
  %v1116 = vld [vmem:[%s10 + $0x28] sm:$0xff]
  %v1117 = vld [vmem:[%s10 + $0x30] sm:$0xff]
  %v1118 = vld [vmem:[%s10 + $0x38] sm:$0xff]
  %v1119 = vld [vmem:[%s10 + $0x40] sm:$0xff]
  %v1120 = vld [vmem:[%s10 + $0x48] sm:$0xff]
  %v1121 = vld [vmem:[%s10 + $0x50] sm:$0xff]
  %v1122 = vld [vmem:[%s10 + $0x58] sm:$0xff]
  %v1123 = vld [vmem:[%s10 + $0x60] sm:$0xff]
  %v1124 = vld [vmem:[%s10 + $0x68] sm:$0xff]
  %v1125 = vld [vmem:[%s10 + $0x70] sm:$0xff]
  %v1126 = vld [vmem:[%s10 + $0x78] sm:$0xff]
  %v1127 = vld [vmem:[%s11] sm:$0xff]
  %1128 = vmatprep.subr.mxu0 0.0
  %1129 = vmatpush1.msra.mxu0 %v1111
  %1130 = vmatprep.subr.mxu0 0.0
  %1131 = vmatpush1.msra.mxu0 %v1112
  %1132 = vmatprep.subr.mxu0 0.0
  %1133 = vmatpush1.msra.mxu0 %v1113
  %1134 = vmatprep.subr.mxu0 0.0
  %1135 = vmatpush1.msra.mxu0 %v1114
  %1136 = vmatprep.subr.mxu0 0.0
  %1137 = vmatpush1.msra.mxu0 %v1115
  %1138 = vmatprep.subr.mxu0 0.0
  %1139 = vmatpush1.msra.mxu0 %v1116
  %1140 = vmatprep.subr.mxu0 0.0
  %1141 = vmatpush1.msra.mxu0 %v1117
  %1142 = vmatprep.subr.mxu0 0.0
  %1143 = vmatpush1.msra.mxu0 %v1118
  %1144 = vmatprep.subr.mxu0 0.0
  %1145 = vmatpush1.msra.mxu0 %v1119
  %1146 = vmatprep.subr.mxu0 0.0
  %1147 = vmatpush1.msra.mxu0 %v1120
  %1148 = vmatprep.subr.mxu0 0.0
  %1149 = vmatpush1.msra.mxu0 %v1121
  %1150 = vmatprep.subr.mxu0 0.0
  %1151 = vmatpush1.msra.mxu0 %v1122
  %1152 = vmatprep.subr.mxu0 0.0
  %1153 = vmatpush1.msra.mxu0 %v1123
  %1154 = vmatprep.subr.mxu0 0.0
  %1155 = vmatpush1.msra.mxu0 %v1124
  %1156 = vmatprep.subr.mxu0 0.0
  %1157 = vmatpush1.msra.mxu0 %v1125
  %1158 = vmatprep.subr.mxu0 0.0
  %1159 = vmatpush1.msra.mxu0 %v1126
  %1160 = vmatprep.subr.mxu0 0.0
  %1161 = vmatpush1.msra.mxu0 0.0
  %1162 = vmatprep.subr.mxu0 0.0
  %1163 = vmatpush1.msra.mxu0 0.0
  %1164 = vmatprep.subr.mxu0 0.0
  %1165 = vmatpush1.msra.mxu0 0.0
  %1166 = vmatprep.subr.mxu0 0.0
  %1167 = vmatpush1.msra.mxu0 0.0
  %1168 = vmatprep.subr.mxu0 0.0
  %1169 = vmatpush1.msra.mxu0 0.0
  %1170 = vmatprep.subr.mxu0 0.0
  %1171 = vmatpush1.msra.mxu0 0.0
  %1172 = vmatprep.subr.mxu0 0.0
  %1173 = vmatpush1.msra.mxu0 0.0
  %1174 = vmatprep.subr.mxu0 0.0
  %1175 = vmatpush1.msra.mxu0 0.0
  %1176 = vmatprep.subr.mxu0 0.0
  %1177 = vmatpush1.msra.mxu0 0.0
  %1178 = vmatprep.subr.mxu0 0.0
  %1179 = vmatpush1.msra.mxu0 0.0
  %1180 = vmatprep.subr.mxu0 0.0
  %1181 = vmatpush1.msra.mxu0 0.0
  %1182 = vmatprep.subr.mxu0 0.0
  %1183 = vmatpush1.msra.mxu0 0.0
  %1184 = vmatprep.subr.mxu0 0.0
  %1185 = vmatpush1.msra.mxu0 0.0
  %1186 = vmatprep.subr.mxu0 0.0
  %1187 = vmatpush1.msra.mxu0 0.0
  %1188 = vmatprep.subr.mxu0 0.0
  %1189 = vmatpush1.msra.mxu0 0.0
  %1190 = vmatprep.subr.mxu0 0.0
  %1191 = vmatpush1.msra.mxu0 0.0
  %1192 = vmatprep.mubr.f32.mxu0 0.0
  %1193 = vmatmul.mubr.f32.gmra.mrb[0].mxu0 %v1105
  %v1194 = vpop.f32.mrb[0].mxu0
  %v1195 = vadd.f32 0.0, %v1194
  %v1196 = vpop.f32.mrb[0].mxu0
  %1197 = vmatprep.mubr.f32.mxu0 0.0
  %1198 = vmatmul.mubr.f32.gmra.mrb[0].mxu0 %v1106
  %v1199 = vpop.f32.mrb[0].mxu0
  %v1200 = vadd.f32 0.0, %v1199
  %v1201 = vpop.f32.mrb[0].mxu0
  %1202 = vmatprep.mubr.f32.mxu0 0.0
  %1203 = vmatmul.mubr.f32.gmra.mrb[0].mxu0 %v1107
  %v1204 = vpop.f32.mrb[0].mxu0
  %v1205 = vadd.f32 0.0, %v1204
  %v1206 = vpop.f32.mrb[0].mxu0
  %1207 = vmatprep.mubr.f32.mxu0 0.0
  %1208 = vmatmul.mubr.f32.gmra.mrb[0].mxu0 %v1108
  %v1209 = vpop.f32.mrb[0].mxu0
  %v1210 = vadd.f32 0.0, %v1209
  %v1211 = vpop.f32.mrb[0].mxu0
  %1212 = vdwg.mxu0
  %vm1213 = vcmask 64512
  %v1214 = vsel %vm1213, %v1195, 0.0
  %v1215 = vsel %vm1213, %v1200, 0.0
  %v1216 = vadd.f32 %v1214, %v1215
  %v1217 = vsel %vm1213, %v1205, 0.0
  %v1218 = vadd.f32 %v1216, %v1217
  %v1219 = vsel %vm1213, %v1210, 0.0
  %v1220 = vadd.f32 %v1218, %v1219
  %v1221 = vrot.slane %v1220, 4
  %v1222 = vadd.f32 %v1220, %v1221
  %v1223 = vrot.slane %v1222, 2
  %v1224 = vadd.f32 %v1222, %v1223
  %v1225 = vrot.slane %v1224, 1
  %v1226 = vadd.f32 %v1224, %v1225
  %v1227 = vmul.f32 %v1105, %v1105
  %v1228 = vmul.f32 %v1106, %v1106
  %v1229 = vmul.f32 %v1107, %v1107
  %v1230 = vmul.f32 %v1108, %v1108
  %1231 = vmatprep.subr.mxu0 0.0
  %1232 = vmatpush1.msra.mxu0 %v1111
  %1233 = vmatprep.subr.mxu0 0.0
  %1234 = vmatpush1.msra.mxu0 %v1112
  %1235 = vmatprep.subr.mxu0 0.0
  %1236 = vmatpush1.msra.mxu0 %v1113
  %1237 = vmatprep.subr.mxu0 0.0
  %1238 = vmatpush1.msra.mxu0 %v1114
  %1239 = vmatprep.subr.mxu0 0.0
  %1240 = vmatpush1.msra.mxu0 %v1115
  %1241 = vmatprep.subr.mxu0 0.0
  %1242 = vmatpush1.msra.mxu0 %v1116
  %1243 = vmatprep.subr.mxu0 0.0
  %1244 = vmatpush1.msra.mxu0 %v1117
  %1245 = vmatprep.subr.mxu0 0.0
  %1246 = vmatpush1.msra.mxu0 %v1118
  %1247 = vmatprep.subr.mxu0 0.0
  %1248 = vmatpush1.msra.mxu0 %v1119
  %1249 = vmatprep.subr.mxu0 0.0
  %1250 = vmatpush1.msra.mxu0 %v1120
  %1251 = vmatprep.subr.mxu0 0.0
  %1252 = vmatpush1.msra.mxu0 %v1121
  %1253 = vmatprep.subr.mxu0 0.0
  %1254 = vmatpush1.msra.mxu0 %v1122
  %1255 = vmatprep.subr.mxu0 0.0
  %1256 = vmatpush1.msra.mxu0 %v1123
  %1257 = vmatprep.subr.mxu0 0.0
  %1258 = vmatpush1.msra.mxu0 %v1124
  %1259 = vmatprep.subr.mxu0 0.0
  %1260 = vmatpush1.msra.mxu0 %v1125
  %1261 = vmatprep.subr.mxu0 0.0
  %1262 = vmatpush1.msra.mxu0 %v1126
  %1263 = vmatprep.subr.mxu0 0.0
  %1264 = vmatpush1.msra.mxu0 0.0
  %1265 = vmatprep.subr.mxu0 0.0
  %1266 = vmatpush1.msra.mxu0 0.0
  %1267 = vmatprep.subr.mxu0 0.0
  %1268 = vmatpush1.msra.mxu0 0.0
  %1269 = vmatprep.subr.mxu0 0.0
  %1270 = vmatpush1.msra.mxu0 0.0
  %1271 = vmatprep.subr.mxu0 0.0
  %1272 = vmatpush1.msra.mxu0 0.0
  %1273 = vmatprep.subr.mxu0 0.0
  %1274 = vmatpush1.msra.mxu0 0.0
  %1275 = vmatprep.subr.mxu0 0.0
  %1276 = vmatpush1.msra.mxu0 0.0
  %1277 = vmatprep.subr.mxu0 0.0
  %1278 = vmatpush1.msra.mxu0 0.0
  %1279 = vmatprep.subr.mxu0 0.0
  %1280 = vmatpush1.msra.mxu0 0.0
  %1281 = vmatprep.subr.mxu0 0.0
  %1282 = vmatpush1.msra.mxu0 0.0
  %1283 = vmatprep.subr.mxu0 0.0
  %1284 = vmatpush1.msra.mxu0 0.0
  %1285 = vmatprep.subr.mxu0 0.0
  %1286 = vmatpush1.msra.mxu0 0.0
  %1287 = vmatprep.subr.mxu0 0.0
  %1288 = vmatpush1.msra.mxu0 0.0
  %1289 = vmatprep.subr.mxu0 0.0
  %1290 = vmatpush1.msra.mxu0 0.0
  %1291 = vmatprep.subr.mxu0 0.0
  %1292 = vmatpush1.msra.mxu0 0.0
  %1293 = vmatprep.subr.mxu0 0.0
  %1294 = vmatpush1.msra.mxu0 0.0
  %1295 = vmatprep.mubr.f32.mxu0 0.0
  %1296 = vmatmul.mubr.f32.gmra.mrb[0].mxu0 %v1227
  %v1297 = vpop.f32.mrb[0].mxu0
  %v1298 = vadd.f32 0.0, %v1297
  %v1299 = vpop.f32.mrb[0].mxu0
  %1300 = vmatprep.mubr.f32.mxu0 0.0
  %1301 = vmatmul.mubr.f32.gmra.mrb[0].mxu0 %v1228
  %v1302 = vpop.f32.mrb[0].mxu0
  %v1303 = vadd.f32 0.0, %v1302
  %v1304 = vpop.f32.mrb[0].mxu0
  %1305 = vmatprep.mubr.f32.mxu0 0.0
  %1306 = vmatmul.mubr.f32.gmra.mrb[0].mxu0 %v1229
  %v1307 = vpop.f32.mrb[0].mxu0
  %v1308 = vadd.f32 0.0, %v1307
  %v1309 = vpop.f32.mrb[0].mxu0
  %1310 = vmatprep.mubr.f32.mxu0 0.0
  %1311 = vmatmul.mubr.f32.gmra.mrb[0].mxu0 %v1230
  %v1312 = vpop.f32.mrb[0].mxu0
  %v1313 = vadd.f32 0.0, %v1312
  %v1314 = vpop.f32.mrb[0].mxu0
  %1315 = vdwg.mxu0
  %v1316 = vsel %vm1213, %v1298, 0.0
  %v1317 = vsel %vm1213, %v1303, 0.0
  %v1318 = vadd.f32 %v1316, %v1317
  %v1319 = vsel %vm1213, %v1308, 0.0
  %v1320 = vadd.f32 %v1318, %v1319
  %v1321 = vsel %vm1213, %v1313, 0.0
  %v1322 = vadd.f32 %v1320, %v1321
  %v1323 = vrot.slane %v1322, 4
  %v1324 = vadd.f32 %v1322, %v1323
  %v1325 = vrot.slane %v1324, 2
  %v1326 = vadd.f32 %v1324, %v1325
  %v1327 = vrot.slane %v1326, 1
  %v1328 = vadd.f32 %v1326, %v1327
  %v1329 = vmul.f32 %v1226, 0.001953125
  %v1330 = vmul.f32 %v1328, 0.001953125
  %v1331 = vmul.f32 %v1329, %v1329
  %v1332 = vsub.f32 %v1330, %v1331
  %v1333 = vmax.f32 %v1332, 0.0
  %v1334 = vadd.f32 %v1333, 1e-05
  %v1335 = vrsqrt.pop %v1334
  %v1336 = vmul.f32 %v1109, %v1335
  %v1337 = vmul.f32 %v1329, %v1336
  %v1338 = vsub.f32 %v1110, %v1337
  %v1340 = vsel %vm1213, %v1336, 0
  %1342 = vmatprep.subr.mxu0 0.0
  %1343 = vmatpush1.msra.mxu0 %v1127
  %1344 = vmatprep.subr.mxu0 0.0
  %1345 = vmatpush1.msra.mxu0 0.0
  %1346 = vmatprep.subr.mxu0 0.0
  %1347 = vmatpush1.msra.mxu0 0.0
  %1348 = vmatprep.subr.mxu0 0.0
  %1349 = vmatpush1.msra.mxu0 0.0
  %1350 = vmatprep.subr.mxu0 0.0
  %1351 = vmatpush1.msra.mxu0 0.0
  %1352 = vmatprep.subr.mxu0 0.0
  %1353 = vmatpush1.msra.mxu0 0.0
  %1354 = vmatprep.subr.mxu0 0.0
  %1355 = vmatpush1.msra.mxu0 0.0
  %1356 = vmatprep.subr.mxu0 0.0
  %1357 = vmatpush1.msra.mxu0 0.0
  %1358 = vmatprep.subr.mxu0 0.0
  %1359 = vmatpush1.msra.mxu0 0.0
  %1360 = vmatprep.subr.mxu0 0.0
  %1361 = vmatpush1.msra.mxu0 0.0
  %1362 = vmatprep.subr.mxu0 0.0
  %1363 = vmatpush1.msra.mxu0 0.0
  %1364 = vmatprep.subr.mxu0 0.0
  %1365 = vmatpush1.msra.mxu0 0.0
  %1366 = vmatprep.subr.mxu0 0.0
  %1367 = vmatpush1.msra.mxu0 0.0
  %1368 = vmatprep.subr.mxu0 0.0
  %1369 = vmatpush1.msra.mxu0 0.0
  %1370 = vmatprep.subr.mxu0 0.0
  %1371 = vmatpush1.msra.mxu0 0.0
  %1372 = vmatprep.subr.mxu0 0.0
  %1373 = vmatpush1.msra.mxu0 0.0
  %1374 = vmatprep.subr.mxu0 0.0
  %1375 = vmatpush1.msra.mxu0 0.0
  %1376 = vmatprep.subr.mxu0 0.0
  %1377 = vmatpush1.msra.mxu0 0.0
  %1378 = vmatprep.subr.mxu0 0.0
  %1379 = vmatpush1.msra.mxu0 0.0
  %1380 = vmatprep.subr.mxu0 0.0
  %1381 = vmatpush1.msra.mxu0 0.0
  %1382 = vmatprep.subr.mxu0 0.0
  %1383 = vmatpush1.msra.mxu0 0.0
  %1384 = vmatprep.subr.mxu0 0.0
  %1385 = vmatpush1.msra.mxu0 0.0
  %1386 = vmatprep.subr.mxu0 0.0
  %1387 = vmatpush1.msra.mxu0 0.0
  %1388 = vmatprep.subr.mxu0 0.0
  %1389 = vmatpush1.msra.mxu0 0.0
  %1390 = vmatprep.subr.mxu0 0.0
  %1391 = vmatpush1.msra.mxu0 0.0
  %1392 = vmatprep.subr.mxu0 0.0
  %1393 = vmatpush1.msra.mxu0 0.0
  %1394 = vmatprep.subr.mxu0 0.0
  %1395 = vmatpush1.msra.mxu0 0.0
  %1396 = vmatprep.subr.mxu0 0.0
  %1397 = vmatpush1.msra.mxu0 0.0
  %1398 = vmatprep.subr.mxu0 0.0
  %1399 = vmatpush1.msra.mxu0 0.0
  %1400 = vmatprep.subr.mxu0 0.0
  %1401 = vmatpush1.msra.mxu0 0.0
  %1402 = vmatprep.subr.mxu0 0.0
  %1403 = vmatpush1.msra.mxu0 0.0
  %1404 = vmatprep.subr.mxu0 0.0
  %1405 = vmatpush1.msra.mxu0 0.0
  %1406 = vmatprep.mubr.f32.mxu0 0.0
  %1407 = vmatmul.mubr.f32.gmra.mrb[0].mxu0 %v1340
  %v1408 = vpop.f32.mrb[0].mxu0
  %v1409 = vadd.f32 0.0, %v1408
  %v1410 = vpop.f32.mrb[0].mxu0
  %1411 = vdwg.mxu0
  %v1412 = vlaneseq
  %v1413 = vshrl.u32 %v1412, 7
  %v1414 = vsub.s32 0, %v1413
  %v1415 = vrot.slane %v1409, %v1414
  %v1416 = vmul.f32 %v1105, %v1415
  %v1417 = vmul.f32 %v1106, %v1415
  %v1418 = vmul.f32 %v1107, %v1415
  %v1419 = vmul.f32 %v1108, %v1415
  %v1421 = vsel %vm1213, %v1338, 0
  %1423 = vmatprep.subr.mxu0 0.0
  %1424 = vmatpush1.msra.mxu0 %v1127
  %1425 = vmatprep.subr.mxu0 0.0
  %1426 = vmatpush1.msra.mxu0 0.0
  %1427 = vmatprep.subr.mxu0 0.0
  %1428 = vmatpush1.msra.mxu0 0.0
  %1429 = vmatprep.subr.mxu0 0.0
  %1430 = vmatpush1.msra.mxu0 0.0
  %1431 = vmatprep.subr.mxu0 0.0
  %1432 = vmatpush1.msra.mxu0 0.0
  %1433 = vmatprep.subr.mxu0 0.0
  %1434 = vmatpush1.msra.mxu0 0.0
  %1435 = vmatprep.subr.mxu0 0.0
  %1436 = vmatpush1.msra.mxu0 0.0
  %1437 = vmatprep.subr.mxu0 0.0
  %1438 = vmatpush1.msra.mxu0 0.0
  %1439 = vmatprep.subr.mxu0 0.0
  %1440 = vmatpush1.msra.mxu0 0.0
  %1441 = vmatprep.subr.mxu0 0.0
  %1442 = vmatpush1.msra.mxu0 0.0
  %1443 = vmatprep.subr.mxu0 0.0
  %1444 = vmatpush1.msra.mxu0 0.0
  %1445 = vmatprep.subr.mxu0 0.0
  %1446 = vmatpush1.msra.mxu0 0.0
  %1447 = vmatprep.subr.mxu0 0.0
  %1448 = vmatpush1.msra.mxu0 0.0
  %1449 = vmatprep.subr.mxu0 0.0
  %1450 = vmatpush1.msra.mxu0 0.0
  %1451 = vmatprep.subr.mxu0 0.0
  %1452 = vmatpush1.msra.mxu0 0.0
  %1453 = vmatprep.subr.mxu0 0.0
  %1454 = vmatpush1.msra.mxu0 0.0
  %1455 = vmatprep.subr.mxu0 0.0
  %1456 = vmatpush1.msra.mxu0 0.0
  %1457 = vmatprep.subr.mxu0 0.0
  %1458 = vmatpush1.msra.mxu0 0.0
  %1459 = vmatprep.subr.mxu0 0.0
  %1460 = vmatpush1.msra.mxu0 0.0
  %1461 = vmatprep.subr.mxu0 0.0
  %1462 = vmatpush1.msra.mxu0 0.0
  %1463 = vmatprep.subr.mxu0 0.0
  %1464 = vmatpush1.msra.mxu0 0.0
  %1465 = vmatprep.subr.mxu0 0.0
  %1466 = vmatpush1.msra.mxu0 0.0
  %1467 = vmatprep.subr.mxu0 0.0
  %1468 = vmatpush1.msra.mxu0 0.0
  %1469 = vmatprep.subr.mxu0 0.0
  %1470 = vmatpush1.msra.mxu0 0.0
  %1471 = vmatprep.subr.mxu0 0.0
  %1472 = vmatpush1.msra.mxu0 0.0
  %1473 = vmatprep.subr.mxu0 0.0
  %1474 = vmatpush1.msra.mxu0 0.0
  %1475 = vmatprep.subr.mxu0 0.0
  %1476 = vmatpush1.msra.mxu0 0.0
  %1477 = vmatprep.subr.mxu0 0.0
  %1478 = vmatpush1.msra.mxu0 0.0
  %1479 = vmatprep.subr.mxu0 0.0
  %1480 = vmatpush1.msra.mxu0 0.0
  %1481 = vmatprep.subr.mxu0 0.0
  %1482 = vmatpush1.msra.mxu0 0.0
  %1483 = vmatprep.subr.mxu0 0.0
  %1484 = vmatpush1.msra.mxu0 0.0
  %1485 = vmatprep.subr.mxu0 0.0
  %1486 = vmatpush1.msra.mxu0 0.0
  %1487 = vmatprep.mubr.f32.mxu0 0.0
  %1488 = vmatmul.mubr.f32.gmra.mrb[0].mxu0 %v1421
  %v1489 = vpop.f32.mrb[0].mxu0
  %v1490 = vadd.f32 0.0, %v1489
  %v1491 = vpop.f32.mrb[0].mxu0
  %1492 = vdwg.mxu0
  %v1493 = vlaneseq
  %v1494 = vshrl.u32 %v1493, 7
  %v1495 = vsub.s32 0, %v1494
  %v1496 = vrot.slane %v1490, %v1495
  %v1497 = vadd.f32 %v1416, %v1496
  %v1498 = vadd.f32 %v1417, %v1496
  %v1499 = vadd.f32 %v1418, %v1496
  %v1500 = vadd.f32 %v1419, %v1496
  %v1501 = vmax.f32 %v1497, 0.0
  %v1502 = vmax.f32 %v1498, 0.0
  %v1503 = vmax.f32 %v1499, 0.0
  %v1504 = vmax.f32 %v1500, 0.0
  %v1505 = vld [vmem:[%s4] sm:$0xff]
  %v1506 = vld [vmem:[%s4 + $0x8] sm:$0xff]
  %vm1507 = vcmask 261120
  %v1509 = vsel %vm1507, %v1505, 0
  %v1512 = vsel %vm1507, %v1506, 0
  %1514 = vmatprep.subr.mxu0 0.0
  %1515 = vmatpush1.msra.mxu0 %v1501
  %1516 = vmatprep.subr.mxu0 0.0
  %1517 = vmatpush1.msra.mxu0 %v1502
  %1518 = vmatprep.subr.mxu0 0.0
  %1519 = vmatpush1.msra.mxu0 %v1503
  %1520 = vmatprep.subr.mxu0 0.0
  %1521 = vmatpush1.msra.mxu0 %v1504
  %1522 = vmatprep.subr.mxu0 0.0
  %1523 = vmatpush1.msra.mxu0 0.0
  %1524 = vmatprep.subr.mxu0 0.0
  %1525 = vmatpush1.msra.mxu0 0.0
  %1526 = vmatprep.subr.mxu0 0.0
  %1527 = vmatpush1.msra.mxu0 0.0
  %1528 = vmatprep.subr.mxu0 0.0
  %1529 = vmatpush1.msra.mxu0 0.0
  %1530 = vmatprep.subr.mxu0 0.0
  %1531 = vmatpush1.msra.mxu0 0.0
  %1532 = vmatprep.subr.mxu0 0.0
  %1533 = vmatpush1.msra.mxu0 0.0
  %1534 = vmatprep.subr.mxu0 0.0
  %1535 = vmatpush1.msra.mxu0 0.0
  %1536 = vmatprep.subr.mxu0 0.0
  %1537 = vmatpush1.msra.mxu0 0.0
  %1538 = vmatprep.subr.mxu0 0.0
  %1539 = vmatpush1.msra.mxu0 0.0
  %1540 = vmatprep.subr.mxu0 0.0
  %1541 = vmatpush1.msra.mxu0 0.0
  %1542 = vmatprep.subr.mxu0 0.0
  %1543 = vmatpush1.msra.mxu0 0.0
  %1544 = vmatprep.subr.mxu0 0.0
  %1545 = vmatpush1.msra.mxu0 0.0
  %1546 = vmatprep.subr.mxu0 0.0
  %1547 = vmatpush1.msra.mxu0 0.0
  %1548 = vmatprep.subr.mxu0 0.0
  %1549 = vmatpush1.msra.mxu0 0.0
  %1550 = vmatprep.subr.mxu0 0.0
  %1551 = vmatpush1.msra.mxu0 0.0
  %1552 = vmatprep.subr.mxu0 0.0
  %1553 = vmatpush1.msra.mxu0 0.0
  %1554 = vmatprep.subr.mxu0 0.0
  %1555 = vmatpush1.msra.mxu0 0.0
  %1556 = vmatprep.subr.mxu0 0.0
  %1557 = vmatpush1.msra.mxu0 0.0
  %1558 = vmatprep.subr.mxu0 0.0
  %1559 = vmatpush1.msra.mxu0 0.0
  %1560 = vmatprep.subr.mxu0 0.0
  %1561 = vmatpush1.msra.mxu0 0.0
  %1562 = vmatprep.subr.mxu0 0.0
  %1563 = vmatpush1.msra.mxu0 0.0
  %1564 = vmatprep.subr.mxu0 0.0
  %1565 = vmatpush1.msra.mxu0 0.0
  %1566 = vmatprep.subr.mxu0 0.0
  %1567 = vmatpush1.msra.mxu0 0.0
  %1568 = vmatprep.subr.mxu0 0.0
  %1569 = vmatpush1.msra.mxu0 0.0
  %1570 = vmatprep.subr.mxu0 0.0
  %1571 = vmatpush1.msra.mxu0 0.0
  %1572 = vmatprep.subr.mxu0 0.0
  %1573 = vmatpush1.msra.mxu0 0.0
  %1574 = vmatprep.subr.mxu0 0.0
  %1575 = vmatpush1.msra.mxu0 0.0
  %1576 = vmatprep.subr.mxu0 0.0
  %1577 = vmatpush1.msra.mxu0 0.0
  %1578 = vmatprep.mubr.f32.mxu0 0.0
  %1579 = vmatmul.mubr.f32.gmra.mrb[0].mxu0 %v1509
  %v1580 = vpop.f32.mrb[0].mxu0
  %v1581 = vadd.f32 0.0, %v1580
  %v1582 = vpop.f32.mrb[0].mxu0
  %1583 = vmatprep.mubr.f32.mxu0 0.0
  %1584 = vmatmul.mubr.f32.gmra.mrb[0].mxu0 %v1512
  %v1585 = vpop.f32.mrb[0].mxu0
  %v1586 = vadd.f32 0.0, %v1585
  %v1587 = vpop.f32.mrb[0].mxu0
  %1588 = vdwg.mxu0
  %s1589 = scalar_lea.vmem %s4, 16
  %v1590 = vld [vmem:[%s1589] sm:$0xff]
  %v1591 = vld [vmem:[%s1589 + $0x8] sm:$0xff]
  %v1593 = vsel %vm1507, %v1590, 0
  %v1596 = vsel %vm1507, %v1591, 0
  %1598 = vmatprep.subr.mxu0 0.0
  %1599 = vmatpush1.msra.mxu0 %v1501
  %1600 = vmatprep.subr.mxu0 0.0
  %1601 = vmatpush1.msra.mxu0 %v1502
  %1602 = vmatprep.subr.mxu0 0.0
  %1603 = vmatpush1.msra.mxu0 %v1503
  %1604 = vmatprep.subr.mxu0 0.0
  %1605 = vmatpush1.msra.mxu0 %v1504
  %1606 = vmatprep.subr.mxu0 0.0
  %1607 = vmatpush1.msra.mxu0 0.0
  %1608 = vmatprep.subr.mxu0 0.0
  %1609 = vmatpush1.msra.mxu0 0.0
  %1610 = vmatprep.subr.mxu0 0.0
  %1611 = vmatpush1.msra.mxu0 0.0
  %1612 = vmatprep.subr.mxu0 0.0
  %1613 = vmatpush1.msra.mxu0 0.0
  %1614 = vmatprep.subr.mxu0 0.0
  %1615 = vmatpush1.msra.mxu0 0.0
  %1616 = vmatprep.subr.mxu0 0.0
  %1617 = vmatpush1.msra.mxu0 0.0
  %1618 = vmatprep.subr.mxu0 0.0
  %1619 = vmatpush1.msra.mxu0 0.0
  %1620 = vmatprep.subr.mxu0 0.0
  %1621 = vmatpush1.msra.mxu0 0.0
  %1622 = vmatprep.subr.mxu0 0.0
  %1623 = vmatpush1.msra.mxu0 0.0
  %1624 = vmatprep.subr.mxu0 0.0
  %1625 = vmatpush1.msra.mxu0 0.0
  %1626 = vmatprep.subr.mxu0 0.0
  %1627 = vmatpush1.msra.mxu0 0.0
  %1628 = vmatprep.subr.mxu0 0.0
  %1629 = vmatpush1.msra.mxu0 0.0
  %1630 = vmatprep.subr.mxu0 0.0
  %1631 = vmatpush1.msra.mxu0 0.0
  %1632 = vmatprep.subr.mxu0 0.0
  %1633 = vmatpush1.msra.mxu0 0.0
  %1634 = vmatprep.subr.mxu0 0.0
  %1635 = vmatpush1.msra.mxu0 0.0
  %1636 = vmatprep.subr.mxu0 0.0
  %1637 = vmatpush1.msra.mxu0 0.0
  %1638 = vmatprep.subr.mxu0 0.0
  %1639 = vmatpush1.msra.mxu0 0.0
  %1640 = vmatprep.subr.mxu0 0.0
  %1641 = vmatpush1.msra.mxu0 0.0
  %1642 = vmatprep.subr.mxu0 0.0
  %1643 = vmatpush1.msra.mxu0 0.0
  %1644 = vmatprep.subr.mxu0 0.0
  %1645 = vmatpush1.msra.mxu0 0.0
  %1646 = vmatprep.subr.mxu0 0.0
  %1647 = vmatpush1.msra.mxu0 0.0
  %1648 = vmatprep.subr.mxu0 0.0
  %1649 = vmatpush1.msra.mxu0 0.0
  %1650 = vmatprep.subr.mxu0 0.0
  %1651 = vmatpush1.msra.mxu0 0.0
  %1652 = vmatprep.subr.mxu0 0.0
  %1653 = vmatpush1.msra.mxu0 0.0
  %1654 = vmatprep.subr.mxu0 0.0
  %1655 = vmatpush1.msra.mxu0 0.0
  %1656 = vmatprep.subr.mxu0 0.0
  %1657 = vmatpush1.msra.mxu0 0.0
  %1658 = vmatprep.subr.mxu0 0.0
  %1659 = vmatpush1.msra.mxu0 0.0
  %1660 = vmatprep.subr.mxu0 0.0
  %1661 = vmatpush1.msra.mxu0 0.0
  %1662 = vmatprep.mubr.f32.mxu0 0.0
  %1663 = vmatmul.mubr.f32.gmra.mrb[0].mxu0 %v1593
  %v1664 = vpop.f32.mrb[0].mxu0
  %v1665 = vadd.f32 0.0, %v1664
  %v1666 = vpop.f32.mrb[0].mxu0
  %1667 = vmatprep.mubr.f32.mxu0 0.0
  %1668 = vmatmul.mubr.f32.gmra.mrb[0].mxu0 %v1596
  %v1669 = vpop.f32.mrb[0].mxu0
  %v1670 = vadd.f32 0.0, %v1669
  %v1671 = vpop.f32.mrb[0].mxu0
  %1672 = vdwg.mxu0
  %v1673 = vmax.f32 %v1581, %v1665
  %v1674 = vmax.f32 %v1586, %v1670
  %v1675 = vld [vmem:[%s5] sm:$0xff]
  %v1676 = vld [vmem:[%s5 + $0x8] sm:$0xff]
  %v1677 = vld [vmem:[%s5 + $0x10] sm:$0xff]
  %v1678 = vld [vmem:[%s5 + $0x18] sm:$0xff]
  %v1679 = vld [vmem:[%s5 + $0x20] sm:$0xff]
  %v1680 = vld [vmem:[%s5 + $0x28] sm:$0xff]
  %v1681 = vld [vmem:[%s5 + $0x30] sm:$0xff]
  %v1682 = vld [vmem:[%s5 + $0x38] sm:$0xff]
  %v1683 = vld [vmem:[%s5 + $0x40] sm:$0xff]
  %v1684 = vld [vmem:[%s5 + $0x48] sm:$0xff]
  %v1685 = vld [vmem:[%s5 + $0x50] sm:$0xff]
  %v1686 = vld [vmem:[%s5 + $0x58] sm:$0xff]
  %v1687 = vld [vmem:[%s5 + $0x60] sm:$0xff]
  %v1688 = vld [vmem:[%s5 + $0x68] sm:$0xff]
  %v1689 = vld [vmem:[%s5 + $0x70] sm:$0xff]
  %v1690 = vld [vmem:[%s5 + $0x78] sm:$0xff]
  %1691 = vmatprep.subr.mxu0 0.0
  %1692 = vmatpush1.msra.mxu0 %v1675
  %1693 = vmatprep.subr.mxu0 0.0
  %1694 = vmatpush1.msra.mxu0 %v1676
  %1695 = vmatprep.subr.mxu0 0.0
  %1696 = vmatpush1.msra.mxu0 %v1677
  %1697 = vmatprep.subr.mxu0 0.0
  %1698 = vmatpush1.msra.mxu0 %v1678
  %1699 = vmatprep.subr.mxu0 0.0
  %1700 = vmatpush1.msra.mxu0 %v1679
  %1701 = vmatprep.subr.mxu0 0.0
  %1702 = vmatpush1.msra.mxu0 %v1680
  %1703 = vmatprep.subr.mxu0 0.0
  %1704 = vmatpush1.msra.mxu0 %v1681
  %1705 = vmatprep.subr.mxu0 0.0
  %1706 = vmatpush1.msra.mxu0 %v1682
  %1707 = vmatprep.subr.mxu0 0.0
  %1708 = vmatpush1.msra.mxu0 %v1683
  %1709 = vmatprep.subr.mxu0 0.0
  %1710 = vmatpush1.msra.mxu0 %v1684
  %1711 = vmatprep.subr.mxu0 0.0
  %1712 = vmatpush1.msra.mxu0 %v1685
  %1713 = vmatprep.subr.mxu0 0.0
  %1714 = vmatpush1.msra.mxu0 %v1686
  %1715 = vmatprep.subr.mxu0 0.0
  %1716 = vmatpush1.msra.mxu0 %v1687
  %1717 = vmatprep.subr.mxu0 0.0
  %1718 = vmatpush1.msra.mxu0 %v1688
  %1719 = vmatprep.subr.mxu0 0.0
  %1720 = vmatpush1.msra.mxu0 %v1689
  %1721 = vmatprep.subr.mxu0 0.0
  %1722 = vmatpush1.msra.mxu0 %v1690
  %1723 = vmatprep.subr.mxu0 0.0
  %1724 = vmatpush1.msra.mxu0 0.0
  %1725 = vmatprep.subr.mxu0 0.0
  %1726 = vmatpush1.msra.mxu0 0.0
  %1727 = vmatprep.subr.mxu0 0.0
  %1728 = vmatpush1.msra.mxu0 0.0
  %1729 = vmatprep.subr.mxu0 0.0
  %1730 = vmatpush1.msra.mxu0 0.0
  %1731 = vmatprep.subr.mxu0 0.0
  %1732 = vmatpush1.msra.mxu0 0.0
  %1733 = vmatprep.subr.mxu0 0.0
  %1734 = vmatpush1.msra.mxu0 0.0
  %1735 = vmatprep.subr.mxu0 0.0
  %1736 = vmatpush1.msra.mxu0 0.0
  %1737 = vmatprep.subr.mxu0 0.0
  %1738 = vmatpush1.msra.mxu0 0.0
  %1739 = vmatprep.subr.mxu0 0.0
  %1740 = vmatpush1.msra.mxu0 0.0
  %1741 = vmatprep.subr.mxu0 0.0
  %1742 = vmatpush1.msra.mxu0 0.0
  %1743 = vmatprep.subr.mxu0 0.0
  %1744 = vmatpush1.msra.mxu0 0.0
  %1745 = vmatprep.subr.mxu0 0.0
  %1746 = vmatpush1.msra.mxu0 0.0
  %1747 = vmatprep.subr.mxu0 0.0
  %1748 = vmatpush1.msra.mxu0 0.0
  %1749 = vmatprep.subr.mxu0 0.0
  %1750 = vmatpush1.msra.mxu0 0.0
  %1751 = vmatprep.subr.mxu0 0.0
  %1752 = vmatpush1.msra.mxu0 0.0
  %1753 = vmatprep.subr.mxu0 0.0
  %1754 = vmatpush1.msra.mxu0 0.0
  %1755 = vmatprep.mubr.f32.mxu0 0.0
  %1756 = vmatmul.mubr.f32.gmra.mrb[0].mxu0 %v1673
  %v1757 = vpop.f32.mrb[0].mxu0
  %v1758 = vadd.f32 0.0, %v1757
  %v1759 = vpop.f32.mrb[0].mxu0
  %1760 = vmatprep.mubr.f32.mxu0 0.0
  %1761 = vmatmul.mubr.f32.gmra.mrb[0].mxu0 %v1674
  %v1762 = vpop.f32.mrb[0].mxu0
  %v1763 = vadd.f32 0.0, %v1762
  %v1764 = vpop.f32.mrb[0].mxu0
  %1765 = vdwg.mxu0
  %s1766 = scalar_lea.vmem %s5, 128
  %v1767 = vld [vmem:[%s1766] sm:$0xff]
  %v1768 = vld [vmem:[%s1766 + $0x8] sm:$0xff]
  %v1769 = vld [vmem:[%s1766 + $0x10] sm:$0xff]
  %v1770 = vld [vmem:[%s1766 + $0x18] sm:$0xff]
  %v1771 = vld [vmem:[%s1766 + $0x20] sm:$0xff]
  %v1772 = vld [vmem:[%s1766 + $0x28] sm:$0xff]
  %v1773 = vld [vmem:[%s1766 + $0x30] sm:$0xff]
  %v1774 = vld [vmem:[%s1766 + $0x38] sm:$0xff]
  %v1775 = vld [vmem:[%s1766 + $0x40] sm:$0xff]
  %v1776 = vld [vmem:[%s1766 + $0x48] sm:$0xff]
  %v1777 = vld [vmem:[%s1766 + $0x50] sm:$0xff]
  %v1778 = vld [vmem:[%s1766 + $0x58] sm:$0xff]
  %v1779 = vld [vmem:[%s1766 + $0x60] sm:$0xff]
  %v1780 = vld [vmem:[%s1766 + $0x68] sm:$0xff]
  %v1781 = vld [vmem:[%s1766 + $0x70] sm:$0xff]
  %v1782 = vld [vmem:[%s1766 + $0x78] sm:$0xff]
  %1783 = vmatprep.subr.mxu0 0.0
  %1784 = vmatpush1.msra.mxu0 %v1767
  %1785 = vmatprep.subr.mxu0 0.0
  %1786 = vmatpush1.msra.mxu0 %v1768
  %1787 = vmatprep.subr.mxu0 0.0
  %1788 = vmatpush1.msra.mxu0 %v1769
  %1789 = vmatprep.subr.mxu0 0.0
  %1790 = vmatpush1.msra.mxu0 %v1770
  %1791 = vmatprep.subr.mxu0 0.0
  %1792 = vmatpush1.msra.mxu0 %v1771
  %1793 = vmatprep.subr.mxu0 0.0
  %1794 = vmatpush1.msra.mxu0 %v1772
  %1795 = vmatprep.subr.mxu0 0.0
  %1796 = vmatpush1.msra.mxu0 %v1773
  %1797 = vmatprep.subr.mxu0 0.0
  %1798 = vmatpush1.msra.mxu0 %v1774
  %1799 = vmatprep.subr.mxu0 0.0
  %1800 = vmatpush1.msra.mxu0 %v1775
  %1801 = vmatprep.subr.mxu0 0.0
  %1802 = vmatpush1.msra.mxu0 %v1776
  %1803 = vmatprep.subr.mxu0 0.0
  %1804 = vmatpush1.msra.mxu0 %v1777
  %1805 = vmatprep.subr.mxu0 0.0
  %1806 = vmatpush1.msra.mxu0 %v1778
  %1807 = vmatprep.subr.mxu0 0.0
  %1808 = vmatpush1.msra.mxu0 %v1779
  %1809 = vmatprep.subr.mxu0 0.0
  %1810 = vmatpush1.msra.mxu0 %v1780
  %1811 = vmatprep.subr.mxu0 0.0
  %1812 = vmatpush1.msra.mxu0 %v1781
  %1813 = vmatprep.subr.mxu0 0.0
  %1814 = vmatpush1.msra.mxu0 %v1782
  %1815 = vmatprep.subr.mxu0 0.0
  %1816 = vmatpush1.msra.mxu0 0.0
  %1817 = vmatprep.subr.mxu0 0.0
  %1818 = vmatpush1.msra.mxu0 0.0
  %1819 = vmatprep.subr.mxu0 0.0
  %1820 = vmatpush1.msra.mxu0 0.0
  %1821 = vmatprep.subr.mxu0 0.0
  %1822 = vmatpush1.msra.mxu0 0.0
  %1823 = vmatprep.subr.mxu0 0.0
  %1824 = vmatpush1.msra.mxu0 0.0
  %1825 = vmatprep.subr.mxu0 0.0
  %1826 = vmatpush1.msra.mxu0 0.0
  %1827 = vmatprep.subr.mxu0 0.0
  %1828 = vmatpush1.msra.mxu0 0.0
  %1829 = vmatprep.subr.mxu0 0.0
  %1830 = vmatpush1.msra.mxu0 0.0
  %1831 = vmatprep.subr.mxu0 0.0
  %1832 = vmatpush1.msra.mxu0 0.0
  %1833 = vmatprep.subr.mxu0 0.0
  %1834 = vmatpush1.msra.mxu0 0.0
  %1835 = vmatprep.subr.mxu0 0.0
  %1836 = vmatpush1.msra.mxu0 0.0
  %1837 = vmatprep.subr.mxu0 0.0
  %1838 = vmatpush1.msra.mxu0 0.0
  %1839 = vmatprep.subr.mxu0 0.0
  %1840 = vmatpush1.msra.mxu0 0.0
  %1841 = vmatprep.subr.mxu0 0.0
  %1842 = vmatpush1.msra.mxu0 0.0
  %1843 = vmatprep.subr.mxu0 0.0
  %1844 = vmatpush1.msra.mxu0 0.0
  %1845 = vmatprep.subr.mxu0 0.0
  %1846 = vmatpush1.msra.mxu0 0.0
  %1847 = vmatprep.mubr.f32.mxu0 0.0
  %1848 = vmatmul.mubr.f32.gmra.mrb[0].mxu0 %v1673
  %v1849 = vpop.f32.mrb[0].mxu0
  %v1850 = vadd.f32 0.0, %v1849
  %v1851 = vpop.f32.mrb[0].mxu0
  %1852 = vmatprep.mubr.f32.mxu0 0.0
  %1853 = vmatmul.mubr.f32.gmra.mrb[0].mxu0 %v1674
  %v1854 = vpop.f32.mrb[0].mxu0
  %v1855 = vadd.f32 0.0, %v1854
  %v1856 = vpop.f32.mrb[0].mxu0
  %1857 = vdwg.mxu0
  %v1858 = vmax.f32 %v1758, %v1850
  %v1859 = vmax.f32 %v1763, %v1855
  %v1860 = vld [vmem:[%s6] sm:$0xff]
  %vm1861 = vcmask 130048
  %v1863 = vsel %vm1861, %v1860, 0
  %1865 = vmatprep.subr.mxu0 0.0
  %1866 = vmatpush1.msra.mxu0 %v1858
  %1867 = vmatprep.subr.mxu0 0.0
  %1868 = vmatpush1.msra.mxu0 %v1859
  %1869 = vmatprep.subr.mxu0 0.0
  %1870 = vmatpush1.msra.mxu0 0.0
  %1871 = vmatprep.subr.mxu0 0.0
  %1872 = vmatpush1.msra.mxu0 0.0
  %1873 = vmatprep.subr.mxu0 0.0
  %1874 = vmatpush1.msra.mxu0 0.0
  %1875 = vmatprep.subr.mxu0 0.0
  %1876 = vmatpush1.msra.mxu0 0.0
  %1877 = vmatprep.subr.mxu0 0.0
  %1878 = vmatpush1.msra.mxu0 0.0
  %1879 = vmatprep.subr.mxu0 0.0
  %1880 = vmatpush1.msra.mxu0 0.0
  %1881 = vmatprep.subr.mxu0 0.0
  %1882 = vmatpush1.msra.mxu0 0.0
  %1883 = vmatprep.subr.mxu0 0.0
  %1884 = vmatpush1.msra.mxu0 0.0
  %1885 = vmatprep.subr.mxu0 0.0
  %1886 = vmatpush1.msra.mxu0 0.0
  %1887 = vmatprep.subr.mxu0 0.0
  %1888 = vmatpush1.msra.mxu0 0.0
  %1889 = vmatprep.subr.mxu0 0.0
  %1890 = vmatpush1.msra.mxu0 0.0
  %1891 = vmatprep.subr.mxu0 0.0
  %1892 = vmatpush1.msra.mxu0 0.0
  %1893 = vmatprep.subr.mxu0 0.0
  %1894 = vmatpush1.msra.mxu0 0.0
  %1895 = vmatprep.subr.mxu0 0.0
  %1896 = vmatpush1.msra.mxu0 0.0
  %1897 = vmatprep.subr.mxu0 0.0
  %1898 = vmatpush1.msra.mxu0 0.0
  %1899 = vmatprep.subr.mxu0 0.0
  %1900 = vmatpush1.msra.mxu0 0.0
  %1901 = vmatprep.subr.mxu0 0.0
  %1902 = vmatpush1.msra.mxu0 0.0
  %1903 = vmatprep.subr.mxu0 0.0
  %1904 = vmatpush1.msra.mxu0 0.0
  %1905 = vmatprep.subr.mxu0 0.0
  %1906 = vmatpush1.msra.mxu0 0.0
  %1907 = vmatprep.subr.mxu0 0.0
  %1908 = vmatpush1.msra.mxu0 0.0
  %1909 = vmatprep.subr.mxu0 0.0
  %1910 = vmatpush1.msra.mxu0 0.0
  %1911 = vmatprep.subr.mxu0 0.0
  %1912 = vmatpush1.msra.mxu0 0.0
  %1913 = vmatprep.subr.mxu0 0.0
  %1914 = vmatpush1.msra.mxu0 0.0
  %1915 = vmatprep.subr.mxu0 0.0
  %1916 = vmatpush1.msra.mxu0 0.0
  %1917 = vmatprep.subr.mxu0 0.0
  %1918 = vmatpush1.msra.mxu0 0.0
  %1919 = vmatprep.subr.mxu0 0.0
  %1920 = vmatpush1.msra.mxu0 0.0
  %1921 = vmatprep.subr.mxu0 0.0
  %1922 = vmatpush1.msra.mxu0 0.0
  %1923 = vmatprep.subr.mxu0 0.0
  %1924 = vmatpush1.msra.mxu0 0.0
  %1925 = vmatprep.subr.mxu0 0.0
  %1926 = vmatpush1.msra.mxu0 0.0
  %1927 = vmatprep.subr.mxu0 0.0
  %1928 = vmatpush1.msra.mxu0 0.0
  %1929 = vmatprep.mubr.f32.mxu0 0.0
  %1930 = vmatmul.mubr.f32.gmra.mrb[0].mxu0 %v1863
  %v1931 = vpop.f32.mrb[0].mxu0
  %v1932 = vadd.f32 0.0, %v1931
  %v1933 = vpop.f32.mrb[0].mxu0
  %1934 = vdwg.mxu0
  %v1935 = vld [vmem:[%s1 + $0x140] sm:$0xff]
  %v1936 = vld [vmem:[%s1 + $0x148] sm:$0xff]
  %v1937 = vld [vmem:[%s1 + $0x150] sm:$0xff]
  %v1938 = vld [vmem:[%s1 + $0x158] sm:$0xff]
  %v1939 = vld [vmem:[%s1 + $0x160] sm:$0xff]
  %v1940 = vld [vmem:[%s1 + $0x168] sm:$0xff]
  %v1941 = vld [vmem:[%s1 + $0x170] sm:$0xff]
  %v1942 = vld [vmem:[%s1 + $0x178] sm:$0xff]
  %s1943 = scalar_lea.vmem %s6, 8
  %v1944 = vld [vmem:[%s1943] sm:$0xff]
  %v1946 = vsel %vm1861, %v1944, 0
  %1948 = vmatprep.subr.mxu0 0.0
  %1949 = vmatpush1.msra.mxu0 %v1858
  %1950 = vmatprep.subr.mxu0 0.0
  %1951 = vmatpush1.msra.mxu0 %v1859
  %1952 = vmatprep.subr.mxu0 0.0
  %1953 = vmatpush1.msra.mxu0 0.0
  %1954 = vmatprep.subr.mxu0 0.0
  %1955 = vmatpush1.msra.mxu0 0.0
  %1956 = vmatprep.subr.mxu0 0.0
  %1957 = vmatpush1.msra.mxu0 0.0
  %1958 = vmatprep.subr.mxu0 0.0
  %1959 = vmatpush1.msra.mxu0 0.0
  %1960 = vmatprep.subr.mxu0 0.0
  %1961 = vmatpush1.msra.mxu0 0.0
  %1962 = vmatprep.subr.mxu0 0.0
  %1963 = vmatpush1.msra.mxu0 0.0
  %1964 = vmatprep.subr.mxu0 0.0
  %1965 = vmatpush1.msra.mxu0 0.0
  %1966 = vmatprep.subr.mxu0 0.0
  %1967 = vmatpush1.msra.mxu0 0.0
  %1968 = vmatprep.subr.mxu0 0.0
  %1969 = vmatpush1.msra.mxu0 0.0
  %1970 = vmatprep.subr.mxu0 0.0
  %1971 = vmatpush1.msra.mxu0 0.0
  %1972 = vmatprep.subr.mxu0 0.0
  %1973 = vmatpush1.msra.mxu0 0.0
  %1974 = vmatprep.subr.mxu0 0.0
  %1975 = vmatpush1.msra.mxu0 0.0
  %1976 = vmatprep.subr.mxu0 0.0
  %1977 = vmatpush1.msra.mxu0 0.0
  %1978 = vmatprep.subr.mxu0 0.0
  %1979 = vmatpush1.msra.mxu0 0.0
  %1980 = vmatprep.subr.mxu0 0.0
  %1981 = vmatpush1.msra.mxu0 0.0
  %1982 = vmatprep.subr.mxu0 0.0
  %1983 = vmatpush1.msra.mxu0 0.0
  %1984 = vmatprep.subr.mxu0 0.0
  %1985 = vmatpush1.msra.mxu0 0.0
  %1986 = vmatprep.subr.mxu0 0.0
  %1987 = vmatpush1.msra.mxu0 0.0
  %1988 = vmatprep.subr.mxu0 0.0
  %1989 = vmatpush1.msra.mxu0 0.0
  %1990 = vmatprep.subr.mxu0 0.0
  %1991 = vmatpush1.msra.mxu0 0.0
  %1992 = vmatprep.subr.mxu0 0.0
  %1993 = vmatpush1.msra.mxu0 0.0
  %1994 = vmatprep.subr.mxu0 0.0
  %1995 = vmatpush1.msra.mxu0 0.0
  %1996 = vmatprep.subr.mxu0 0.0
  %1997 = vmatpush1.msra.mxu0 0.0
  %1998 = vmatprep.subr.mxu0 0.0
  %1999 = vmatpush1.msra.mxu0 0.0
  %2000 = vmatprep.subr.mxu0 0.0
  %2001 = vmatpush1.msra.mxu0 0.0
  %2002 = vmatprep.subr.mxu0 0.0
  %2003 = vmatpush1.msra.mxu0 0.0
  %2004 = vmatprep.subr.mxu0 0.0
  %2005 = vmatpush1.msra.mxu0 0.0
  %2006 = vmatprep.subr.mxu0 0.0
  %2007 = vmatpush1.msra.mxu0 0.0
  %2008 = vmatprep.subr.mxu0 0.0
  %2009 = vmatpush1.msra.mxu0 0.0
  %2010 = vmatprep.subr.mxu0 0.0
  %2011 = vmatpush1.msra.mxu0 0.0
  %2012 = vmatprep.mubr.f32.mxu0 0.0
  %2013 = vmatmul.mubr.f32.gmra.mrb[0].mxu0 %v1946
  %v2014 = vpop.f32.mrb[0].mxu0
  %v2015 = vadd.f32 0.0, %v2014
  %v2016 = vpop.f32.mrb[0].mxu0
  %2017 = vdwg.mxu0
  %v2018 = vld [vmem:[%s1 + $0x180] sm:$0xff]
  %v2019 = vld [vmem:[%s1 + $0x188] sm:$0xff]
  %v2020 = vld [vmem:[%s1 + $0x190] sm:$0xff]
  %v2021 = vld [vmem:[%s1 + $0x198] sm:$0xff]
  %v2022 = vld [vmem:[%s1 + $0x1a0] sm:$0xff]
  %v2023 = vld [vmem:[%s1 + $0x1a8] sm:$0xff]
  %v2024 = vld [vmem:[%s1 + $0x1b0] sm:$0xff]
  %v2025 = vld [vmem:[%s1 + $0x1b8] sm:$0xff]
  %v2027 = vsel %vm272, %v2015, 0
  %2029 = vmatprep.subr.mxu0 0.0
  %2030 = vmatpush1.msra.mxu0 %v2018
  %2031 = vmatprep.subr.mxu0 0.0
  %2032 = vmatpush1.msra.mxu0 %v2019
  %2033 = vmatprep.subr.mxu0 0.0
  %2034 = vmatpush1.msra.mxu0 %v2020
  %2035 = vmatprep.subr.mxu0 0.0
  %2036 = vmatpush1.msra.mxu0 %v2021
  %2037 = vmatprep.subr.mxu0 0.0
  %2038 = vmatpush1.msra.mxu0 %v2022
  %2039 = vmatprep.subr.mxu0 0.0
  %2040 = vmatpush1.msra.mxu0 %v2023
  %2041 = vmatprep.subr.mxu0 0.0
  %2042 = vmatpush1.msra.mxu0 %v2024
  %2043 = vmatprep.subr.mxu0 0.0
  %2044 = vmatpush1.msra.mxu0 %v2025
  %2045 = vmatprep.subr.mxu0 0.0
  %2046 = vmatpush1.msra.mxu0 0.0
  %2047 = vmatprep.subr.mxu0 0.0
  %2048 = vmatpush1.msra.mxu0 0.0
  %2049 = vmatprep.subr.mxu0 0.0
  %2050 = vmatpush1.msra.mxu0 0.0
  %2051 = vmatprep.subr.mxu0 0.0
  %2052 = vmatpush1.msra.mxu0 0.0
  %2053 = vmatprep.subr.mxu0 0.0
  %2054 = vmatpush1.msra.mxu0 0.0
  %2055 = vmatprep.subr.mxu0 0.0
  %2056 = vmatpush1.msra.mxu0 0.0
  %2057 = vmatprep.subr.mxu0 0.0
  %2058 = vmatpush1.msra.mxu0 0.0
  %2059 = vmatprep.subr.mxu0 0.0
  %2060 = vmatpush1.msra.mxu0 0.0
  %2061 = vmatprep.subr.mxu0 0.0
  %2062 = vmatpush1.msra.mxu0 0.0
  %2063 = vmatprep.subr.mxu0 0.0
  %2064 = vmatpush1.msra.mxu0 0.0
  %2065 = vmatprep.subr.mxu0 0.0
  %2066 = vmatpush1.msra.mxu0 0.0
  %2067 = vmatprep.subr.mxu0 0.0
  %2068 = vmatpush1.msra.mxu0 0.0
  %2069 = vmatprep.subr.mxu0 0.0
  %2070 = vmatpush1.msra.mxu0 0.0
  %2071 = vmatprep.subr.mxu0 0.0
  %2072 = vmatpush1.msra.mxu0 0.0
  %2073 = vmatprep.subr.mxu0 0.0
  %2074 = vmatpush1.msra.mxu0 0.0
  %2075 = vmatprep.subr.mxu0 0.0
  %2076 = vmatpush1.msra.mxu0 0.0
  %2077 = vmatprep.subr.mxu0 0.0
  %2078 = vmatpush1.msra.mxu0 0.0
  %2079 = vmatprep.subr.mxu0 0.0
  %2080 = vmatpush1.msra.mxu0 0.0
  %2081 = vmatprep.subr.mxu0 0.0
  %2082 = vmatpush1.msra.mxu0 0.0
  %2083 = vmatprep.subr.mxu0 0.0
  %2084 = vmatpush1.msra.mxu0 0.0
  %2085 = vmatprep.subr.mxu0 0.0
  %2086 = vmatpush1.msra.mxu0 0.0
  %2087 = vmatprep.subr.mxu0 0.0
  %2088 = vmatpush1.msra.mxu0 0.0
  %2089 = vmatprep.subr.mxu0 0.0
  %2090 = vmatpush1.msra.mxu0 0.0
  %2091 = vmatprep.subr.mxu0 0.0
  %2092 = vmatpush1.msra.mxu0 0.0
  %2093 = vmatprep.mubr.f32.mxu0 0.0
  %2094 = vmatmul.mubr.f32.gmra.mrb[0].mxu0 %v2027
  %v2095 = vpop.f32.mrb[0].mxu0
  %v2096 = vadd.f32 0.0, %v2095
  %v2097 = vpop.f32.mrb[0].mxu0
  %2098 = vdwg.mxu0
  %v2100 = vsel %vm272, %v1932, 0
  %2102 = vmatprep.subr.mxu0 0.0
  %2103 = vmatpush1.msra.mxu0 %v1935
  %2104 = vmatprep.subr.mxu0 0.0
  %2105 = vmatpush1.msra.mxu0 %v1936
  %2106 = vmatprep.subr.mxu0 0.0
  %2107 = vmatpush1.msra.mxu0 %v1937
  %2108 = vmatprep.subr.mxu0 0.0
  %2109 = vmatpush1.msra.mxu0 %v1938
  %2110 = vmatprep.subr.mxu0 0.0
  %2111 = vmatpush1.msra.mxu0 %v1939
  %2112 = vmatprep.subr.mxu0 0.0
  %2113 = vmatpush1.msra.mxu0 %v1940
  %2114 = vmatprep.subr.mxu0 0.0
  %2115 = vmatpush1.msra.mxu0 %v1941
  %2116 = vmatprep.subr.mxu0 0.0
  %2117 = vmatpush1.msra.mxu0 %v1942
  %2118 = vmatprep.subr.mxu0 0.0
  %2119 = vmatpush1.msra.mxu0 0.0
  %2120 = vmatprep.subr.mxu0 0.0
  %2121 = vmatpush1.msra.mxu0 0.0
  %2122 = vmatprep.subr.mxu0 0.0
  %2123 = vmatpush1.msra.mxu0 0.0
  %2124 = vmatprep.subr.mxu0 0.0
  %2125 = vmatpush1.msra.mxu0 0.0
  %2126 = vmatprep.subr.mxu0 0.0
  %2127 = vmatpush1.msra.mxu0 0.0
  %2128 = vmatprep.subr.mxu0 0.0
  %2129 = vmatpush1.msra.mxu0 0.0
  %2130 = vmatprep.subr.mxu0 0.0
  %2131 = vmatpush1.msra.mxu0 0.0
  %2132 = vmatprep.subr.mxu0 0.0
  %2133 = vmatpush1.msra.mxu0 0.0
  %2134 = vmatprep.subr.mxu0 0.0
  %2135 = vmatpush1.msra.mxu0 0.0
  %2136 = vmatprep.subr.mxu0 0.0
  %2137 = vmatpush1.msra.mxu0 0.0
  %2138 = vmatprep.subr.mxu0 0.0
  %2139 = vmatpush1.msra.mxu0 0.0
  %2140 = vmatprep.subr.mxu0 0.0
  %2141 = vmatpush1.msra.mxu0 0.0
  %2142 = vmatprep.subr.mxu0 0.0
  %2143 = vmatpush1.msra.mxu0 0.0
  %2144 = vmatprep.subr.mxu0 0.0
  %2145 = vmatpush1.msra.mxu0 0.0
  %2146 = vmatprep.subr.mxu0 0.0
  %2147 = vmatpush1.msra.mxu0 0.0
  %2148 = vmatprep.subr.mxu0 0.0
  %2149 = vmatpush1.msra.mxu0 0.0
  %2150 = vmatprep.subr.mxu0 0.0
  %2151 = vmatpush1.msra.mxu0 0.0
  %2152 = vmatprep.subr.mxu0 0.0
  %2153 = vmatpush1.msra.mxu0 0.0
  %2154 = vmatprep.subr.mxu0 0.0
  %2155 = vmatpush1.msra.mxu0 0.0
  %2156 = vmatprep.subr.mxu0 0.0
  %2157 = vmatpush1.msra.mxu0 0.0
  %2158 = vmatprep.subr.mxu0 0.0
  %2159 = vmatpush1.msra.mxu0 0.0
  %2160 = vmatprep.subr.mxu0 0.0
  %2161 = vmatpush1.msra.mxu0 0.0
  %2162 = vmatprep.subr.mxu0 0.0
  %2163 = vmatpush1.msra.mxu0 0.0
  %2164 = vmatprep.subr.mxu0 0.0
  %2165 = vmatpush1.msra.mxu0 0.0
  %2166 = vmatprep.mubr.f32.mxu0 0.0
  %2167 = vmatmul.mubr.f32.gmra.mrb[0].mxu0 %v2100
  %v2168 = vpop.f32.mrb[0].mxu0
  %v2169 = vadd.f32 %v2096, %v2168
  %v2170 = vpop.f32.mrb[0].mxu0
  %2171 = vdwg.mxu0
  %s2172 = scalar_lea.vmem %s6, 16
  %v2173 = vld [vmem:[%s2172] sm:$0xff]
  %v2175 = vsel %vm1861, %v2173, 0
  %2177 = vmatprep.subr.mxu0 0.0
  %2178 = vmatpush1.msra.mxu0 %v1858
  %2179 = vmatprep.subr.mxu0 0.0
  %2180 = vmatpush1.msra.mxu0 %v1859
  %2181 = vmatprep.subr.mxu0 0.0
  %2182 = vmatpush1.msra.mxu0 0.0
  %2183 = vmatprep.subr.mxu0 0.0
  %2184 = vmatpush1.msra.mxu0 0.0
  %2185 = vmatprep.subr.mxu0 0.0
  %2186 = vmatpush1.msra.mxu0 0.0
  %2187 = vmatprep.subr.mxu0 0.0
  %2188 = vmatpush1.msra.mxu0 0.0
  %2189 = vmatprep.subr.mxu0 0.0
  %2190 = vmatpush1.msra.mxu0 0.0
  %2191 = vmatprep.subr.mxu0 0.0
  %2192 = vmatpush1.msra.mxu0 0.0
  %2193 = vmatprep.subr.mxu0 0.0
  %2194 = vmatpush1.msra.mxu0 0.0
  %2195 = vmatprep.subr.mxu0 0.0
  %2196 = vmatpush1.msra.mxu0 0.0
  %2197 = vmatprep.subr.mxu0 0.0
  %2198 = vmatpush1.msra.mxu0 0.0
  %2199 = vmatprep.subr.mxu0 0.0
  %2200 = vmatpush1.msra.mxu0 0.0
  %2201 = vmatprep.subr.mxu0 0.0
  %2202 = vmatpush1.msra.mxu0 0.0
  %2203 = vmatprep.subr.mxu0 0.0
  %2204 = vmatpush1.msra.mxu0 0.0
  %2205 = vmatprep.subr.mxu0 0.0
  %2206 = vmatpush1.msra.mxu0 0.0
  %2207 = vmatprep.subr.mxu0 0.0
  %2208 = vmatpush1.msra.mxu0 0.0
  %2209 = vmatprep.subr.mxu0 0.0
  %2210 = vmatpush1.msra.mxu0 0.0
  %2211 = vmatprep.subr.mxu0 0.0
  %2212 = vmatpush1.msra.mxu0 0.0
  %2213 = vmatprep.subr.mxu0 0.0
  %2214 = vmatpush1.msra.mxu0 0.0
  %2215 = vmatprep.subr.mxu0 0.0
  %2216 = vmatpush1.msra.mxu0 0.0
  %2217 = vmatprep.subr.mxu0 0.0
  %2218 = vmatpush1.msra.mxu0 0.0
  %2219 = vmatprep.subr.mxu0 0.0
  %2220 = vmatpush1.msra.mxu0 0.0
  %2221 = vmatprep.subr.mxu0 0.0
  %2222 = vmatpush1.msra.mxu0 0.0
  %2223 = vmatprep.subr.mxu0 0.0
  %2224 = vmatpush1.msra.mxu0 0.0
  %2225 = vmatprep.subr.mxu0 0.0
  %2226 = vmatpush1.msra.mxu0 0.0
  %2227 = vmatprep.subr.mxu0 0.0
  %2228 = vmatpush1.msra.mxu0 0.0
  %2229 = vmatprep.subr.mxu0 0.0
  %2230 = vmatpush1.msra.mxu0 0.0
  %2231 = vmatprep.subr.mxu0 0.0
  %2232 = vmatpush1.msra.mxu0 0.0
  %2233 = vmatprep.subr.mxu0 0.0
  %2234 = vmatpush1.msra.mxu0 0.0
  %2235 = vmatprep.subr.mxu0 0.0
  %2236 = vmatpush1.msra.mxu0 0.0
  %2237 = vmatprep.subr.mxu0 0.0
  %2238 = vmatpush1.msra.mxu0 0.0
  %2239 = vmatprep.subr.mxu0 0.0
  %2240 = vmatpush1.msra.mxu0 0.0
  %2241 = vmatprep.mubr.f32.mxu0 0.0
  %2242 = vmatmul.mubr.f32.gmra.mrb[0].mxu0 %v2175
  %v2243 = vpop.f32.mrb[0].mxu0
  %v2244 = vadd.f32 0.0, %v2243
  %v2245 = vpop.f32.mrb[0].mxu0
  %2246 = vdwg.mxu0
  %v2247 = vld [vmem:[%s1 + $0x1c0] sm:$0xff]
  %v2248 = vld [vmem:[%s1 + $0x1c8] sm:$0xff]
  %v2249 = vld [vmem:[%s1 + $0x1d0] sm:$0xff]
  %v2250 = vld [vmem:[%s1 + $0x1d8] sm:$0xff]
  %v2251 = vld [vmem:[%s1 + $0x1e0] sm:$0xff]
  %v2252 = vld [vmem:[%s1 + $0x1e8] sm:$0xff]
  %v2253 = vld [vmem:[%s1 + $0x1f0] sm:$0xff]
  %v2254 = vld [vmem:[%s1 + $0x1f8] sm:$0xff]
  %v2256 = vsel %vm272, %v2244, 0
  %2258 = vmatprep.subr.mxu0 0.0
  %2259 = vmatpush1.msra.mxu0 %v2247
  %2260 = vmatprep.subr.mxu0 0.0
  %2261 = vmatpush1.msra.mxu0 %v2248
  %2262 = vmatprep.subr.mxu0 0.0
  %2263 = vmatpush1.msra.mxu0 %v2249
  %2264 = vmatprep.subr.mxu0 0.0
  %2265 = vmatpush1.msra.mxu0 %v2250
  %2266 = vmatprep.subr.mxu0 0.0
  %2267 = vmatpush1.msra.mxu0 %v2251
  %2268 = vmatprep.subr.mxu0 0.0
  %2269 = vmatpush1.msra.mxu0 %v2252
  %2270 = vmatprep.subr.mxu0 0.0
  %2271 = vmatpush1.msra.mxu0 %v2253
  %2272 = vmatprep.subr.mxu0 0.0
  %2273 = vmatpush1.msra.mxu0 %v2254
  %2274 = vmatprep.subr.mxu0 0.0
  %2275 = vmatpush1.msra.mxu0 0.0
  %2276 = vmatprep.subr.mxu0 0.0
  %2277 = vmatpush1.msra.mxu0 0.0
  %2278 = vmatprep.subr.mxu0 0.0
  %2279 = vmatpush1.msra.mxu0 0.0
  %2280 = vmatprep.subr.mxu0 0.0
  %2281 = vmatpush1.msra.mxu0 0.0
  %2282 = vmatprep.subr.mxu0 0.0
  %2283 = vmatpush1.msra.mxu0 0.0
  %2284 = vmatprep.subr.mxu0 0.0
  %2285 = vmatpush1.msra.mxu0 0.0
  %2286 = vmatprep.subr.mxu0 0.0
  %2287 = vmatpush1.msra.mxu0 0.0
  %2288 = vmatprep.subr.mxu0 0.0
  %2289 = vmatpush1.msra.mxu0 0.0
  %2290 = vmatprep.subr.mxu0 0.0
  %2291 = vmatpush1.msra.mxu0 0.0
  %2292 = vmatprep.subr.mxu0 0.0
  %2293 = vmatpush1.msra.mxu0 0.0
  %2294 = vmatprep.subr.mxu0 0.0
  %2295 = vmatpush1.msra.mxu0 0.0
  %2296 = vmatprep.subr.mxu0 0.0
  %2297 = vmatpush1.msra.mxu0 0.0
  %2298 = vmatprep.subr.mxu0 0.0
  %2299 = vmatpush1.msra.mxu0 0.0
  %2300 = vmatprep.subr.mxu0 0.0
  %2301 = vmatpush1.msra.mxu0 0.0
  %2302 = vmatprep.subr.mxu0 0.0
  %2303 = vmatpush1.msra.mxu0 0.0
  %2304 = vmatprep.subr.mxu0 0.0
  %2305 = vmatpush1.msra.mxu0 0.0
  %2306 = vmatprep.subr.mxu0 0.0
  %2307 = vmatpush1.msra.mxu0 0.0
  %2308 = vmatprep.subr.mxu0 0.0
  %2309 = vmatpush1.msra.mxu0 0.0
  %2310 = vmatprep.subr.mxu0 0.0
  %2311 = vmatpush1.msra.mxu0 0.0
  %2312 = vmatprep.subr.mxu0 0.0
  %2313 = vmatpush1.msra.mxu0 0.0
  %2314 = vmatprep.subr.mxu0 0.0
  %2315 = vmatpush1.msra.mxu0 0.0
  %2316 = vmatprep.subr.mxu0 0.0
  %2317 = vmatpush1.msra.mxu0 0.0
  %2318 = vmatprep.subr.mxu0 0.0
  %2319 = vmatpush1.msra.mxu0 0.0
  %2320 = vmatprep.subr.mxu0 0.0
  %2321 = vmatpush1.msra.mxu0 0.0
  %2322 = vmatprep.mubr.f32.mxu0 0.0
  %2323 = vmatmul.mubr.f32.gmra.mrb[0].mxu0 %v2256
  %v2324 = vpop.f32.mrb[0].mxu0
  %v2325 = vadd.f32 0.0, %v2324
  %v2326 = vpop.f32.mrb[0].mxu0
  %2327 = vdwg.mxu0
  %v2328 = vadd.f32 %v2169, %v2325
  %s2329 = scalar_lea.vmem %s6, 24
  %v2330 = vld [vmem:[%s2329] sm:$0xff]
  %v2332 = vsel %vm1861, %v2330, 0
  %2334 = vmatprep.subr.mxu0 0.0
  %2335 = vmatpush1.msra.mxu0 %v1858
  %2336 = vmatprep.subr.mxu0 0.0
  %2337 = vmatpush1.msra.mxu0 %v1859
  %2338 = vmatprep.subr.mxu0 0.0
  %2339 = vmatpush1.msra.mxu0 0.0
  %2340 = vmatprep.subr.mxu0 0.0
  %2341 = vmatpush1.msra.mxu0 0.0
  %2342 = vmatprep.subr.mxu0 0.0
  %2343 = vmatpush1.msra.mxu0 0.0
  %2344 = vmatprep.subr.mxu0 0.0
  %2345 = vmatpush1.msra.mxu0 0.0
  %2346 = vmatprep.subr.mxu0 0.0
  %2347 = vmatpush1.msra.mxu0 0.0
  %2348 = vmatprep.subr.mxu0 0.0
  %2349 = vmatpush1.msra.mxu0 0.0
  %2350 = vmatprep.subr.mxu0 0.0
  %2351 = vmatpush1.msra.mxu0 0.0
  %2352 = vmatprep.subr.mxu0 0.0
  %2353 = vmatpush1.msra.mxu0 0.0
  %2354 = vmatprep.subr.mxu0 0.0
  %2355 = vmatpush1.msra.mxu0 0.0
  %2356 = vmatprep.subr.mxu0 0.0
  %2357 = vmatpush1.msra.mxu0 0.0
  %2358 = vmatprep.subr.mxu0 0.0
  %2359 = vmatpush1.msra.mxu0 0.0
  %2360 = vmatprep.subr.mxu0 0.0
  %2361 = vmatpush1.msra.mxu0 0.0
  %2362 = vmatprep.subr.mxu0 0.0
  %2363 = vmatpush1.msra.mxu0 0.0
  %2364 = vmatprep.subr.mxu0 0.0
  %2365 = vmatpush1.msra.mxu0 0.0
  %2366 = vmatprep.subr.mxu0 0.0
  %2367 = vmatpush1.msra.mxu0 0.0
  %2368 = vmatprep.subr.mxu0 0.0
  %2369 = vmatpush1.msra.mxu0 0.0
  %2370 = vmatprep.subr.mxu0 0.0
  %2371 = vmatpush1.msra.mxu0 0.0
  %2372 = vmatprep.subr.mxu0 0.0
  %2373 = vmatpush1.msra.mxu0 0.0
  %2374 = vmatprep.subr.mxu0 0.0
  %2375 = vmatpush1.msra.mxu0 0.0
  %2376 = vmatprep.subr.mxu0 0.0
  %2377 = vmatpush1.msra.mxu0 0.0
  %2378 = vmatprep.subr.mxu0 0.0
  %2379 = vmatpush1.msra.mxu0 0.0
  %2380 = vmatprep.subr.mxu0 0.0
  %2381 = vmatpush1.msra.mxu0 0.0
  %2382 = vmatprep.subr.mxu0 0.0
  %2383 = vmatpush1.msra.mxu0 0.0
  %2384 = vmatprep.subr.mxu0 0.0
  %2385 = vmatpush1.msra.mxu0 0.0
  %2386 = vmatprep.subr.mxu0 0.0
  %2387 = vmatpush1.msra.mxu0 0.0
  %2388 = vmatprep.subr.mxu0 0.0
  %2389 = vmatpush1.msra.mxu0 0.0
  %2390 = vmatprep.subr.mxu0 0.0
  %2391 = vmatpush1.msra.mxu0 0.0
  %2392 = vmatprep.subr.mxu0 0.0
  %2393 = vmatpush1.msra.mxu0 0.0
  %2394 = vmatprep.subr.mxu0 0.0
  %2395 = vmatpush1.msra.mxu0 0.0
  %2396 = vmatprep.subr.mxu0 0.0
  %2397 = vmatpush1.msra.mxu0 0.0
  %2398 = vmatprep.mubr.f32.mxu0 0.0
  %2399 = vmatmul.mubr.f32.gmra.mrb[0].mxu0 %v2332
  %v2400 = vpop.f32.mrb[0].mxu0
  %v2401 = vadd.f32 0.0, %v2400
  %v2402 = vpop.f32.mrb[0].mxu0
  %2403 = vdwg.mxu0
  %v2404 = vld [vmem:[%s1 + $0x200] sm:$0xff]
  %v2405 = vld [vmem:[%s1 + $0x208] sm:$0xff]
  %v2406 = vld [vmem:[%s1 + $0x210] sm:$0xff]
  %v2407 = vld [vmem:[%s1 + $0x218] sm:$0xff]
  %v2408 = vld [vmem:[%s1 + $0x220] sm:$0xff]
  %v2409 = vld [vmem:[%s1 + $0x228] sm:$0xff]
  %v2410 = vld [vmem:[%s1 + $0x230] sm:$0xff]
  %v2411 = vld [vmem:[%s1 + $0x238] sm:$0xff]
  %v2413 = vsel %vm272, %v2401, 0
  %2415 = vmatprep.subr.mxu0 0.0
  %2416 = vmatpush1.msra.mxu0 %v2404
  %2417 = vmatprep.subr.mxu0 0.0
  %2418 = vmatpush1.msra.mxu0 %v2405
  %2419 = vmatprep.subr.mxu0 0.0
  %2420 = vmatpush1.msra.mxu0 %v2406
  %2421 = vmatprep.subr.mxu0 0.0
  %2422 = vmatpush1.msra.mxu0 %v2407
  %2423 = vmatprep.subr.mxu0 0.0
  %2424 = vmatpush1.msra.mxu0 %v2408
  %2425 = vmatprep.subr.mxu0 0.0
  %2426 = vmatpush1.msra.mxu0 %v2409
  %2427 = vmatprep.subr.mxu0 0.0
  %2428 = vmatpush1.msra.mxu0 %v2410
  %2429 = vmatprep.subr.mxu0 0.0
  %2430 = vmatpush1.msra.mxu0 %v2411
  %2431 = vmatprep.subr.mxu0 0.0
  %2432 = vmatpush1.msra.mxu0 0.0
  %2433 = vmatprep.subr.mxu0 0.0
  %2434 = vmatpush1.msra.mxu0 0.0
  %2435 = vmatprep.subr.mxu0 0.0
  %2436 = vmatpush1.msra.mxu0 0.0
  %2437 = vmatprep.subr.mxu0 0.0
  %2438 = vmatpush1.msra.mxu0 0.0
  %2439 = vmatprep.subr.mxu0 0.0
  %2440 = vmatpush1.msra.mxu0 0.0
  %2441 = vmatprep.subr.mxu0 0.0
  %2442 = vmatpush1.msra.mxu0 0.0
  %2443 = vmatprep.subr.mxu0 0.0
  %2444 = vmatpush1.msra.mxu0 0.0
  %2445 = vmatprep.subr.mxu0 0.0
  %2446 = vmatpush1.msra.mxu0 0.0
  %2447 = vmatprep.subr.mxu0 0.0
  %2448 = vmatpush1.msra.mxu0 0.0
  %2449 = vmatprep.subr.mxu0 0.0
  %2450 = vmatpush1.msra.mxu0 0.0
  %2451 = vmatprep.subr.mxu0 0.0
  %2452 = vmatpush1.msra.mxu0 0.0
  %2453 = vmatprep.subr.mxu0 0.0
  %2454 = vmatpush1.msra.mxu0 0.0
  %2455 = vmatprep.subr.mxu0 0.0
  %2456 = vmatpush1.msra.mxu0 0.0
  %2457 = vmatprep.subr.mxu0 0.0
  %2458 = vmatpush1.msra.mxu0 0.0
  %2459 = vmatprep.subr.mxu0 0.0
  %2460 = vmatpush1.msra.mxu0 0.0
  %2461 = vmatprep.subr.mxu0 0.0
  %2462 = vmatpush1.msra.mxu0 0.0
  %2463 = vmatprep.subr.mxu0 0.0
  %2464 = vmatpush1.msra.mxu0 0.0
  %2465 = vmatprep.subr.mxu0 0.0
  %2466 = vmatpush1.msra.mxu0 0.0
  %2467 = vmatprep.subr.mxu0 0.0
  %2468 = vmatpush1.msra.mxu0 0.0
  %2469 = vmatprep.subr.mxu0 0.0
  %2470 = vmatpush1.msra.mxu0 0.0
  %2471 = vmatprep.subr.mxu0 0.0
  %2472 = vmatpush1.msra.mxu0 0.0
  %2473 = vmatprep.subr.mxu0 0.0
  %2474 = vmatpush1.msra.mxu0 0.0
  %2475 = vmatprep.subr.mxu0 0.0
  %2476 = vmatpush1.msra.mxu0 0.0
  %2477 = vmatprep.subr.mxu0 0.0
  %2478 = vmatpush1.msra.mxu0 0.0
  %2479 = vmatprep.mubr.f32.mxu0 0.0
  %2480 = vmatmul.mubr.f32.gmra.mrb[0].mxu0 %v2413
  %v2481 = vpop.f32.mrb[0].mxu0
  %v2482 = vadd.f32 0.0, %v2481
  %v2483 = vpop.f32.mrb[0].mxu0
  %2484 = vdwg.mxu0
  %v2485 = vadd.f32 %v2328, %v2482
  %s2486 = scalar_lea.vmem %s6, 32
  %v2487 = vld [vmem:[%s2486] sm:$0xff]
  %v2489 = vsel %vm1861, %v2487, 0
  %2491 = vmatprep.subr.mxu0 0.0
  %2492 = vmatpush1.msra.mxu0 %v1858
  %2493 = vmatprep.subr.mxu0 0.0
  %2494 = vmatpush1.msra.mxu0 %v1859
  %2495 = vmatprep.subr.mxu0 0.0
  %2496 = vmatpush1.msra.mxu0 0.0
  %2497 = vmatprep.subr.mxu0 0.0
  %2498 = vmatpush1.msra.mxu0 0.0
  %2499 = vmatprep.subr.mxu0 0.0
  %2500 = vmatpush1.msra.mxu0 0.0
  %2501 = vmatprep.subr.mxu0 0.0
  %2502 = vmatpush1.msra.mxu0 0.0
  %2503 = vmatprep.subr.mxu0 0.0
  %2504 = vmatpush1.msra.mxu0 0.0
  %2505 = vmatprep.subr.mxu0 0.0
  %2506 = vmatpush1.msra.mxu0 0.0
  %2507 = vmatprep.subr.mxu0 0.0
  %2508 = vmatpush1.msra.mxu0 0.0
  %2509 = vmatprep.subr.mxu0 0.0
  %2510 = vmatpush1.msra.mxu0 0.0
  %2511 = vmatprep.subr.mxu0 0.0
  %2512 = vmatpush1.msra.mxu0 0.0
  %2513 = vmatprep.subr.mxu0 0.0
  %2514 = vmatpush1.msra.mxu0 0.0
  %2515 = vmatprep.subr.mxu0 0.0
  %2516 = vmatpush1.msra.mxu0 0.0
  %2517 = vmatprep.subr.mxu0 0.0
  %2518 = vmatpush1.msra.mxu0 0.0
  %2519 = vmatprep.subr.mxu0 0.0
  %2520 = vmatpush1.msra.mxu0 0.0
  %2521 = vmatprep.subr.mxu0 0.0
  %2522 = vmatpush1.msra.mxu0 0.0
  %2523 = vmatprep.subr.mxu0 0.0
  %2524 = vmatpush1.msra.mxu0 0.0
  %2525 = vmatprep.subr.mxu0 0.0
  %2526 = vmatpush1.msra.mxu0 0.0
  %2527 = vmatprep.subr.mxu0 0.0
  %2528 = vmatpush1.msra.mxu0 0.0
  %2529 = vmatprep.subr.mxu0 0.0
  %2530 = vmatpush1.msra.mxu0 0.0
  %2531 = vmatprep.subr.mxu0 0.0
  %2532 = vmatpush1.msra.mxu0 0.0
  %2533 = vmatprep.subr.mxu0 0.0
  %2534 = vmatpush1.msra.mxu0 0.0
  %2535 = vmatprep.subr.mxu0 0.0
  %2536 = vmatpush1.msra.mxu0 0.0
  %2537 = vmatprep.subr.mxu0 0.0
  %2538 = vmatpush1.msra.mxu0 0.0
  %2539 = vmatprep.subr.mxu0 0.0
  %2540 = vmatpush1.msra.mxu0 0.0
  %2541 = vmatprep.subr.mxu0 0.0
  %2542 = vmatpush1.msra.mxu0 0.0
  %2543 = vmatprep.subr.mxu0 0.0
  %2544 = vmatpush1.msra.mxu0 0.0
  %2545 = vmatprep.subr.mxu0 0.0
  %2546 = vmatpush1.msra.mxu0 0.0
  %2547 = vmatprep.subr.mxu0 0.0
  %2548 = vmatpush1.msra.mxu0 0.0
  %2549 = vmatprep.subr.mxu0 0.0
  %2550 = vmatpush1.msra.mxu0 0.0
  %2551 = vmatprep.subr.mxu0 0.0
  %2552 = vmatpush1.msra.mxu0 0.0
  %2553 = vmatprep.subr.mxu0 0.0
  %2554 = vmatpush1.msra.mxu0 0.0
  %2555 = vmatprep.mubr.f32.mxu0 0.0
  %2556 = vmatmul.mubr.f32.gmra.mrb[0].mxu0 %v2489
  %v2557 = vpop.f32.mrb[0].mxu0
  %v2558 = vadd.f32 0.0, %v2557
  %v2559 = vpop.f32.mrb[0].mxu0
  %2560 = vdwg.mxu0
  %v2561 = vld [vmem:[%s1 + $0x240] sm:$0xff]
  %v2562 = vld [vmem:[%s1 + $0x248] sm:$0xff]
  %v2563 = vld [vmem:[%s1 + $0x250] sm:$0xff]
  %v2564 = vld [vmem:[%s1 + $0x258] sm:$0xff]
  %v2565 = vld [vmem:[%s1 + $0x260] sm:$0xff]
  %v2566 = vld [vmem:[%s1 + $0x268] sm:$0xff]
  %v2567 = vld [vmem:[%s1 + $0x270] sm:$0xff]
  %v2568 = vld [vmem:[%s1 + $0x278] sm:$0xff]
  %v2570 = vsel %vm272, %v2558, 0
  %2572 = vmatprep.subr.mxu0 0.0
  %2573 = vmatpush1.msra.mxu0 %v2561
  %2574 = vmatprep.subr.mxu0 0.0
  %2575 = vmatpush1.msra.mxu0 %v2562
  %2576 = vmatprep.subr.mxu0 0.0
  %2577 = vmatpush1.msra.mxu0 %v2563
  %2578 = vmatprep.subr.mxu0 0.0
  %2579 = vmatpush1.msra.mxu0 %v2564
  %2580 = vmatprep.subr.mxu0 0.0
  %2581 = vmatpush1.msra.mxu0 %v2565
  %2582 = vmatprep.subr.mxu0 0.0
  %2583 = vmatpush1.msra.mxu0 %v2566
  %2584 = vmatprep.subr.mxu0 0.0
  %2585 = vmatpush1.msra.mxu0 %v2567
  %2586 = vmatprep.subr.mxu0 0.0
  %2587 = vmatpush1.msra.mxu0 %v2568
  %2588 = vmatprep.subr.mxu0 0.0
  %2589 = vmatpush1.msra.mxu0 0.0
  %2590 = vmatprep.subr.mxu0 0.0
  %2591 = vmatpush1.msra.mxu0 0.0
  %2592 = vmatprep.subr.mxu0 0.0
  %2593 = vmatpush1.msra.mxu0 0.0
  %2594 = vmatprep.subr.mxu0 0.0
  %2595 = vmatpush1.msra.mxu0 0.0
  %2596 = vmatprep.subr.mxu0 0.0
  %2597 = vmatpush1.msra.mxu0 0.0
  %2598 = vmatprep.subr.mxu0 0.0
  %2599 = vmatpush1.msra.mxu0 0.0
  %2600 = vmatprep.subr.mxu0 0.0
  %2601 = vmatpush1.msra.mxu0 0.0
  %2602 = vmatprep.subr.mxu0 0.0
  %2603 = vmatpush1.msra.mxu0 0.0
  %2604 = vmatprep.subr.mxu0 0.0
  %2605 = vmatpush1.msra.mxu0 0.0
  %2606 = vmatprep.subr.mxu0 0.0
  %2607 = vmatpush1.msra.mxu0 0.0
  %2608 = vmatprep.subr.mxu0 0.0
  %2609 = vmatpush1.msra.mxu0 0.0
  %2610 = vmatprep.subr.mxu0 0.0
  %2611 = vmatpush1.msra.mxu0 0.0
  %2612 = vmatprep.subr.mxu0 0.0
  %2613 = vmatpush1.msra.mxu0 0.0
  %2614 = vmatprep.subr.mxu0 0.0
  %2615 = vmatpush1.msra.mxu0 0.0
  %2616 = vmatprep.subr.mxu0 0.0
  %2617 = vmatpush1.msra.mxu0 0.0
  %2618 = vmatprep.subr.mxu0 0.0
  %2619 = vmatpush1.msra.mxu0 0.0
  %2620 = vmatprep.subr.mxu0 0.0
  %2621 = vmatpush1.msra.mxu0 0.0
  %2622 = vmatprep.subr.mxu0 0.0
  %2623 = vmatpush1.msra.mxu0 0.0
  %2624 = vmatprep.subr.mxu0 0.0
  %2625 = vmatpush1.msra.mxu0 0.0
  %2626 = vmatprep.subr.mxu0 0.0
  %2627 = vmatpush1.msra.mxu0 0.0
  %2628 = vmatprep.subr.mxu0 0.0
  %2629 = vmatpush1.msra.mxu0 0.0
  %2630 = vmatprep.subr.mxu0 0.0
  %2631 = vmatpush1.msra.mxu0 0.0
  %2632 = vmatprep.subr.mxu0 0.0
  %2633 = vmatpush1.msra.mxu0 0.0
  %2634 = vmatprep.subr.mxu0 0.0
  %2635 = vmatpush1.msra.mxu0 0.0
  %2636 = vmatprep.mubr.f32.mxu0 0.0
  %2637 = vmatmul.mubr.f32.gmra.mrb[0].mxu0 %v2570
  %v2638 = vpop.f32.mrb[0].mxu0
  %v2639 = vadd.f32 0.0, %v2638
  %v2640 = vpop.f32.mrb[0].mxu0
  %2641 = vdwg.mxu0
  %v2642 = vadd.f32 %v2485, %v2639
  %v2643 = vld [vmem:[%s2 + $0x1] sm:$0x1]
  %v2644 = vlaneseq
  %v2645 = vshrl.u32 %v2644, 7
  %v2646 = vsub.s32 0, %v2645
  %v2647 = vrot.slane %v2643, %v2646
  %v2648 = vadd.f32 %v2642, %v2647
  %v2649 = vld [vmem:[%s2 + $0x4] sm:$0x1]
  %v2650 = vld [vmem:[%s2 + $0x5] sm:$0x1]
  %v2651 = vld [vmem:[%s12] sm:$0xff]
  %v2652 = vld [vmem:[%s12 + $0x8] sm:$0xff]
  %v2653 = vld [vmem:[%s12 + $0x10] sm:$0xff]
  %v2654 = vld [vmem:[%s12 + $0x18] sm:$0xff]
  %v2655 = vld [vmem:[%s12 + $0x20] sm:$0xff]
  %v2656 = vld [vmem:[%s12 + $0x28] sm:$0xff]
  %v2657 = vld [vmem:[%s12 + $0x30] sm:$0xff]
  %v2658 = vld [vmem:[%s12 + $0x38] sm:$0xff]
  %v2659 = vld [vmem:[%s12 + $0x40] sm:$0xff]
  %v2660 = vld [vmem:[%s12 + $0x48] sm:$0xff]
  %v2661 = vld [vmem:[%s12 + $0x50] sm:$0xff]
  %v2662 = vld [vmem:[%s12 + $0x58] sm:$0xff]
  %v2663 = vld [vmem:[%s12 + $0x60] sm:$0xff]
  %v2664 = vld [vmem:[%s12 + $0x68] sm:$0xff]
  %v2665 = vld [vmem:[%s12 + $0x70] sm:$0xff]
  %v2666 = vld [vmem:[%s12 + $0x78] sm:$0xff]
  %v2667 = vld [vmem:[%s13] sm:$0xff]
  %v2668 = vld [vmem:[%s13 + $0x8] sm:$0xff]
  %2669 = vmatprep.subr.mxu0 0.0
  %2670 = vmatpush1.msra.mxu0 %v2651
  %2671 = vmatprep.subr.mxu0 0.0
  %2672 = vmatpush1.msra.mxu0 %v2652
  %2673 = vmatprep.subr.mxu0 0.0
  %2674 = vmatpush1.msra.mxu0 %v2653
  %2675 = vmatprep.subr.mxu0 0.0
  %2676 = vmatpush1.msra.mxu0 %v2654
  %2677 = vmatprep.subr.mxu0 0.0
  %2678 = vmatpush1.msra.mxu0 %v2655
  %2679 = vmatprep.subr.mxu0 0.0
  %2680 = vmatpush1.msra.mxu0 %v2656
  %2681 = vmatprep.subr.mxu0 0.0
  %2682 = vmatpush1.msra.mxu0 %v2657
  %2683 = vmatprep.subr.mxu0 0.0
  %2684 = vmatpush1.msra.mxu0 %v2658
  %2685 = vmatprep.subr.mxu0 0.0
  %2686 = vmatpush1.msra.mxu0 %v2659
  %2687 = vmatprep.subr.mxu0 0.0
  %2688 = vmatpush1.msra.mxu0 %v2660
  %2689 = vmatprep.subr.mxu0 0.0
  %2690 = vmatpush1.msra.mxu0 %v2661
  %2691 = vmatprep.subr.mxu0 0.0
  %2692 = vmatpush1.msra.mxu0 %v2662
  %2693 = vmatprep.subr.mxu0 0.0
  %2694 = vmatpush1.msra.mxu0 %v2663
  %2695 = vmatprep.subr.mxu0 0.0
  %2696 = vmatpush1.msra.mxu0 %v2664
  %2697 = vmatprep.subr.mxu0 0.0
  %2698 = vmatpush1.msra.mxu0 %v2665
  %2699 = vmatprep.subr.mxu0 0.0
  %2700 = vmatpush1.msra.mxu0 %v2666
  %2701 = vmatprep.subr.mxu0 0.0
  %2702 = vmatpush1.msra.mxu0 0.0
  %2703 = vmatprep.subr.mxu0 0.0
  %2704 = vmatpush1.msra.mxu0 0.0
  %2705 = vmatprep.subr.mxu0 0.0
  %2706 = vmatpush1.msra.mxu0 0.0
  %2707 = vmatprep.subr.mxu0 0.0
  %2708 = vmatpush1.msra.mxu0 0.0
  %2709 = vmatprep.subr.mxu0 0.0
  %2710 = vmatpush1.msra.mxu0 0.0
  %2711 = vmatprep.subr.mxu0 0.0
  %2712 = vmatpush1.msra.mxu0 0.0
  %2713 = vmatprep.subr.mxu0 0.0
  %2714 = vmatpush1.msra.mxu0 0.0
  %2715 = vmatprep.subr.mxu0 0.0
  %2716 = vmatpush1.msra.mxu0 0.0
  %2717 = vmatprep.subr.mxu0 0.0
  %2718 = vmatpush1.msra.mxu0 0.0
  %2719 = vmatprep.subr.mxu0 0.0
  %2720 = vmatpush1.msra.mxu0 0.0
  %2721 = vmatprep.subr.mxu0 0.0
  %2722 = vmatpush1.msra.mxu0 0.0
  %2723 = vmatprep.subr.mxu0 0.0
  %2724 = vmatpush1.msra.mxu0 0.0
  %2725 = vmatprep.subr.mxu0 0.0
  %2726 = vmatpush1.msra.mxu0 0.0
  %2727 = vmatprep.subr.mxu0 0.0
  %2728 = vmatpush1.msra.mxu0 0.0
  %2729 = vmatprep.subr.mxu0 0.0
  %2730 = vmatpush1.msra.mxu0 0.0
  %2731 = vmatprep.subr.mxu0 0.0
  %2732 = vmatpush1.msra.mxu0 0.0
  %2733 = vmatprep.mubr.f32.mxu0 0.0
  %2734 = vmatmul.mubr.f32.gmra.mrb[0].mxu0 %v2648
  %v2735 = vpop.f32.mrb[0].mxu0
  %v2736 = vadd.f32 0.0, %v2735
  %v2737 = vpop.f32.mrb[0].mxu0
  %2738 = vdwg.mxu0
  %v2739 = vsel %vm1861, %v2736, 0.0
  %v2740 = vrot.slane %v2739, 4
  %v2741 = vadd.f32 %v2739, %v2740
  %v2742 = vrot.slane %v2741, 2
  %v2743 = vadd.f32 %v2741, %v2742
  %v2744 = vrot.slane %v2743, 1
  %v2745 = vadd.f32 %v2743, %v2744
  %v2746 = vmul.f32 %v2648, %v2648
  %2747 = vmatprep.subr.mxu0 0.0
  %2748 = vmatpush1.msra.mxu0 %v2651
  %2749 = vmatprep.subr.mxu0 0.0
  %2750 = vmatpush1.msra.mxu0 %v2652
  %2751 = vmatprep.subr.mxu0 0.0
  %2752 = vmatpush1.msra.mxu0 %v2653
  %2753 = vmatprep.subr.mxu0 0.0
  %2754 = vmatpush1.msra.mxu0 %v2654
  %2755 = vmatprep.subr.mxu0 0.0
  %2756 = vmatpush1.msra.mxu0 %v2655
  %2757 = vmatprep.subr.mxu0 0.0
  %2758 = vmatpush1.msra.mxu0 %v2656
  %2759 = vmatprep.subr.mxu0 0.0
  %2760 = vmatpush1.msra.mxu0 %v2657
  %2761 = vmatprep.subr.mxu0 0.0
  %2762 = vmatpush1.msra.mxu0 %v2658
  %2763 = vmatprep.subr.mxu0 0.0
  %2764 = vmatpush1.msra.mxu0 %v2659
  %2765 = vmatprep.subr.mxu0 0.0
  %2766 = vmatpush1.msra.mxu0 %v2660
  %2767 = vmatprep.subr.mxu0 0.0
  %2768 = vmatpush1.msra.mxu0 %v2661
  %2769 = vmatprep.subr.mxu0 0.0
  %2770 = vmatpush1.msra.mxu0 %v2662
  %2771 = vmatprep.subr.mxu0 0.0
  %2772 = vmatpush1.msra.mxu0 %v2663
  %2773 = vmatprep.subr.mxu0 0.0
  %2774 = vmatpush1.msra.mxu0 %v2664
  %2775 = vmatprep.subr.mxu0 0.0
  %2776 = vmatpush1.msra.mxu0 %v2665
  %2777 = vmatprep.subr.mxu0 0.0
  %2778 = vmatpush1.msra.mxu0 %v2666
  %2779 = vmatprep.subr.mxu0 0.0
  %2780 = vmatpush1.msra.mxu0 0.0
  %2781 = vmatprep.subr.mxu0 0.0
  %2782 = vmatpush1.msra.mxu0 0.0
  %2783 = vmatprep.subr.mxu0 0.0
  %2784 = vmatpush1.msra.mxu0 0.0
  %2785 = vmatprep.subr.mxu0 0.0
  %2786 = vmatpush1.msra.mxu0 0.0
  %2787 = vmatprep.subr.mxu0 0.0
  %2788 = vmatpush1.msra.mxu0 0.0
  %2789 = vmatprep.subr.mxu0 0.0
  %2790 = vmatpush1.msra.mxu0 0.0
  %2791 = vmatprep.subr.mxu0 0.0
  %2792 = vmatpush1.msra.mxu0 0.0
  %2793 = vmatprep.subr.mxu0 0.0
  %2794 = vmatpush1.msra.mxu0 0.0
  %2795 = vmatprep.subr.mxu0 0.0
  %2796 = vmatpush1.msra.mxu0 0.0
  %2797 = vmatprep.subr.mxu0 0.0
  %2798 = vmatpush1.msra.mxu0 0.0
  %2799 = vmatprep.subr.mxu0 0.0
  %2800 = vmatpush1.msra.mxu0 0.0
  %2801 = vmatprep.subr.mxu0 0.0
  %2802 = vmatpush1.msra.mxu0 0.0
  %2803 = vmatprep.subr.mxu0 0.0
  %2804 = vmatpush1.msra.mxu0 0.0
  %2805 = vmatprep.subr.mxu0 0.0
  %2806 = vmatpush1.msra.mxu0 0.0
  %2807 = vmatprep.subr.mxu0 0.0
  %2808 = vmatpush1.msra.mxu0 0.0
  %2809 = vmatprep.subr.mxu0 0.0
  %2810 = vmatpush1.msra.mxu0 0.0
  %2811 = vmatprep.mubr.f32.mxu0 0.0
  %2812 = vmatmul.mubr.f32.gmra.mrb[0].mxu0 %v2746
  %v2813 = vpop.f32.mrb[0].mxu0
  %v2814 = vadd.f32 0.0, %v2813
  %v2815 = vpop.f32.mrb[0].mxu0
  %2816 = vdwg.mxu0
  %v2817 = vsel %vm1861, %v2814, 0.0
  %v2818 = vrot.slane %v2817, 4
  %v2819 = vadd.f32 %v2817, %v2818
  %v2820 = vrot.slane %v2819, 2
  %v2821 = vadd.f32 %v2819, %v2820
  %v2822 = vrot.slane %v2821, 1
  %v2823 = vadd.f32 %v2821, %v2822
  %v2824 = vmul.f32 %v2745, 0.03125
  %v2825 = vmul.f32 %v2823, 0.03125
  %v2826 = vmul.f32 %v2824, %v2824
  %v2827 = vsub.f32 %v2825, %v2826
  %v2828 = vmax.f32 %v2827, 0.0
  %v2829 = vadd.f32 %v2828, 1e-05
  %v2830 = vrsqrt.pop %v2829
  %v2831 = vmul.f32 %v2649, %v2830
  %v2832 = vmul.f32 %v2824, %v2831
  %v2833 = vsub.f32 %v2650, %v2832
  %v2835 = vsel %vm1861, %v2831, 0
  %2837 = vmatprep.subr.mxu0 0.0
  %2838 = vmatpush1.msra.mxu0 %v2667
  %2839 = vmatprep.subr.mxu0 0.0
  %2840 = vmatpush1.msra.mxu0 %v2668
  %2841 = vmatprep.subr.mxu0 0.0
  %2842 = vmatpush1.msra.mxu0 0.0
  %2843 = vmatprep.subr.mxu0 0.0
  %2844 = vmatpush1.msra.mxu0 0.0
  %2845 = vmatprep.subr.mxu0 0.0
  %2846 = vmatpush1.msra.mxu0 0.0
  %2847 = vmatprep.subr.mxu0 0.0
  %2848 = vmatpush1.msra.mxu0 0.0
  %2849 = vmatprep.subr.mxu0 0.0
  %2850 = vmatpush1.msra.mxu0 0.0
  %2851 = vmatprep.subr.mxu0 0.0
  %2852 = vmatpush1.msra.mxu0 0.0
  %2853 = vmatprep.subr.mxu0 0.0
  %2854 = vmatpush1.msra.mxu0 0.0
  %2855 = vmatprep.subr.mxu0 0.0
  %2856 = vmatpush1.msra.mxu0 0.0
  %2857 = vmatprep.subr.mxu0 0.0
  %2858 = vmatpush1.msra.mxu0 0.0
  %2859 = vmatprep.subr.mxu0 0.0
  %2860 = vmatpush1.msra.mxu0 0.0
  %2861 = vmatprep.subr.mxu0 0.0
  %2862 = vmatpush1.msra.mxu0 0.0
  %2863 = vmatprep.subr.mxu0 0.0
  %2864 = vmatpush1.msra.mxu0 0.0
  %2865 = vmatprep.subr.mxu0 0.0
  %2866 = vmatpush1.msra.mxu0 0.0
  %2867 = vmatprep.subr.mxu0 0.0
  %2868 = vmatpush1.msra.mxu0 0.0
  %2869 = vmatprep.subr.mxu0 0.0
  %2870 = vmatpush1.msra.mxu0 0.0
  %2871 = vmatprep.subr.mxu0 0.0
  %2872 = vmatpush1.msra.mxu0 0.0
  %2873 = vmatprep.subr.mxu0 0.0
  %2874 = vmatpush1.msra.mxu0 0.0
  %2875 = vmatprep.subr.mxu0 0.0
  %2876 = vmatpush1.msra.mxu0 0.0
  %2877 = vmatprep.subr.mxu0 0.0
  %2878 = vmatpush1.msra.mxu0 0.0
  %2879 = vmatprep.subr.mxu0 0.0
  %2880 = vmatpush1.msra.mxu0 0.0
  %2881 = vmatprep.subr.mxu0 0.0
  %2882 = vmatpush1.msra.mxu0 0.0
  %2883 = vmatprep.subr.mxu0 0.0
  %2884 = vmatpush1.msra.mxu0 0.0
  %2885 = vmatprep.subr.mxu0 0.0
  %2886 = vmatpush1.msra.mxu0 0.0
  %2887 = vmatprep.subr.mxu0 0.0
  %2888 = vmatpush1.msra.mxu0 0.0
  %2889 = vmatprep.subr.mxu0 0.0
  %2890 = vmatpush1.msra.mxu0 0.0
  %2891 = vmatprep.subr.mxu0 0.0
  %2892 = vmatpush1.msra.mxu0 0.0
  %2893 = vmatprep.subr.mxu0 0.0
  %2894 = vmatpush1.msra.mxu0 0.0
  %2895 = vmatprep.subr.mxu0 0.0
  %2896 = vmatpush1.msra.mxu0 0.0
  %2897 = vmatprep.subr.mxu0 0.0
  %2898 = vmatpush1.msra.mxu0 0.0
  %2899 = vmatprep.subr.mxu0 0.0
  %2900 = vmatpush1.msra.mxu0 0.0
  %2901 = vmatprep.mubr.f32.mxu0 0.0
  %2902 = vmatmul.mubr.f32.gmra.mrb[0].mxu0 %v2835
  %v2903 = vpop.f32.mrb[0].mxu0
  %v2904 = vadd.f32 0.0, %v2903
  %v2905 = vpop.f32.mrb[0].mxu0
  %2906 = vdwg.mxu0
  %v2907 = vlaneseq
  %v2908 = vshrl.u32 %v2907, 7
  %v2909 = vsub.s32 0, %v2908
  %v2910 = vrot.slane %v2904, %v2909
  %v2911 = vmul.f32 %v2648, %v2910
  %v2913 = vsel %vm1861, %v2833, 0
  %2915 = vmatprep.subr.mxu0 0.0
  %2916 = vmatpush1.msra.mxu0 %v2667
  %2917 = vmatprep.subr.mxu0 0.0
  %2918 = vmatpush1.msra.mxu0 %v2668
  %2919 = vmatprep.subr.mxu0 0.0
  %2920 = vmatpush1.msra.mxu0 0.0
  %2921 = vmatprep.subr.mxu0 0.0
  %2922 = vmatpush1.msra.mxu0 0.0
  %2923 = vmatprep.subr.mxu0 0.0
  %2924 = vmatpush1.msra.mxu0 0.0
  %2925 = vmatprep.subr.mxu0 0.0
  %2926 = vmatpush1.msra.mxu0 0.0
  %2927 = vmatprep.subr.mxu0 0.0
  %2928 = vmatpush1.msra.mxu0 0.0
  %2929 = vmatprep.subr.mxu0 0.0
  %2930 = vmatpush1.msra.mxu0 0.0
  %2931 = vmatprep.subr.mxu0 0.0
  %2932 = vmatpush1.msra.mxu0 0.0
  %2933 = vmatprep.subr.mxu0 0.0
  %2934 = vmatpush1.msra.mxu0 0.0
  %2935 = vmatprep.subr.mxu0 0.0
  %2936 = vmatpush1.msra.mxu0 0.0
  %2937 = vmatprep.subr.mxu0 0.0
  %2938 = vmatpush1.msra.mxu0 0.0
  %2939 = vmatprep.subr.mxu0 0.0
  %2940 = vmatpush1.msra.mxu0 0.0
  %2941 = vmatprep.subr.mxu0 0.0
  %2942 = vmatpush1.msra.mxu0 0.0
  %2943 = vmatprep.subr.mxu0 0.0
  %2944 = vmatpush1.msra.mxu0 0.0
  %2945 = vmatprep.subr.mxu0 0.0
  %2946 = vmatpush1.msra.mxu0 0.0
  %2947 = vmatprep.subr.mxu0 0.0
  %2948 = vmatpush1.msra.mxu0 0.0
  %2949 = vmatprep.subr.mxu0 0.0
  %2950 = vmatpush1.msra.mxu0 0.0
  %2951 = vmatprep.subr.mxu0 0.0
  %2952 = vmatpush1.msra.mxu0 0.0
  %2953 = vmatprep.subr.mxu0 0.0
  %2954 = vmatpush1.msra.mxu0 0.0
  %2955 = vmatprep.subr.mxu0 0.0
  %2956 = vmatpush1.msra.mxu0 0.0
  %2957 = vmatprep.subr.mxu0 0.0
  %2958 = vmatpush1.msra.mxu0 0.0
  %2959 = vmatprep.subr.mxu0 0.0
  %2960 = vmatpush1.msra.mxu0 0.0
  %2961 = vmatprep.subr.mxu0 0.0
  %2962 = vmatpush1.msra.mxu0 0.0
  %2963 = vmatprep.subr.mxu0 0.0
  %2964 = vmatpush1.msra.mxu0 0.0
  %2965 = vmatprep.subr.mxu0 0.0
  %2966 = vmatpush1.msra.mxu0 0.0
  %2967 = vmatprep.subr.mxu0 0.0
  %2968 = vmatpush1.msra.mxu0 0.0
  %2969 = vmatprep.subr.mxu0 0.0
  %2970 = vmatpush1.msra.mxu0 0.0
  %2971 = vmatprep.subr.mxu0 0.0
  %2972 = vmatpush1.msra.mxu0 0.0
  %2973 = vmatprep.subr.mxu0 0.0
  %2974 = vmatpush1.msra.mxu0 0.0
  %2975 = vmatprep.subr.mxu0 0.0
  %2976 = vmatpush1.msra.mxu0 0.0
  %2977 = vmatprep.subr.mxu0 0.0
  %2978 = vmatpush1.msra.mxu0 0.0
  %2979 = vmatprep.mubr.f32.mxu0 0.0
  %2980 = vmatmul.mubr.f32.gmra.mrb[0].mxu0 %v2913
  %v2981 = vpop.f32.mrb[0].mxu0
  %v2982 = vadd.f32 0.0, %v2981
  %v2983 = vpop.f32.mrb[0].mxu0
  %2984 = vdwg.mxu0
  %v2985 = vlaneseq
  %v2986 = vshrl.u32 %v2985, 7
  %v2987 = vsub.s32 0, %v2986
  %v2988 = vrot.slane %v2982, %v2987
  %v2989 = vadd.f32 %v2911, %v2988
  %v2990 = vmax.f32 %v2989, 0.0
  %v2991 = vld [vmem:[%s7] sm:$0xf]
  %v2993 = vsel %vm1213, %v2991, 0
  %2995 = vmatprep.subr.mxu0 0.0
  %2996 = vmatpush1.msra.mxu0 %v2990
  %2997 = vmatprep.subr.mxu0 0.0
  %2998 = vmatpush1.msra.mxu0 0.0
  %2999 = vmatprep.subr.mxu0 0.0
  %3000 = vmatpush1.msra.mxu0 0.0
  %3001 = vmatprep.subr.mxu0 0.0
  %3002 = vmatpush1.msra.mxu0 0.0
  %3003 = vmatprep.subr.mxu0 0.0
  %3004 = vmatpush1.msra.mxu0 0.0
  %3005 = vmatprep.subr.mxu0 0.0
  %3006 = vmatpush1.msra.mxu0 0.0
  %3007 = vmatprep.subr.mxu0 0.0
  %3008 = vmatpush1.msra.mxu0 0.0
  %3009 = vmatprep.subr.mxu0 0.0
  %3010 = vmatpush1.msra.mxu0 0.0
  %3011 = vmatprep.subr.mxu0 0.0
  %3012 = vmatpush1.msra.mxu0 0.0
  %3013 = vmatprep.subr.mxu0 0.0
  %3014 = vmatpush1.msra.mxu0 0.0
  %3015 = vmatprep.subr.mxu0 0.0
  %3016 = vmatpush1.msra.mxu0 0.0
  %3017 = vmatprep.subr.mxu0 0.0
  %3018 = vmatpush1.msra.mxu0 0.0
  %3019 = vmatprep.subr.mxu0 0.0
  %3020 = vmatpush1.msra.mxu0 0.0
  %3021 = vmatprep.subr.mxu0 0.0
  %3022 = vmatpush1.msra.mxu0 0.0
  %3023 = vmatprep.subr.mxu0 0.0
  %3024 = vmatpush1.msra.mxu0 0.0
  %3025 = vmatprep.subr.mxu0 0.0
  %3026 = vmatpush1.msra.mxu0 0.0
  %3027 = vmatprep.subr.mxu0 0.0
  %3028 = vmatpush1.msra.mxu0 0.0
  %3029 = vmatprep.subr.mxu0 0.0
  %3030 = vmatpush1.msra.mxu0 0.0
  %3031 = vmatprep.subr.mxu0 0.0
  %3032 = vmatpush1.msra.mxu0 0.0
  %3033 = vmatprep.subr.mxu0 0.0
  %3034 = vmatpush1.msra.mxu0 0.0
  %3035 = vmatprep.subr.mxu0 0.0
  %3036 = vmatpush1.msra.mxu0 0.0
  %3037 = vmatprep.subr.mxu0 0.0
  %3038 = vmatpush1.msra.mxu0 0.0
  %3039 = vmatprep.subr.mxu0 0.0
  %3040 = vmatpush1.msra.mxu0 0.0
  %3041 = vmatprep.subr.mxu0 0.0
  %3042 = vmatpush1.msra.mxu0 0.0
  %3043 = vmatprep.subr.mxu0 0.0
  %3044 = vmatpush1.msra.mxu0 0.0
  %3045 = vmatprep.subr.mxu0 0.0
  %3046 = vmatpush1.msra.mxu0 0.0
  %3047 = vmatprep.subr.mxu0 0.0
  %3048 = vmatpush1.msra.mxu0 0.0
  %3049 = vmatprep.subr.mxu0 0.0
  %3050 = vmatpush1.msra.mxu0 0.0
  %3051 = vmatprep.subr.mxu0 0.0
  %3052 = vmatpush1.msra.mxu0 0.0
  %3053 = vmatprep.subr.mxu0 0.0
  %3054 = vmatpush1.msra.mxu0 0.0
  %3055 = vmatprep.subr.mxu0 0.0
  %3056 = vmatpush1.msra.mxu0 0.0
  %3057 = vmatprep.subr.mxu0 0.0
  %3058 = vmatpush1.msra.mxu0 0.0
  %3059 = vmatprep.mubr.f32.mxu0 0.0
  %3060 = vmatmul.mubr.f32.gmra.mrb[0].mxu0 %v2993
  %v3061 = vpop.f32.mrb[0].mxu0
  %v3062 = vadd.f32 0.0, %v3061
  %v3063 = vpop.f32.mrb[0].mxu0
  %3064 = vdwg.mxu0
  %s3065 = scalar_lea.vmem %s7, 4
  %v3066 = vld [vmem:[%s3065] sm:$0xf]
  %v3068 = vsel %vm1213, %v3066, 0
  %3070 = vmatprep.subr.mxu0 0.0
  %3071 = vmatpush1.msra.mxu0 %v2990
  %3072 = vmatprep.subr.mxu0 0.0
  %3073 = vmatpush1.msra.mxu0 0.0
  %3074 = vmatprep.subr.mxu0 0.0
  %3075 = vmatpush1.msra.mxu0 0.0
  %3076 = vmatprep.subr.mxu0 0.0
  %3077 = vmatpush1.msra.mxu0 0.0
  %3078 = vmatprep.subr.mxu0 0.0
  %3079 = vmatpush1.msra.mxu0 0.0
  %3080 = vmatprep.subr.mxu0 0.0
  %3081 = vmatpush1.msra.mxu0 0.0
  %3082 = vmatprep.subr.mxu0 0.0
  %3083 = vmatpush1.msra.mxu0 0.0
  %3084 = vmatprep.subr.mxu0 0.0
  %3085 = vmatpush1.msra.mxu0 0.0
  %3086 = vmatprep.subr.mxu0 0.0
  %3087 = vmatpush1.msra.mxu0 0.0
  %3088 = vmatprep.subr.mxu0 0.0
  %3089 = vmatpush1.msra.mxu0 0.0
  %3090 = vmatprep.subr.mxu0 0.0
  %3091 = vmatpush1.msra.mxu0 0.0
  %3092 = vmatprep.subr.mxu0 0.0
  %3093 = vmatpush1.msra.mxu0 0.0
  %3094 = vmatprep.subr.mxu0 0.0
  %3095 = vmatpush1.msra.mxu0 0.0
  %3096 = vmatprep.subr.mxu0 0.0
  %3097 = vmatpush1.msra.mxu0 0.0
  %3098 = vmatprep.subr.mxu0 0.0
  %3099 = vmatpush1.msra.mxu0 0.0
  %3100 = vmatprep.subr.mxu0 0.0
  %3101 = vmatpush1.msra.mxu0 0.0
  %3102 = vmatprep.subr.mxu0 0.0
  %3103 = vmatpush1.msra.mxu0 0.0
  %3104 = vmatprep.subr.mxu0 0.0
  %3105 = vmatpush1.msra.mxu0 0.0
  %3106 = vmatprep.subr.mxu0 0.0
  %3107 = vmatpush1.msra.mxu0 0.0
  %3108 = vmatprep.subr.mxu0 0.0
  %3109 = vmatpush1.msra.mxu0 0.0
  %3110 = vmatprep.subr.mxu0 0.0
  %3111 = vmatpush1.msra.mxu0 0.0
  %3112 = vmatprep.subr.mxu0 0.0
  %3113 = vmatpush1.msra.mxu0 0.0
  %3114 = vmatprep.subr.mxu0 0.0
  %3115 = vmatpush1.msra.mxu0 0.0
  %3116 = vmatprep.subr.mxu0 0.0
  %3117 = vmatpush1.msra.mxu0 0.0
  %3118 = vmatprep.subr.mxu0 0.0
  %3119 = vmatpush1.msra.mxu0 0.0
  %3120 = vmatprep.subr.mxu0 0.0
  %3121 = vmatpush1.msra.mxu0 0.0
  %3122 = vmatprep.subr.mxu0 0.0
  %3123 = vmatpush1.msra.mxu0 0.0
  %3124 = vmatprep.subr.mxu0 0.0
  %3125 = vmatpush1.msra.mxu0 0.0
  %3126 = vmatprep.subr.mxu0 0.0
  %3127 = vmatpush1.msra.mxu0 0.0
  %3128 = vmatprep.subr.mxu0 0.0
  %3129 = vmatpush1.msra.mxu0 0.0
  %3130 = vmatprep.subr.mxu0 0.0
  %3131 = vmatpush1.msra.mxu0 0.0
  %3132 = vmatprep.subr.mxu0 0.0
  %3133 = vmatpush1.msra.mxu0 0.0
  %3134 = vmatprep.mubr.f32.mxu0 0.0
  %3135 = vmatmul.mubr.f32.gmra.mrb[0].mxu0 %v3068
  %v3136 = vpop.f32.mrb[0].mxu0
  %v3137 = vadd.f32 0.0, %v3136
  %v3138 = vpop.f32.mrb[0].mxu0
  %3139 = vdwg.mxu0
  %v3140 = vmax.f32 %v3062, %v3137
  %v3141 = vld [vmem:[%s8] sm:$0xff]
  %v3142 = vld [vmem:[%s8 + $0x8] sm:$0xff]
  %v3143 = vld [vmem:[%s8 + $0x10] sm:$0xff]
  %v3144 = vld [vmem:[%s8 + $0x18] sm:$0xff]
  %v3145 = vld [vmem:[%s8 + $0x20] sm:$0xff]
  %v3146 = vld [vmem:[%s8 + $0x28] sm:$0xff]
  %v3147 = vld [vmem:[%s8 + $0x30] sm:$0xff]
  %v3148 = vld [vmem:[%s8 + $0x38] sm:$0xff]
  %v3149 = vld [vmem:[%s8 + $0x40] sm:$0xff]
  %v3150 = vld [vmem:[%s8 + $0x48] sm:$0xff]
  %v3151 = vld [vmem:[%s8 + $0x50] sm:$0xff]
  %v3152 = vld [vmem:[%s8 + $0x58] sm:$0xff]
  %v3153 = vld [vmem:[%s8 + $0x60] sm:$0xff]
  %v3154 = vld [vmem:[%s8 + $0x68] sm:$0xff]
  %v3155 = vld [vmem:[%s8 + $0x70] sm:$0xff]
  %v3156 = vld [vmem:[%s8 + $0x78] sm:$0xff]
  %3157 = vmatprep.subr.mxu0 0.0
  %3158 = vmatpush1.msra.mxu0 %v3141
  %3159 = vmatprep.subr.mxu0 0.0
  %3160 = vmatpush1.msra.mxu0 %v3142
  %3161 = vmatprep.subr.mxu0 0.0
  %3162 = vmatpush1.msra.mxu0 %v3143
  %3163 = vmatprep.subr.mxu0 0.0
  %3164 = vmatpush1.msra.mxu0 %v3144
  %3165 = vmatprep.subr.mxu0 0.0
  %3166 = vmatpush1.msra.mxu0 %v3145
  %3167 = vmatprep.subr.mxu0 0.0
  %3168 = vmatpush1.msra.mxu0 %v3146
  %3169 = vmatprep.subr.mxu0 0.0
  %3170 = vmatpush1.msra.mxu0 %v3147
  %3171 = vmatprep.subr.mxu0 0.0
  %3172 = vmatpush1.msra.mxu0 %v3148
  %3173 = vmatprep.subr.mxu0 0.0
  %3174 = vmatpush1.msra.mxu0 %v3149
  %3175 = vmatprep.subr.mxu0 0.0
  %3176 = vmatpush1.msra.mxu0 %v3150
  %3177 = vmatprep.subr.mxu0 0.0
  %3178 = vmatpush1.msra.mxu0 %v3151
  %3179 = vmatprep.subr.mxu0 0.0
  %3180 = vmatpush1.msra.mxu0 %v3152
  %3181 = vmatprep.subr.mxu0 0.0
  %3182 = vmatpush1.msra.mxu0 %v3153
  %3183 = vmatprep.subr.mxu0 0.0
  %3184 = vmatpush1.msra.mxu0 %v3154
  %3185 = vmatprep.subr.mxu0 0.0
  %3186 = vmatpush1.msra.mxu0 %v3155
  %3187 = vmatprep.subr.mxu0 0.0
  %3188 = vmatpush1.msra.mxu0 %v3156
  %3189 = vmatprep.subr.mxu0 0.0
  %3190 = vmatpush1.msra.mxu0 0.0
  %3191 = vmatprep.subr.mxu0 0.0
  %3192 = vmatpush1.msra.mxu0 0.0
  %3193 = vmatprep.subr.mxu0 0.0
  %3194 = vmatpush1.msra.mxu0 0.0
  %3195 = vmatprep.subr.mxu0 0.0
  %3196 = vmatpush1.msra.mxu0 0.0
  %3197 = vmatprep.subr.mxu0 0.0
  %3198 = vmatpush1.msra.mxu0 0.0
  %3199 = vmatprep.subr.mxu0 0.0
  %3200 = vmatpush1.msra.mxu0 0.0
  %3201 = vmatprep.subr.mxu0 0.0
  %3202 = vmatpush1.msra.mxu0 0.0
  %3203 = vmatprep.subr.mxu0 0.0
  %3204 = vmatpush1.msra.mxu0 0.0
  %3205 = vmatprep.subr.mxu0 0.0
  %3206 = vmatpush1.msra.mxu0 0.0
  %3207 = vmatprep.subr.mxu0 0.0
  %3208 = vmatpush1.msra.mxu0 0.0
  %3209 = vmatprep.subr.mxu0 0.0
  %3210 = vmatpush1.msra.mxu0 0.0
  %3211 = vmatprep.subr.mxu0 0.0
  %3212 = vmatpush1.msra.mxu0 0.0
  %3213 = vmatprep.subr.mxu0 0.0
  %3214 = vmatpush1.msra.mxu0 0.0
  %3215 = vmatprep.subr.mxu0 0.0
  %3216 = vmatpush1.msra.mxu0 0.0
  %3217 = vmatprep.subr.mxu0 0.0
  %3218 = vmatpush1.msra.mxu0 0.0
  %3219 = vmatprep.subr.mxu0 0.0
  %3220 = vmatpush1.msra.mxu0 0.0
  %3221 = vmatprep.mubr.f32.mxu0 0.0
  %3222 = vmatmul.mubr.f32.gmra.mrb[0].mxu0 %v3140
  %v3223 = vpop.f32.mrb[0].mxu0
  %v3224 = vadd.f32 0.0, %v3223
  %v3225 = vpop.f32.mrb[0].mxu0
  %3226 = vdwg.mxu0
  %s3227 = scalar_lea.vmem %s8, 128
  %v3228 = vld [vmem:[%s3227] sm:$0xff]
  %v3229 = vld [vmem:[%s3227 + $0x8] sm:$0xff]
  %v3230 = vld [vmem:[%s3227 + $0x10] sm:$0xff]
  %v3231 = vld [vmem:[%s3227 + $0x18] sm:$0xff]
  %v3232 = vld [vmem:[%s3227 + $0x20] sm:$0xff]
  %v3233 = vld [vmem:[%s3227 + $0x28] sm:$0xff]
  %v3234 = vld [vmem:[%s3227 + $0x30] sm:$0xff]
  %v3235 = vld [vmem:[%s3227 + $0x38] sm:$0xff]
  %v3236 = vld [vmem:[%s3227 + $0x40] sm:$0xff]
  %v3237 = vld [vmem:[%s3227 + $0x48] sm:$0xff]
  %v3238 = vld [vmem:[%s3227 + $0x50] sm:$0xff]
  %v3239 = vld [vmem:[%s3227 + $0x58] sm:$0xff]
  %v3240 = vld [vmem:[%s3227 + $0x60] sm:$0xff]
  %v3241 = vld [vmem:[%s3227 + $0x68] sm:$0xff]
  %v3242 = vld [vmem:[%s3227 + $0x70] sm:$0xff]
  %v3243 = vld [vmem:[%s3227 + $0x78] sm:$0xff]
  %3244 = vmatprep.subr.mxu0 0.0
  %3245 = vmatpush1.msra.mxu0 %v3228
  %3246 = vmatprep.subr.mxu0 0.0
  %3247 = vmatpush1.msra.mxu0 %v3229
  %3248 = vmatprep.subr.mxu0 0.0
  %3249 = vmatpush1.msra.mxu0 %v3230
  %3250 = vmatprep.subr.mxu0 0.0
  %3251 = vmatpush1.msra.mxu0 %v3231
  %3252 = vmatprep.subr.mxu0 0.0
  %3253 = vmatpush1.msra.mxu0 %v3232
  %3254 = vmatprep.subr.mxu0 0.0
  %3255 = vmatpush1.msra.mxu0 %v3233
  %3256 = vmatprep.subr.mxu0 0.0
  %3257 = vmatpush1.msra.mxu0 %v3234
  %3258 = vmatprep.subr.mxu0 0.0
  %3259 = vmatpush1.msra.mxu0 %v3235
  %3260 = vmatprep.subr.mxu0 0.0
  %3261 = vmatpush1.msra.mxu0 %v3236
  %3262 = vmatprep.subr.mxu0 0.0
  %3263 = vmatpush1.msra.mxu0 %v3237
  %3264 = vmatprep.subr.mxu0 0.0
  %3265 = vmatpush1.msra.mxu0 %v3238
  %3266 = vmatprep.subr.mxu0 0.0
  %3267 = vmatpush1.msra.mxu0 %v3239
  %3268 = vmatprep.subr.mxu0 0.0
  %3269 = vmatpush1.msra.mxu0 %v3240
  %3270 = vmatprep.subr.mxu0 0.0
  %3271 = vmatpush1.msra.mxu0 %v3241
  %3272 = vmatprep.subr.mxu0 0.0
  %3273 = vmatpush1.msra.mxu0 %v3242
  %3274 = vmatprep.subr.mxu0 0.0
  %3275 = vmatpush1.msra.mxu0 %v3243
  %3276 = vmatprep.subr.mxu0 0.0
  %3277 = vmatpush1.msra.mxu0 0.0
  %3278 = vmatprep.subr.mxu0 0.0
  %3279 = vmatpush1.msra.mxu0 0.0
  %3280 = vmatprep.subr.mxu0 0.0
  %3281 = vmatpush1.msra.mxu0 0.0
  %3282 = vmatprep.subr.mxu0 0.0
  %3283 = vmatpush1.msra.mxu0 0.0
  %3284 = vmatprep.subr.mxu0 0.0
  %3285 = vmatpush1.msra.mxu0 0.0
  %3286 = vmatprep.subr.mxu0 0.0
  %3287 = vmatpush1.msra.mxu0 0.0
  %3288 = vmatprep.subr.mxu0 0.0
  %3289 = vmatpush1.msra.mxu0 0.0
  %3290 = vmatprep.subr.mxu0 0.0
  %3291 = vmatpush1.msra.mxu0 0.0
  %3292 = vmatprep.subr.mxu0 0.0
  %3293 = vmatpush1.msra.mxu0 0.0
  %3294 = vmatprep.subr.mxu0 0.0
  %3295 = vmatpush1.msra.mxu0 0.0
  %3296 = vmatprep.subr.mxu0 0.0
  %3297 = vmatpush1.msra.mxu0 0.0
  %3298 = vmatprep.subr.mxu0 0.0
  %3299 = vmatpush1.msra.mxu0 0.0
  %3300 = vmatprep.subr.mxu0 0.0
  %3301 = vmatpush1.msra.mxu0 0.0
  %3302 = vmatprep.subr.mxu0 0.0
  %3303 = vmatpush1.msra.mxu0 0.0
  %3304 = vmatprep.subr.mxu0 0.0
  %3305 = vmatpush1.msra.mxu0 0.0
  %3306 = vmatprep.subr.mxu0 0.0
  %3307 = vmatpush1.msra.mxu0 0.0
  %3308 = vmatprep.mubr.f32.mxu0 0.0
  %3309 = vmatmul.mubr.f32.gmra.mrb[0].mxu0 %v3140
  %v3310 = vpop.f32.mrb[0].mxu0
  %v3311 = vadd.f32 0.0, %v3310
  %v3312 = vpop.f32.mrb[0].mxu0
  %3313 = vdwg.mxu0
  %v3314 = vmax.f32 %v3224, %v3311
  %v3315 = vld [vmem:[%s9] sm:$0x3]
  %vm3316 = vcmask 31744
  %v3318 = vsel %vm3316, %v3315, 0
  %vm3320 = vcmask 1043456
  %v3322 = vsel %vm3320, %v3314, 0
  %3324 = vmatprep.subr.mxu0 0.0
  %3325 = vmatpush1.msra.mxu0 %v3322
  %3326 = vmatprep.subr.mxu0 0.0
  %3327 = vmatpush1.msra.mxu0 0.0
  %3328 = vmatprep.subr.mxu0 0.0
  %3329 = vmatpush1.msra.mxu0 0.0
  %3330 = vmatprep.subr.mxu0 0.0
  %3331 = vmatpush1.msra.mxu0 0.0
  %3332 = vmatprep.subr.mxu0 0.0
  %3333 = vmatpush1.msra.mxu0 0.0
  %3334 = vmatprep.subr.mxu0 0.0
  %3335 = vmatpush1.msra.mxu0 0.0
  %3336 = vmatprep.subr.mxu0 0.0
  %3337 = vmatpush1.msra.mxu0 0.0
  %3338 = vmatprep.subr.mxu0 0.0
  %3339 = vmatpush1.msra.mxu0 0.0
  %3340 = vmatprep.subr.mxu0 0.0
  %3341 = vmatpush1.msra.mxu0 0.0
  %3342 = vmatprep.subr.mxu0 0.0
  %3343 = vmatpush1.msra.mxu0 0.0
  %3344 = vmatprep.subr.mxu0 0.0
  %3345 = vmatpush1.msra.mxu0 0.0
  %3346 = vmatprep.subr.mxu0 0.0
  %3347 = vmatpush1.msra.mxu0 0.0
  %3348 = vmatprep.subr.mxu0 0.0
  %3349 = vmatpush1.msra.mxu0 0.0
  %3350 = vmatprep.subr.mxu0 0.0
  %3351 = vmatpush1.msra.mxu0 0.0
  %3352 = vmatprep.subr.mxu0 0.0
  %3353 = vmatpush1.msra.mxu0 0.0
  %3354 = vmatprep.subr.mxu0 0.0
  %3355 = vmatpush1.msra.mxu0 0.0
  %3356 = vmatprep.subr.mxu0 0.0
  %3357 = vmatpush1.msra.mxu0 0.0
  %3358 = vmatprep.subr.mxu0 0.0
  %3359 = vmatpush1.msra.mxu0 0.0
  %3360 = vmatprep.subr.mxu0 0.0
  %3361 = vmatpush1.msra.mxu0 0.0
  %3362 = vmatprep.subr.mxu0 0.0
  %3363 = vmatpush1.msra.mxu0 0.0
  %3364 = vmatprep.subr.mxu0 0.0
  %3365 = vmatpush1.msra.mxu0 0.0
  %3366 = vmatprep.subr.mxu0 0.0
  %3367 = vmatpush1.msra.mxu0 0.0
  %3368 = vmatprep.subr.mxu0 0.0
  %3369 = vmatpush1.msra.mxu0 0.0
  %3370 = vmatprep.subr.mxu0 0.0
  %3371 = vmatpush1.msra.mxu0 0.0
  %3372 = vmatprep.subr.mxu0 0.0
  %3373 = vmatpush1.msra.mxu0 0.0
  %3374 = vmatprep.subr.mxu0 0.0
  %3375 = vmatpush1.msra.mxu0 0.0
  %3376 = vmatprep.subr.mxu0 0.0
  %3377 = vmatpush1.msra.mxu0 0.0
  %3378 = vmatprep.subr.mxu0 0.0
  %3379 = vmatpush1.msra.mxu0 0.0
  %3380 = vmatprep.subr.mxu0 0.0
  %3381 = vmatpush1.msra.mxu0 0.0
  %3382 = vmatprep.subr.mxu0 0.0
  %3383 = vmatpush1.msra.mxu0 0.0
  %3384 = vmatprep.subr.mxu0 0.0
  %3385 = vmatpush1.msra.mxu0 0.0
  %3386 = vmatprep.subr.mxu0 0.0
  %3387 = vmatpush1.msra.mxu0 0.0
  %3388 = vmatprep.mubr.f32.mxu0 0.0
  %3389 = vmatmul.mubr.f32.gmra.mrb[0].mxu0 %v3318
  %v3390 = vpop.f32.mrb[0].mxu0
  %v3391 = vadd.f32 0.0, %v3390
  %v3392 = vpop.f32.mrb[0].mxu0
  %3393 = vdwg.mxu0
  %v3394 = vld [vmem:[%s1 + $0x280] sm:$0xff]
  %v3395 = vld [vmem:[%s1 + $0x288] sm:$0xff]
  %v3396 = vld [vmem:[%s1 + $0x290] sm:$0xff]
  %v3397 = vld [vmem:[%s1 + $0x298] sm:$0xff]
  %s3398 = scalar_lea.vmem %s9, 2
  %v3399 = vld [vmem:[%s3398] sm:$0x3]
  %v3401 = vsel %vm3316, %v3399, 0
  %3403 = vmatprep.subr.mxu0 0.0
  %3404 = vmatpush1.msra.mxu0 %v3322
  %3405 = vmatprep.subr.mxu0 0.0
  %3406 = vmatpush1.msra.mxu0 0.0
  %3407 = vmatprep.subr.mxu0 0.0
  %3408 = vmatpush1.msra.mxu0 0.0
  %3409 = vmatprep.subr.mxu0 0.0
  %3410 = vmatpush1.msra.mxu0 0.0
  %3411 = vmatprep.subr.mxu0 0.0
  %3412 = vmatpush1.msra.mxu0 0.0
  %3413 = vmatprep.subr.mxu0 0.0
  %3414 = vmatpush1.msra.mxu0 0.0
  %3415 = vmatprep.subr.mxu0 0.0
  %3416 = vmatpush1.msra.mxu0 0.0
  %3417 = vmatprep.subr.mxu0 0.0
  %3418 = vmatpush1.msra.mxu0 0.0
  %3419 = vmatprep.subr.mxu0 0.0
  %3420 = vmatpush1.msra.mxu0 0.0
  %3421 = vmatprep.subr.mxu0 0.0
  %3422 = vmatpush1.msra.mxu0 0.0
  %3423 = vmatprep.subr.mxu0 0.0
  %3424 = vmatpush1.msra.mxu0 0.0
  %3425 = vmatprep.subr.mxu0 0.0
  %3426 = vmatpush1.msra.mxu0 0.0
  %3427 = vmatprep.subr.mxu0 0.0
  %3428 = vmatpush1.msra.mxu0 0.0
  %3429 = vmatprep.subr.mxu0 0.0
  %3430 = vmatpush1.msra.mxu0 0.0
  %3431 = vmatprep.subr.mxu0 0.0
  %3432 = vmatpush1.msra.mxu0 0.0
  %3433 = vmatprep.subr.mxu0 0.0
  %3434 = vmatpush1.msra.mxu0 0.0
  %3435 = vmatprep.subr.mxu0 0.0
  %3436 = vmatpush1.msra.mxu0 0.0
  %3437 = vmatprep.subr.mxu0 0.0
  %3438 = vmatpush1.msra.mxu0 0.0
  %3439 = vmatprep.subr.mxu0 0.0
  %3440 = vmatpush1.msra.mxu0 0.0
  %3441 = vmatprep.subr.mxu0 0.0
  %3442 = vmatpush1.msra.mxu0 0.0
  %3443 = vmatprep.subr.mxu0 0.0
  %3444 = vmatpush1.msra.mxu0 0.0
  %3445 = vmatprep.subr.mxu0 0.0
  %3446 = vmatpush1.msra.mxu0 0.0
  %3447 = vmatprep.subr.mxu0 0.0
  %3448 = vmatpush1.msra.mxu0 0.0
  %3449 = vmatprep.subr.mxu0 0.0
  %3450 = vmatpush1.msra.mxu0 0.0
  %3451 = vmatprep.subr.mxu0 0.0
  %3452 = vmatpush1.msra.mxu0 0.0
  %3453 = vmatprep.subr.mxu0 0.0
  %3454 = vmatpush1.msra.mxu0 0.0
  %3455 = vmatprep.subr.mxu0 0.0
  %3456 = vmatpush1.msra.mxu0 0.0
  %3457 = vmatprep.subr.mxu0 0.0
  %3458 = vmatpush1.msra.mxu0 0.0
  %3459 = vmatprep.subr.mxu0 0.0
  %3460 = vmatpush1.msra.mxu0 0.0
  %3461 = vmatprep.subr.mxu0 0.0
  %3462 = vmatpush1.msra.mxu0 0.0
  %3463 = vmatprep.subr.mxu0 0.0
  %3464 = vmatpush1.msra.mxu0 0.0
  %3465 = vmatprep.subr.mxu0 0.0
  %3466 = vmatpush1.msra.mxu0 0.0
  %3467 = vmatprep.mubr.f32.mxu0 0.0
  %3468 = vmatmul.mubr.f32.gmra.mrb[0].mxu0 %v3401
  %v3469 = vpop.f32.mrb[0].mxu0
  %v3470 = vadd.f32 0.0, %v3469
  %v3471 = vpop.f32.mrb[0].mxu0
  %3472 = vdwg.mxu0
  %v3473 = vld [vmem:[%s1 + $0x2a0] sm:$0xff]
  %v3474 = vld [vmem:[%s1 + $0x2a8] sm:$0xff]
  %v3475 = vld [vmem:[%s1 + $0x2b0] sm:$0xff]
  %v3476 = vld [vmem:[%s1 + $0x2b8] sm:$0xff]
  %v3478 = vsel %vm1507, %v3470, 0
  %3480 = vmatprep.subr.mxu0 0.0
  %3481 = vmatpush1.msra.mxu0 %v3473
  %3482 = vmatprep.subr.mxu0 0.0
  %3483 = vmatpush1.msra.mxu0 %v3474
  %3484 = vmatprep.subr.mxu0 0.0
  %3485 = vmatpush1.msra.mxu0 %v3475
  %3486 = vmatprep.subr.mxu0 0.0
  %3487 = vmatpush1.msra.mxu0 %v3476
  %3488 = vmatprep.subr.mxu0 0.0
  %3489 = vmatpush1.msra.mxu0 0.0
  %3490 = vmatprep.subr.mxu0 0.0
  %3491 = vmatpush1.msra.mxu0 0.0
  %3492 = vmatprep.subr.mxu0 0.0
  %3493 = vmatpush1.msra.mxu0 0.0
  %3494 = vmatprep.subr.mxu0 0.0
  %3495 = vmatpush1.msra.mxu0 0.0
  %3496 = vmatprep.subr.mxu0 0.0
  %3497 = vmatpush1.msra.mxu0 0.0
  %3498 = vmatprep.subr.mxu0 0.0
  %3499 = vmatpush1.msra.mxu0 0.0
  %3500 = vmatprep.subr.mxu0 0.0
  %3501 = vmatpush1.msra.mxu0 0.0
  %3502 = vmatprep.subr.mxu0 0.0
  %3503 = vmatpush1.msra.mxu0 0.0
  %3504 = vmatprep.subr.mxu0 0.0
  %3505 = vmatpush1.msra.mxu0 0.0
  %3506 = vmatprep.subr.mxu0 0.0
  %3507 = vmatpush1.msra.mxu0 0.0
  %3508 = vmatprep.subr.mxu0 0.0
  %3509 = vmatpush1.msra.mxu0 0.0
  %3510 = vmatprep.subr.mxu0 0.0
  %3511 = vmatpush1.msra.mxu0 0.0
  %3512 = vmatprep.subr.mxu0 0.0
  %3513 = vmatpush1.msra.mxu0 0.0
  %3514 = vmatprep.subr.mxu0 0.0
  %3515 = vmatpush1.msra.mxu0 0.0
  %3516 = vmatprep.subr.mxu0 0.0
  %3517 = vmatpush1.msra.mxu0 0.0
  %3518 = vmatprep.subr.mxu0 0.0
  %3519 = vmatpush1.msra.mxu0 0.0
  %3520 = vmatprep.subr.mxu0 0.0
  %3521 = vmatpush1.msra.mxu0 0.0
  %3522 = vmatprep.subr.mxu0 0.0
  %3523 = vmatpush1.msra.mxu0 0.0
  %3524 = vmatprep.subr.mxu0 0.0
  %3525 = vmatpush1.msra.mxu0 0.0
  %3526 = vmatprep.subr.mxu0 0.0
  %3527 = vmatpush1.msra.mxu0 0.0
  %3528 = vmatprep.subr.mxu0 0.0
  %3529 = vmatpush1.msra.mxu0 0.0
  %3530 = vmatprep.subr.mxu0 0.0
  %3531 = vmatpush1.msra.mxu0 0.0
  %3532 = vmatprep.subr.mxu0 0.0
  %3533 = vmatpush1.msra.mxu0 0.0
  %3534 = vmatprep.subr.mxu0 0.0
  %3535 = vmatpush1.msra.mxu0 0.0
  %3536 = vmatprep.subr.mxu0 0.0
  %3537 = vmatpush1.msra.mxu0 0.0
  %3538 = vmatprep.subr.mxu0 0.0
  %3539 = vmatpush1.msra.mxu0 0.0
  %3540 = vmatprep.subr.mxu0 0.0
  %3541 = vmatpush1.msra.mxu0 0.0
  %3542 = vmatprep.subr.mxu0 0.0
  %3543 = vmatpush1.msra.mxu0 0.0
  %3544 = vmatprep.mubr.f32.mxu0 0.0
  %3545 = vmatmul.mubr.f32.gmra.mrb[0].mxu0 %v3478
  %v3546 = vpop.f32.mrb[0].mxu0
  %v3547 = vadd.f32 0.0, %v3546
  %v3548 = vpop.f32.mrb[0].mxu0
  %3549 = vdwg.mxu0
  %v3551 = vsel %vm1507, %v3391, 0
  %3553 = vmatprep.subr.mxu0 0.0
  %3554 = vmatpush1.msra.mxu0 %v3394
  %3555 = vmatprep.subr.mxu0 0.0
  %3556 = vmatpush1.msra.mxu0 %v3395
  %3557 = vmatprep.subr.mxu0 0.0
  %3558 = vmatpush1.msra.mxu0 %v3396
  %3559 = vmatprep.subr.mxu0 0.0
  %3560 = vmatpush1.msra.mxu0 %v3397
  %3561 = vmatprep.subr.mxu0 0.0
  %3562 = vmatpush1.msra.mxu0 0.0
  %3563 = vmatprep.subr.mxu0 0.0
  %3564 = vmatpush1.msra.mxu0 0.0
  %3565 = vmatprep.subr.mxu0 0.0
  %3566 = vmatpush1.msra.mxu0 0.0
  %3567 = vmatprep.subr.mxu0 0.0
  %3568 = vmatpush1.msra.mxu0 0.0
  %3569 = vmatprep.subr.mxu0 0.0
  %3570 = vmatpush1.msra.mxu0 0.0
  %3571 = vmatprep.subr.mxu0 0.0
  %3572 = vmatpush1.msra.mxu0 0.0
  %3573 = vmatprep.subr.mxu0 0.0
  %3574 = vmatpush1.msra.mxu0 0.0
  %3575 = vmatprep.subr.mxu0 0.0
  %3576 = vmatpush1.msra.mxu0 0.0
  %3577 = vmatprep.subr.mxu0 0.0
  %3578 = vmatpush1.msra.mxu0 0.0
  %3579 = vmatprep.subr.mxu0 0.0
  %3580 = vmatpush1.msra.mxu0 0.0
  %3581 = vmatprep.subr.mxu0 0.0
  %3582 = vmatpush1.msra.mxu0 0.0
  %3583 = vmatprep.subr.mxu0 0.0
  %3584 = vmatpush1.msra.mxu0 0.0
  %3585 = vmatprep.subr.mxu0 0.0
  %3586 = vmatpush1.msra.mxu0 0.0
  %3587 = vmatprep.subr.mxu0 0.0
  %3588 = vmatpush1.msra.mxu0 0.0
  %3589 = vmatprep.subr.mxu0 0.0
  %3590 = vmatpush1.msra.mxu0 0.0
  %3591 = vmatprep.subr.mxu0 0.0
  %3592 = vmatpush1.msra.mxu0 0.0
  %3593 = vmatprep.subr.mxu0 0.0
  %3594 = vmatpush1.msra.mxu0 0.0
  %3595 = vmatprep.subr.mxu0 0.0
  %3596 = vmatpush1.msra.mxu0 0.0
  %3597 = vmatprep.subr.mxu0 0.0
  %3598 = vmatpush1.msra.mxu0 0.0
  %3599 = vmatprep.subr.mxu0 0.0
  %3600 = vmatpush1.msra.mxu0 0.0
  %3601 = vmatprep.subr.mxu0 0.0
  %3602 = vmatpush1.msra.mxu0 0.0
  %3603 = vmatprep.subr.mxu0 0.0
  %3604 = vmatpush1.msra.mxu0 0.0
  %3605 = vmatprep.subr.mxu0 0.0
  %3606 = vmatpush1.msra.mxu0 0.0
  %3607 = vmatprep.subr.mxu0 0.0
  %3608 = vmatpush1.msra.mxu0 0.0
  %3609 = vmatprep.subr.mxu0 0.0
  %3610 = vmatpush1.msra.mxu0 0.0
  %3611 = vmatprep.subr.mxu0 0.0
  %3612 = vmatpush1.msra.mxu0 0.0
  %3613 = vmatprep.subr.mxu0 0.0
  %3614 = vmatpush1.msra.mxu0 0.0
  %3615 = vmatprep.subr.mxu0 0.0
  %3616 = vmatpush1.msra.mxu0 0.0
  %3617 = vmatprep.mubr.f32.mxu0 0.0
  %3618 = vmatmul.mubr.f32.gmra.mrb[0].mxu0 %v3551
  %v3619 = vpop.f32.mrb[0].mxu0
  %v3620 = vadd.f32 %v3547, %v3619
  %v3621 = vpop.f32.mrb[0].mxu0
  %3622 = vdwg.mxu0
  %v3623 = vld [vmem:[%s2 + $0x6] sm:$0x1]
  %v3624 = vlaneseq
  %v3625 = vshrl.u32 %v3624, 7
  %v3626 = vsub.s32 0, %v3625
  %v3627 = vrot.slane %v3623, %v3626
  %v3628 = vadd.f32 %v3620, %v3627
  %vm3629 = vcmask 1041408
  %v3630 = vsel %vm3629, %v3628, 0.0
  %v3631 = vrot.slane %v3630, 4
  %v3632 = vadd.f32 %v3630, %v3631
  %v3633 = vrot.slane %v3632, 2
  %v3634 = vadd.f32 %v3632, %v3633
  %v3635 = vrot.slane %v3634, 1
  %v3636 = vadd.f32 %v3634, %v3635
  %v3637 = vmul.f32 %v3628, %v3628
  %v3638 = vsel %vm3629, %v3637, 0.0
  %v3639 = vrot.slane %v3638, 4
  %v3640 = vadd.f32 %v3638, %v3639
  %v3641 = vrot.slane %v3640, 2
  %v3642 = vadd.f32 %v3640, %v3641
  %v3643 = vrot.slane %v3642, 1
  %v3644 = vadd.f32 %v3642, %v3643
  %v3645 = vmul.f32 %v3636, 0.5
  %v3646 = vmul.f32 %v3644, 0.5
  %v3647 = vmul.f32 %v3645, %v3645
  %v3648 = vsub.f32 %v3646, %v3647
  %v3649 = vmax.f32 %v3648, 0.0
  %v3650 = vld [vmem:[%s2 + $0x7] sm:$0x1]
  %v3651 = vadd.f32 %v3649, 1e-05
  %v3652 = vrsqrt.pop %v3651
  %v3653 = vmul.f32 %v3650, %v3652
  %v3654 = vld [vmem:[%s2 + $0x8] sm:$0x1]
  %v3655 = vmul.f32 %v3645, %v3653
  %v3656 = vsub.f32 %v3654, %v3655
  %v3657 = vlaneseq
  %v3658 = vshrl.u32 %v3657, 7
  %v3659 = vsub.s32 0, %v3658
  %v3660 = vrot.slane %v3653, %v3659
  %v3661 = vmul.f32 %v3628, %v3660
  %v3662 = vlaneseq
  %v3663 = vshrl.u32 %v3662, 7
  %v3664 = vsub.s32 0, %v3663
  %v3665 = vrot.slane %v3656, %v3664
  %v3666 = vadd.f32 %v3661, %v3665
  %v3667 = vmax.f32 %v3666, 0.0
  %v3668 = vld [vmem:[%s1 + $0x2c0] sm:$0xff]
  %v3669 = vld [vmem:[%s1 + $0x2c8] sm:$0xff]
  %v3670 = vld [vmem:[%s1 + $0x2d0] sm:$0xff]
  %v3671 = vld [vmem:[%s1 + $0x2d8] sm:$0xff]
  %v3672 = vld [vmem:[%s1 + $0x2e0] sm:$0xff]
  %v3673 = vld [vmem:[%s1 + $0x2e8] sm:$0xff]
  %v3674 = vld [vmem:[%s1 + $0x2f0] sm:$0xff]
  %v3675 = vld [vmem:[%s1 + $0x2f8] sm:$0xff]
  %v3676 = vld [vmem:[%s1 + $0x300] sm:$0xff]
  %v3677 = vld [vmem:[%s1 + $0x308] sm:$0xff]
  %v3678 = vld [vmem:[%s1 + $0x310] sm:$0xff]
  %v3679 = vld [vmem:[%s1 + $0x318] sm:$0xff]
  %v3680 = vld [vmem:[%s1 + $0x320] sm:$0xff]
  %v3681 = vld [vmem:[%s1 + $0x328] sm:$0xff]
  %v3682 = vld [vmem:[%s1 + $0x330] sm:$0xff]
  %v3683 = vld [vmem:[%s1 + $0x338] sm:$0xff]
  %v3684 = vld [vmem:[%s2 + $0x9] sm:$0x1]
  %v3685 = vlaneseq
  %v3686 = vshrl.u32 %v3685, 7
  %v3687 = vsub.s32 0, %v3686
  %v3688 = vrot.slane %v3684, %v3687
  %3689 = vmatprep.subr.mxu0 0.0
  %3690 = vmatpush1.msra.mxu0 %v3668
  %3691 = vmatprep.subr.mxu0 0.0
  %3692 = vmatpush1.msra.mxu0 %v3669
  %3693 = vmatprep.subr.mxu0 0.0
  %3694 = vmatpush1.msra.mxu0 %v3670
  %3695 = vmatprep.subr.mxu0 0.0
  %3696 = vmatpush1.msra.mxu0 %v3671
  %3697 = vmatprep.subr.mxu0 0.0
  %3698 = vmatpush1.msra.mxu0 %v3672
  %3699 = vmatprep.subr.mxu0 0.0
  %3700 = vmatpush1.msra.mxu0 %v3673
  %3701 = vmatprep.subr.mxu0 0.0
  %3702 = vmatpush1.msra.mxu0 %v3674
  %3703 = vmatprep.subr.mxu0 0.0
  %3704 = vmatpush1.msra.mxu0 %v3675
  %3705 = vmatprep.subr.mxu0 0.0
  %3706 = vmatpush1.msra.mxu0 %v3676
  %3707 = vmatprep.subr.mxu0 0.0
  %3708 = vmatpush1.msra.mxu0 %v3677
  %3709 = vmatprep.subr.mxu0 0.0
  %3710 = vmatpush1.msra.mxu0 %v3678
  %3711 = vmatprep.subr.mxu0 0.0
  %3712 = vmatpush1.msra.mxu0 %v3679
  %3713 = vmatprep.subr.mxu0 0.0
  %3714 = vmatpush1.msra.mxu0 %v3680
  %3715 = vmatprep.subr.mxu0 0.0
  %3716 = vmatpush1.msra.mxu0 %v3681
  %3717 = vmatprep.subr.mxu0 0.0
  %3718 = vmatpush1.msra.mxu0 %v3682
  %3719 = vmatprep.subr.mxu0 0.0
  %3720 = vmatpush1.msra.mxu0 %v3683
  %3721 = vmatprep.subr.mxu0 0.0
  %3722 = vmatpush1.msra.mxu0 0.0
  %3723 = vmatprep.subr.mxu0 0.0
  %3724 = vmatpush1.msra.mxu0 0.0
  %3725 = vmatprep.subr.mxu0 0.0
  %3726 = vmatpush1.msra.mxu0 0.0
  %3727 = vmatprep.subr.mxu0 0.0
  %3728 = vmatpush1.msra.mxu0 0.0
  %3729 = vmatprep.subr.mxu0 0.0
  %3730 = vmatpush1.msra.mxu0 0.0
  %3731 = vmatprep.subr.mxu0 0.0
  %3732 = vmatpush1.msra.mxu0 0.0
  %3733 = vmatprep.subr.mxu0 0.0
  %3734 = vmatpush1.msra.mxu0 0.0
  %3735 = vmatprep.subr.mxu0 0.0
  %3736 = vmatpush1.msra.mxu0 0.0
  %3737 = vmatprep.subr.mxu0 0.0
  %3738 = vmatpush1.msra.mxu0 0.0
  %3739 = vmatprep.subr.mxu0 0.0
  %3740 = vmatpush1.msra.mxu0 0.0
  %3741 = vmatprep.subr.mxu0 0.0
  %3742 = vmatpush1.msra.mxu0 0.0
  %3743 = vmatprep.subr.mxu0 0.0
  %3744 = vmatpush1.msra.mxu0 0.0
  %3745 = vmatprep.subr.mxu0 0.0
  %3746 = vmatpush1.msra.mxu0 0.0
  %3747 = vmatprep.subr.mxu0 0.0
  %3748 = vmatpush1.msra.mxu0 0.0
  %3749 = vmatprep.subr.mxu0 0.0
  %3750 = vmatpush1.msra.mxu0 0.0
  %3751 = vmatprep.subr.mxu0 0.0
  %3752 = vmatpush1.msra.mxu0 0.0
  %3753 = vmatprep.mubr.f32.mxu0 0.0
  %3754 = vmatmul.mubr.f32.gmra.mrb[0].mxu0 %v3667
  %v3755 = vpop.f32.mrb[0].mxu0
  %v3756 = vadd.f32 %v3688, %v3755
  %v3757 = vpop.f32.mrb[0].mxu0
  %3758 = vdwg.mxu0
  %v3759 = vmax.f32 %v3756, 0.0
  %v3760 = vld [vmem:[%s1 + $0x340] sm:$0xff]
  %v3761 = vld [vmem:[%s1 + $0x348] sm:$0xff]
  %v3762 = vld [vmem:[%s1 + $0x350] sm:$0xff]
  %v3763 = vld [vmem:[%s1 + $0x358] sm:$0xff]
  %v3764 = vld [vmem:[%s1 + $0x360] sm:$0xff]
  %v3765 = vld [vmem:[%s1 + $0x368] sm:$0xff]
  %v3766 = vld [vmem:[%s1 + $0x370] sm:$0xff]
  %v3767 = vld [vmem:[%s1 + $0x378] sm:$0xff]
  %v3768 = vld [vmem:[%s1 + $0x380] sm:$0xff]
  %v3769 = vld [vmem:[%s1 + $0x388] sm:$0xff]
  %v3770 = vld [vmem:[%s1 + $0x390] sm:$0xff]
  %v3771 = vld [vmem:[%s1 + $0x398] sm:$0xff]
  %v3772 = vld [vmem:[%s1 + $0x3a0] sm:$0xff]
  %v3773 = vld [vmem:[%s1 + $0x3a8] sm:$0xff]
  %v3774 = vld [vmem:[%s1 + $0x3b0] sm:$0xff]
  %v3775 = vld [vmem:[%s1 + $0x3b8] sm:$0xff]
  %v3776 = vld [vmem:[%s2 + $0xa] sm:$0x1]
  %v3777 = vlaneseq
  %v3778 = vshrl.u32 %v3777, 7
  %v3779 = vsub.s32 0, %v3778
  %v3780 = vrot.slane %v3776, %v3779
  %3781 = vmatprep.subr.mxu0 0.0
  %3782 = vmatpush1.msra.mxu0 %v3760
  %3783 = vmatprep.subr.mxu0 0.0
  %3784 = vmatpush1.msra.mxu0 %v3761
  %3785 = vmatprep.subr.mxu0 0.0
  %3786 = vmatpush1.msra.mxu0 %v3762
  %3787 = vmatprep.subr.mxu0 0.0
  %3788 = vmatpush1.msra.mxu0 %v3763
  %3789 = vmatprep.subr.mxu0 0.0
  %3790 = vmatpush1.msra.mxu0 %v3764
  %3791 = vmatprep.subr.mxu0 0.0
  %3792 = vmatpush1.msra.mxu0 %v3765
  %3793 = vmatprep.subr.mxu0 0.0
  %3794 = vmatpush1.msra.mxu0 %v3766
  %3795 = vmatprep.subr.mxu0 0.0
  %3796 = vmatpush1.msra.mxu0 %v3767
  %3797 = vmatprep.subr.mxu0 0.0
  %3798 = vmatpush1.msra.mxu0 %v3768
  %3799 = vmatprep.subr.mxu0 0.0
  %3800 = vmatpush1.msra.mxu0 %v3769
  %3801 = vmatprep.subr.mxu0 0.0
  %3802 = vmatpush1.msra.mxu0 %v3770
  %3803 = vmatprep.subr.mxu0 0.0
  %3804 = vmatpush1.msra.mxu0 %v3771
  %3805 = vmatprep.subr.mxu0 0.0
  %3806 = vmatpush1.msra.mxu0 %v3772
  %3807 = vmatprep.subr.mxu0 0.0
  %3808 = vmatpush1.msra.mxu0 %v3773
  %3809 = vmatprep.subr.mxu0 0.0
  %3810 = vmatpush1.msra.mxu0 %v3774
  %3811 = vmatprep.subr.mxu0 0.0
  %3812 = vmatpush1.msra.mxu0 %v3775
  %3813 = vmatprep.subr.mxu0 0.0
  %3814 = vmatpush1.msra.mxu0 0.0
  %3815 = vmatprep.subr.mxu0 0.0
  %3816 = vmatpush1.msra.mxu0 0.0
  %3817 = vmatprep.subr.mxu0 0.0
  %3818 = vmatpush1.msra.mxu0 0.0
  %3819 = vmatprep.subr.mxu0 0.0
  %3820 = vmatpush1.msra.mxu0 0.0
  %3821 = vmatprep.subr.mxu0 0.0
  %3822 = vmatpush1.msra.mxu0 0.0
  %3823 = vmatprep.subr.mxu0 0.0
  %3824 = vmatpush1.msra.mxu0 0.0
  %3825 = vmatprep.subr.mxu0 0.0
  %3826 = vmatpush1.msra.mxu0 0.0
  %3827 = vmatprep.subr.mxu0 0.0
  %3828 = vmatpush1.msra.mxu0 0.0
  %3829 = vmatprep.subr.mxu0 0.0
  %3830 = vmatpush1.msra.mxu0 0.0
  %3831 = vmatprep.subr.mxu0 0.0
  %3832 = vmatpush1.msra.mxu0 0.0
  %3833 = vmatprep.subr.mxu0 0.0
  %3834 = vmatpush1.msra.mxu0 0.0
  %3835 = vmatprep.subr.mxu0 0.0
  %3836 = vmatpush1.msra.mxu0 0.0
  %3837 = vmatprep.subr.mxu0 0.0
  %3838 = vmatpush1.msra.mxu0 0.0
  %3839 = vmatprep.subr.mxu0 0.0
  %3840 = vmatpush1.msra.mxu0 0.0
  %3841 = vmatprep.subr.mxu0 0.0
  %3842 = vmatpush1.msra.mxu0 0.0
  %3843 = vmatprep.subr.mxu0 0.0
  %3844 = vmatpush1.msra.mxu0 0.0
  %3845 = vmatprep.mubr.f32.mxu0 0.0
  %3846 = vmatmul.mubr.f32.gmra.mrb[0].mxu0 %v3759
  %v3847 = vpop.f32.mrb[0].mxu0
  %v3848 = vadd.f32 %v3780, %v3847
  %v3849 = vpop.f32.mrb[0].mxu0
  %3850 = vdwg.mxu0
  %v3851 = vld [vmem:[%s1 + $0x3c0] sm:$0xff]
  %v3852 = vld [vmem:[%s1 + $0x3c8] sm:$0xff]
  %v3853 = vld [vmem:[%s1 + $0x3d0] sm:$0xff]
  %v3854 = vld [vmem:[%s1 + $0x3d8] sm:$0xff]
  %v3855 = vld [vmem:[%s1 + $0x3e0] sm:$0xff]
  %v3856 = vld [vmem:[%s1 + $0x3e8] sm:$0xff]
  %v3857 = vld [vmem:[%s1 + $0x3f0] sm:$0xff]
  %v3858 = vld [vmem:[%s1 + $0x3f8] sm:$0xff]
  %v3859 = vld [vmem:[%s1 + $0x400] sm:$0xff]
  %v3860 = vld [vmem:[%s1 + $0x408] sm:$0xff]
  %v3861 = vld [vmem:[%s1 + $0x410] sm:$0xff]
  %v3862 = vld [vmem:[%s1 + $0x418] sm:$0xff]
  %v3863 = vld [vmem:[%s1 + $0x420] sm:$0xff]
  %v3864 = vld [vmem:[%s1 + $0x428] sm:$0xff]
  %v3865 = vld [vmem:[%s1 + $0x430] sm:$0xff]
  %v3866 = vld [vmem:[%s1 + $0x438] sm:$0xff]
  %v3867 = vld [vmem:[%s2 + $0xb] sm:$0x1]
  %v3868 = vlaneseq
  %v3869 = vshrl.u32 %v3868, 7
  %v3870 = vsub.s32 0, %v3869
  %v3871 = vrot.slane %v3867, %v3870
  %3872 = vmatprep.subr.mxu0 0.0
  %3873 = vmatpush1.msra.mxu0 %v3851
  %3874 = vmatprep.subr.mxu0 0.0
  %3875 = vmatpush1.msra.mxu0 %v3852
  %3876 = vmatprep.subr.mxu0 0.0
  %3877 = vmatpush1.msra.mxu0 %v3853
  %3878 = vmatprep.subr.mxu0 0.0
  %3879 = vmatpush1.msra.mxu0 %v3854
  %3880 = vmatprep.subr.mxu0 0.0
  %3881 = vmatpush1.msra.mxu0 %v3855
  %3882 = vmatprep.subr.mxu0 0.0
  %3883 = vmatpush1.msra.mxu0 %v3856
  %3884 = vmatprep.subr.mxu0 0.0
  %3885 = vmatpush1.msra.mxu0 %v3857
  %3886 = vmatprep.subr.mxu0 0.0
  %3887 = vmatpush1.msra.mxu0 %v3858
  %3888 = vmatprep.subr.mxu0 0.0
  %3889 = vmatpush1.msra.mxu0 %v3859
  %3890 = vmatprep.subr.mxu0 0.0
  %3891 = vmatpush1.msra.mxu0 %v3860
  %3892 = vmatprep.subr.mxu0 0.0
  %3893 = vmatpush1.msra.mxu0 %v3861
  %3894 = vmatprep.subr.mxu0 0.0
  %3895 = vmatpush1.msra.mxu0 %v3862
  %3896 = vmatprep.subr.mxu0 0.0
  %3897 = vmatpush1.msra.mxu0 %v3863
  %3898 = vmatprep.subr.mxu0 0.0
  %3899 = vmatpush1.msra.mxu0 %v3864
  %3900 = vmatprep.subr.mxu0 0.0
  %3901 = vmatpush1.msra.mxu0 %v3865
  %3902 = vmatprep.subr.mxu0 0.0
  %3903 = vmatpush1.msra.mxu0 %v3866
  %3904 = vmatprep.subr.mxu0 0.0
  %3905 = vmatpush1.msra.mxu0 0.0
  %3906 = vmatprep.subr.mxu0 0.0
  %3907 = vmatpush1.msra.mxu0 0.0
  %3908 = vmatprep.subr.mxu0 0.0
  %3909 = vmatpush1.msra.mxu0 0.0
  %3910 = vmatprep.subr.mxu0 0.0
  %3911 = vmatpush1.msra.mxu0 0.0
  %3912 = vmatprep.subr.mxu0 0.0
  %3913 = vmatpush1.msra.mxu0 0.0
  %3914 = vmatprep.subr.mxu0 0.0
  %3915 = vmatpush1.msra.mxu0 0.0
  %3916 = vmatprep.subr.mxu0 0.0
  %3917 = vmatpush1.msra.mxu0 0.0
  %3918 = vmatprep.subr.mxu0 0.0
  %3919 = vmatpush1.msra.mxu0 0.0
  %3920 = vmatprep.subr.mxu0 0.0
  %3921 = vmatpush1.msra.mxu0 0.0
  %3922 = vmatprep.subr.mxu0 0.0
  %3923 = vmatpush1.msra.mxu0 0.0
  %3924 = vmatprep.subr.mxu0 0.0
  %3925 = vmatpush1.msra.mxu0 0.0
  %3926 = vmatprep.subr.mxu0 0.0
  %3927 = vmatpush1.msra.mxu0 0.0
  %3928 = vmatprep.subr.mxu0 0.0
  %3929 = vmatpush1.msra.mxu0 0.0
  %3930 = vmatprep.subr.mxu0 0.0
  %3931 = vmatpush1.msra.mxu0 0.0
  %3932 = vmatprep.subr.mxu0 0.0
  %3933 = vmatpush1.msra.mxu0 0.0
  %3934 = vmatprep.subr.mxu0 0.0
  %3935 = vmatpush1.msra.mxu0 0.0
  %3936 = vmatprep.mubr.f32.mxu0 0.0
  %3937 = vmatmul.mubr.f32.gmra.mrb[0].mxu0 %v3848
  %v3938 = vpop.f32.mrb[0].mxu0
  %v3939 = vadd.f32 %v3871, %v3938
  %v3940 = vpop.f32.mrb[0].mxu0
  %3941 = vdwg.mxu0
  %3942 = vst [vmem:[%s14] sm:$0x3] %v3667
  %3943 = vst [vmem:[%s14 + $0x2] sm:$0x3] %v3848
  %3944 = vst [vmem:[%s14 + $0x4] sm:$0x3] %v3939
  // Predicated region
  $region58: #{fused_forward.1} parent=0 // pred_check
    _
  $region59: #{fused_forward.1} parent=0 // pred_check_branch
    %3946 = sbr.rel (0) target = $region61
  $region60: #{fused_forward.1} parent=0 // pred_region
    _
  $region61: #{fused_forward.1} parent=0 // pred_fallthru
    _
  // Predicated region
  $region62: #{fused_forward.1} parent=0 // pred_check
    _
  $region63: #{fused_forward.1} parent=0 // pred_check_branch
    %3948 = sbr.rel (0) target = $region65
  $region64: #{fused_forward.1} parent=0 // pred_region
    _
  $region65: #{fused_forward.1} parent=0 // pred_fallthru
    _

</llo_original>
